<compile_context>
chip_gen: v7x
topology: tpu7x:2x2x1
jax: 0.10.0
libtpu: 0.0.40
codegen_flags: <defaults>
</compile_context>

<pallas_src>
import functools

import jax
import jax.numpy as jnp
from jax import lax
from jax.experimental import pallas as pl
from jax.experimental.pallas import tpu as pltpu


def _round_up(x, m):
    return (x + m - 1) // m * m


def _vmem_capacity_bytes():
    """Device VMEM capacity; falls back to the smallest (v7x, 64 MiB) size."""
    try:
        info = pltpu.get_tpu_info()
        for name in ("vmem_capacity_bytes", "vmem_size_bytes", "vmem_bytes"):
            cap = getattr(info, name, None)
            if cap:
                return int(cap)
    except Exception:
        pass
    return 64 * 1024 * 1024


# ---------------------------------------------------------------------------
# Path 1: lane-friendly widths (W % 128 == 0), NCHW end-to-end.
# ---------------------------------------------------------------------------
def _conv_nchw_kernel(w_ref, b_ref, x_ref, o_ref, *, TH, RH, W, TW, Cin, Cout, K):
    """3x3 same-conv for one (batch, row-tile) grid step, NCHW layout.

    w_ref: SMEM (Cout*Cin*K*K,) f32   flattened PyTorch OIHW weights
    b_ref: SMEM (Cout,)          f32  bias
    x_ref: VMEM (1, Cin, H+2p, W+2p)  full zero-padded input image (batch n)
    o_ref: VMEM (1, Cout, TH, W)      output row tile
    """
    KK = K * K
    base = pl.program_id(1) * TH
    # Hoist every scalar SMEM read once per grid step (not per chunk/channel).
    w_sc = [w_ref[i] for i in range(Cout * Cin * KK)]
    b_sc = [b_ref[c] for c in range(Cout)]

    for r0 in range(0, TH, RH):               # 8-row sub-blocks: bound vregs
        row = pl.multiple_of(base + r0, 8)
        for c0 in range(0, W, TW):            # <=256-lane chunks: bound vregs
            # One superslab load per (ci, sub-block, chunk); the 9 taps are
            # sliced from it (~3x less VMEM read traffic than per-tap loads,
            # and the sublane start stays 8-aligned).
            taps = []
            for ci in range(Cin):
                slab = x_ref[0, ci, pl.ds(row, RH + K - 1), c0:c0 + TW + K - 1]
                for kh in range(K):
                    for kw in range(K):
                        taps.append(slab[kh:kh + RH, kw:kw + TW])
            for c in range(Cout):
                acc = jnp.full((RH, TW), b_sc[c], jnp.float32)
                for t in range(Cin * KK):
                    acc = acc + taps[t] * w_sc[c * Cin * KK + t]
                # f32 local accumulation, single store per channel
                # (no o_ref read-back, even for Cin > 1).
                o_ref[0, c, r0:r0 + RH, c0:c0 + TW] = acc.astype(o_ref.dtype)


def _head_conv_lane_friendly(x, weight, w_flat, b_flat, cap):
    N, Cin, H, W = x.shape
    Cout, _, K, _ = weight.shape
    pad = K // 2
    Hp, Wp = H + 2 * pad, W + 2 * pad

    budget = int(cap * 0.55)
    # Resident padded image (x2 buffers) + output row tile (x2 buffers).
    img_bytes = 2 * Cin * _round_up(Hp, 8) * _round_up(Wp, 128) * 4
    cands = [h for h in range(8, H + 1, 8) if H % h == 0]
    TH = cands[0]
    for h in cands:                                   # largest TH within VMEM
        if img_bytes + 2 * Cout * h * W * 4 <= budget:
            TH = h
    while N * (H // TH) < 4:                          # keep both v7x TCs busy
        smaller = [h for h in cands if h < TH]
        if not smaller:
            break
        TH = smaller[-1]
    RH = 8
    TW = 256 if W % 256 == 0 else 128
    needed = img_bytes + 2 * Cout * TH * W * 4
    vmem_limit = int(min(cap * 0.9, needed + (16 << 20)))

    # TODO(synk): jnp.pad costs one extra HBM round-trip of the (small) input;
    # an in-kernel halo zero-fill would remove it.
    x_pad = jnp.pad(x, ((0, 0), (0, 0), (pad, pad), (pad, pad)))

    kernel = functools.partial(_conv_nchw_kernel, TH=TH, RH=RH, W=W, TW=TW,
                               Cin=Cin, Cout=Cout, K=K)
    return pl.pallas_call(
        kernel,
        out_shape=jax.ShapeDtypeStruct((N, Cout, H, W), x.dtype),
        grid_spec=pltpu.PrefetchScalarGridSpec(
            num_scalar_prefetch=0,
            grid=(N, H // TH),
            in_specs=[
                pl.BlockSpec(memory_space=pltpu.MemorySpace.SMEM),   # weights
                pl.BlockSpec(memory_space=pltpu.MemorySpace.SMEM),   # bias
                # Full padded image; block index changes only with n, so it
                # stays resident in VMEM across all row tiles.
                # TODO(synk): pipeline_mode=pl.Buffered(1) would halve its
                # footprint on v7x.
                pl.BlockSpec((1, Cin, Hp, Wp), lambda n, i: (n, 0, 0, 0)),
            ],
            out_specs=pl.BlockSpec((1, Cout, TH, W), lambda n, i: (n, 0, i, 0)),
        ),
        compiler_params=pltpu.CompilerParams(
            dimension_semantics=("parallel", "parallel"),
            vmem_limit_bytes=vmem_limit,
        ),
    )(w_flat, b_flat, x_pad)


# ---------------------------------------------------------------------------
# Path 2: lane-dense path for small / awkward widths (e.g. the 16x16 demo).
# ---------------------------------------------------------------------------
def _conv_lanedense_kernel(w_ref, b_ref, t_ref, o_ref, *, RT, RSUB, Cin, Cout, KK):
    """Weighted sum of pre-shifted taps; spatial folded to (rows, 128) slabs.

    w_ref: SMEM (Cout*Cin*KK,) f32
    b_ref: SMEM (Cout,) f32
    t_ref: VMEM (1, Cin*KK, RT, 128)  shifted-input taps (wrapper-built)
    o_ref: VMEM (1, Cout, RT, 128)
    """
    NT = Cin * KK
    w_sc = [w_ref[i] for i in range(Cout * NT)]
    b_sc = [b_ref[c] for c in range(Cout)]
    for r0 in range(0, RT, RSUB):             # sub-blocks bound vreg pressure
        taps = [t_ref[0, t, r0:r0 + RSUB, :] for t in range(NT)]
        for c in range(Cout):
            acc = jnp.full((RSUB, 128), b_sc[c], jnp.float32)
            for t in range(NT):
                acc = acc + taps[t] * w_sc[c * NT + t]
            # 128-lane dense, unmasked stores regardless of W.
            o_ref[0, c, r0:r0 + RSUB, :] = acc.astype(o_ref.dtype)


def _head_conv_lane_dense(x, weight, w_flat, b_flat, cap):
    N, Cin, H, W = x.shape
    Cout, _, K, _ = weight.shape
    KK = K * K
    pad = K // 2
    S = H * W
    S128 = -(-S // 128)

    budget = int(cap * 0.55)
    per_row = (Cin * KK + Cout) * 128 * 4 * 2          # double-buffered in+out
    max_rows = max(8, budget // per_row)
    S128p = S128 if S128 <= 8 else _round_up(S128, 8)
    if S128p <= max_rows:
        RT = S128p
    else:
        RT = max(8, (max_rows // 8) * 8)
        S128p = _round_up(S128p, RT)
    RSUB = 8 if RT % 8 == 0 else RT
    needed = (Cin * KK + Cout) * RT * 128 * 4 * 2
    vmem_limit = int(min(cap * 0.9, needed + (16 << 20)))

    # Build the K*K shifted taps wrapper-side and fold H*W onto the lane axis
    # so every VALU MAC and every store uses all 128 lanes.
    # TODO(synk): this adds ~KK x the (tiny, Cin=1) input in extra HBM
    # traffic; the lane-friendly path above avoids it whenever W % 128 == 0.
    x_pad = jnp.pad(x, ((0, 0), (0, 0), (pad, pad), (pad, pad)))
    taps = jnp.stack([x_pad[:, :, kh:kh + H, kw:kw + W]
                      for kh in range(K) for kw in range(K)], axis=2)
    taps = taps.reshape(N, Cin * KK, S)
    Sp = S128p * 128
    if Sp > S:
        taps = jnp.pad(taps, ((0, 0), (0, 0), (0, Sp - S)))
    taps = taps.reshape(N, Cin * KK, S128p, 128)

    kernel = functools.partial(_conv_lanedense_kernel, RT=RT, RSUB=RSUB,
                               Cin=Cin, Cout=Cout, KK=KK)
    out = pl.pallas_call(
        kernel,
        out_shape=jax.ShapeDtypeStruct((N, Cout, S128p, 128), x.dtype),
        grid_spec=pltpu.PrefetchScalarGridSpec(
            num_scalar_prefetch=0,
            grid=(N, S128p // RT),
            in_specs=[
                pl.BlockSpec(memory_space=pltpu.MemorySpace.SMEM),   # weights
                pl.BlockSpec(memory_space=pltpu.MemorySpace.SMEM),   # bias
                pl.BlockSpec((1, Cin * KK, RT, 128), lambda n, i: (n, 0, i, 0)),
            ],
            out_specs=pl.BlockSpec((1, Cout, RT, 128), lambda n, i: (n, 0, i, 0)),
        ),
        compiler_params=pltpu.CompilerParams(
            dimension_semantics=("parallel", "parallel"),
            vmem_limit_bytes=vmem_limit,
        ),
    )(w_flat, b_flat, taps)

    out = out.reshape(N, Cout, Sp)
    if Sp > S:
        out = out[:, :, :S]
    return out.reshape(N, Cout, H, W)


# ---------------------------------------------------------------------------
# Public wrappers (mirror the PyTorch module).
# ---------------------------------------------------------------------------
def rcan_head_conv(x_nchw, weight, bias):
    """Conv2d(Cin->Cout, 3x3, pad=1, bias) as a Pallas TPU kernel (NCHW in/out)."""
    N, Cin, H, W = x_nchw.shape
    Cout, Cin_w, K, K2 = weight.shape
    assert Cin_w == Cin and K2 == K
    cap = _vmem_capacity_bytes()
    w_flat = weight.reshape(-1).astype(jnp.float32)     # [c][ci][kh][kw] order
    b_flat = bias.astype(jnp.float32)
    if W % 128 == 0 and H % 8 == 0:
        return _head_conv_lane_friendly(x_nchw, weight, w_flat, b_flat, cap)
    return _head_conv_lane_dense(x_nchw, weight, w_flat, b_flat, cap)


def make_body_params(key, n_resgroups, n_resblocks, n_feats, reduction, K):
    """Deterministic parameter pytree standing in for `self.body` (returned by
    forward, never applied)."""
    params = []
    for g in range(n_resgroups):
        kg = jax.random.fold_in(key, g)
        group = {
            "rcab_conv1": jax.random.normal(
                jax.random.fold_in(kg, 0), (n_resblocks, n_feats, n_feats, K, K),
                jnp.float32) * 0.02,
            "rcab_conv2": jax.random.normal(
                jax.random.fold_in(kg, 1), (n_resblocks, n_feats, n_feats, K, K),
                jnp.float32) * 0.02,
            "ca_down": jax.random.normal(
                jax.random.fold_in(kg, 2),
                (n_resblocks, n_feats // reduction, n_feats, 1, 1),
                jnp.float32) * 0.02,
            "ca_up": jax.random.normal(
                jax.random.fold_in(kg, 3),
                (n_resblocks, n_feats, n_feats // reduction, 1, 1),
                jnp.float32) * 0.02,
            "group_tail": jax.random.normal(
                jax.random.fold_in(kg, 4), (n_feats, n_feats, K, K),
                jnp.float32) * 0.02,
        }
        params.append(group)
    tail = jax.random.normal(jax.random.fold_in(key, 10_000),
                             (n_feats, n_feats, K, K), jnp.float32) * 0.02
    return {"groups": params, "body_tail_conv": tail}


def rcan_encode_y_part_forward(x_nchw, head_weight, head_bias, body_params):
    """Mirrors RCANEncodeyPart.forward: returns (head(x), body)."""
    return rcan_head_conv(x_nchw, head_weight, head_bias), body_params


def _conv_ref(x, w, b):
    return lax.conv_general_dilated(
        x, w, window_strides=(1, 1), padding=((1, 1), (1, 1)),
        dimension_numbers=("NCHW", "OIHW", "NCHW")) + b.reshape(1, -1, 1, 1)


if __name__ == "__main__":
    # Small but faithful shapes (input_nc=1 Y-channel, 3x3 head conv).
    N, Cin, H, W = 2, 1, 16, 16
    n_feats, K = 32, 3
    n_resgroups, n_resblocks, reduction = 2, 2, 4   # scaled-down, unused in fwd

    key = jax.random.PRNGKey(0)
    kx, kw, kb, kbody, kx2, kw2, kb2 = jax.random.split(key, 7)

    x = jax.random.normal(kx, (N, Cin, H, W), jnp.float32)
    head_w = jax.random.normal(kw, (n_feats, Cin, K, K), jnp.float32) * 0.1
    head_b = jax.random.normal(kb, (n_feats,), jnp.float32) * 0.1
    body = make_body_params(kbody, n_resgroups, n_resblocks, n_feats, reduction, K)

    # Primary check (small W -> lane-dense tap path).
    out, returned_body = rcan_encode_y_part_forward(x, head_w, head_b, body)
    out = jax.block_until_ready(out)
    ref = _conv_ref(x, head_w, head_b)
    assert out.shape == (N, n_feats, H, W)
    assert jnp.allclose(out, ref, atol=1e-4, rtol=1e-4)
    assert returned_body is body

    # Secondary check (W % 128 == 0 -> production NCHW lane-friendly path,
    # exercising the dynamic row-tile offsets across a 4-step grid axis).
    x2 = jax.random.normal(kx2, (1, 1, 32, 128), jnp.float32)
    w2 = jax.random.normal(kw2, (16, 1, K, K), jnp.float32) * 0.1
    b2 = jax.random.normal(kb2, (16,), jnp.float32) * 0.1
    out2 = jax.block_until_ready(rcan_head_conv(x2, w2, b2))
    ref2 = _conv_ref(x2, w2, b2)
    assert out2.shape == (1, 16, 32, 128)
    assert jnp.allclose(out2, ref2, atol=1e-4, rtol=1e-4)

    print("KERNEL_OK")
</pallas_src>

<mosaic_0001>
module attributes {stable_mosaic.version = 11 : i64} {
  func.func @_conv_lanedense_kernel(%arg0: i32, %arg1: i32, %arg2: memref<288xf32, #tpu.memory_space<smem>>, %arg3: memref<32xf32, #tpu.memory_space<smem>>, %arg4: memref<1x9x2x128xf32, #tpu.memory_space<vmem>>, %arg5: memref<1x32x2x128xf32, #tpu.memory_space<vmem>>) attributes {dimension_semantics = [#tpu.dimension_semantics<parallel>, #tpu.dimension_semantics<parallel>], iteration_bounds = array<i64: 2, 1>, scalar_prefetch = 0 : i64, scratch_operands = 0 : i64, tpu.core_type = #tpu.core_type<tc>, window_params = [{transform_indices = @transform_0, window_bounds = array<i64: 288>}, {transform_indices = @transform_1, window_bounds = array<i64: 32>}, {transform_indices = @transform_2, window_bounds = array<i64: 1, 9, 2, 128>}, {transform_indices = @transform_3, window_bounds = array<i64: 1, 32, 2, 128>}]} {
    %c0 = arith.constant 0 : index
    %0 = memref.load %arg2[%c0] : memref<288xf32, #tpu.memory_space<smem>>
    %c1 = arith.constant 1 : index
    %1 = memref.load %arg2[%c1] : memref<288xf32, #tpu.memory_space<smem>>
    %c2 = arith.constant 2 : index
    %2 = memref.load %arg2[%c2] : memref<288xf32, #tpu.memory_space<smem>>
    %c3 = arith.constant 3 : index
    %3 = memref.load %arg2[%c3] : memref<288xf32, #tpu.memory_space<smem>>
    %c4 = arith.constant 4 : index
    %4 = memref.load %arg2[%c4] : memref<288xf32, #tpu.memory_space<smem>>
    %c5 = arith.constant 5 : index
    %5 = memref.load %arg2[%c5] : memref<288xf32, #tpu.memory_space<smem>>
    %c6 = arith.constant 6 : index
    %6 = memref.load %arg2[%c6] : memref<288xf32, #tpu.memory_space<smem>>
    %c7 = arith.constant 7 : index
    %7 = memref.load %arg2[%c7] : memref<288xf32, #tpu.memory_space<smem>>
    %c8 = arith.constant 8 : index
    %8 = memref.load %arg2[%c8] : memref<288xf32, #tpu.memory_space<smem>>
    %c9 = arith.constant 9 : index
    %9 = memref.load %arg2[%c9] : memref<288xf32, #tpu.memory_space<smem>>
    %c10 = arith.constant 10 : index
    %10 = memref.load %arg2[%c10] : memref<288xf32, #tpu.memory_space<smem>>
    %c11 = arith.constant 11 : index
    %11 = memref.load %arg2[%c11] : memref<288xf32, #tpu.memory_space<smem>>
    %c12 = arith.constant 12 : index
    %12 = memref.load %arg2[%c12] : memref<288xf32, #tpu.memory_space<smem>>
    %c13 = arith.constant 13 : index
    %13 = memref.load %arg2[%c13] : memref<288xf32, #tpu.memory_space<smem>>
    %c14 = arith.constant 14 : index
    %14 = memref.load %arg2[%c14] : memref<288xf32, #tpu.memory_space<smem>>
    %c15 = arith.constant 15 : index
    %15 = memref.load %arg2[%c15] : memref<288xf32, #tpu.memory_space<smem>>
    %c16 = arith.constant 16 : index
    %16 = memref.load %arg2[%c16] : memref<288xf32, #tpu.memory_space<smem>>
    %c17 = arith.constant 17 : index
    %17 = memref.load %arg2[%c17] : memref<288xf32, #tpu.memory_space<smem>>
    %c18 = arith.constant 18 : index
    %18 = memref.load %arg2[%c18] : memref<288xf32, #tpu.memory_space<smem>>
    %c19 = arith.constant 19 : index
    %19 = memref.load %arg2[%c19] : memref<288xf32, #tpu.memory_space<smem>>
    %c20 = arith.constant 20 : index
    %20 = memref.load %arg2[%c20] : memref<288xf32, #tpu.memory_space<smem>>
    %c21 = arith.constant 21 : index
    %21 = memref.load %arg2[%c21] : memref<288xf32, #tpu.memory_space<smem>>
    %c22 = arith.constant 22 : index
    %22 = memref.load %arg2[%c22] : memref<288xf32, #tpu.memory_space<smem>>
    %c23 = arith.constant 23 : index
    %23 = memref.load %arg2[%c23] : memref<288xf32, #tpu.memory_space<smem>>
    %c24 = arith.constant 24 : index
    %24 = memref.load %arg2[%c24] : memref<288xf32, #tpu.memory_space<smem>>
    %c25 = arith.constant 25 : index
    %25 = memref.load %arg2[%c25] : memref<288xf32, #tpu.memory_space<smem>>
    %c26 = arith.constant 26 : index
    %26 = memref.load %arg2[%c26] : memref<288xf32, #tpu.memory_space<smem>>
    %c27 = arith.constant 27 : index
    %27 = memref.load %arg2[%c27] : memref<288xf32, #tpu.memory_space<smem>>
    %c28 = arith.constant 28 : index
    %28 = memref.load %arg2[%c28] : memref<288xf32, #tpu.memory_space<smem>>
    %c29 = arith.constant 29 : index
    %29 = memref.load %arg2[%c29] : memref<288xf32, #tpu.memory_space<smem>>
    %c30 = arith.constant 30 : index
    %30 = memref.load %arg2[%c30] : memref<288xf32, #tpu.memory_space<smem>>
    %c31 = arith.constant 31 : index
    %31 = memref.load %arg2[%c31] : memref<288xf32, #tpu.memory_space<smem>>
    %c32 = arith.constant 32 : index
    %32 = memref.load %arg2[%c32] : memref<288xf32, #tpu.memory_space<smem>>
    %c33 = arith.constant 33 : index
    %33 = memref.load %arg2[%c33] : memref<288xf32, #tpu.memory_space<smem>>
    %c34 = arith.constant 34 : index
    %34 = memref.load %arg2[%c34] : memref<288xf32, #tpu.memory_space<smem>>
    %c35 = arith.constant 35 : index
    %35 = memref.load %arg2[%c35] : memref<288xf32, #tpu.memory_space<smem>>
    %c36 = arith.constant 36 : index
    %36 = memref.load %arg2[%c36] : memref<288xf32, #tpu.memory_space<smem>>
    %c37 = arith.constant 37 : index
    %37 = memref.load %arg2[%c37] : memref<288xf32, #tpu.memory_space<smem>>
    %c38 = arith.constant 38 : index
    %38 = memref.load %arg2[%c38] : memref<288xf32, #tpu.memory_space<smem>>
    %c39 = arith.constant 39 : index
    %39 = memref.load %arg2[%c39] : memref<288xf32, #tpu.memory_space<smem>>
    %c40 = arith.constant 40 : index
    %40 = memref.load %arg2[%c40] : memref<288xf32, #tpu.memory_space<smem>>
    %c41 = arith.constant 41 : index
    %41 = memref.load %arg2[%c41] : memref<288xf32, #tpu.memory_space<smem>>
    %c42 = arith.constant 42 : index
    %42 = memref.load %arg2[%c42] : memref<288xf32, #tpu.memory_space<smem>>
    %c43 = arith.constant 43 : index
    %43 = memref.load %arg2[%c43] : memref<288xf32, #tpu.memory_space<smem>>
    %c44 = arith.constant 44 : index
    %44 = memref.load %arg2[%c44] : memref<288xf32, #tpu.memory_space<smem>>
    %c45 = arith.constant 45 : index
    %45 = memref.load %arg2[%c45] : memref<288xf32, #tpu.memory_space<smem>>
    %c46 = arith.constant 46 : index
    %46 = memref.load %arg2[%c46] : memref<288xf32, #tpu.memory_space<smem>>
    %c47 = arith.constant 47 : index
    %47 = memref.load %arg2[%c47] : memref<288xf32, #tpu.memory_space<smem>>
    %c48 = arith.constant 48 : index
    %48 = memref.load %arg2[%c48] : memref<288xf32, #tpu.memory_space<smem>>
    %c49 = arith.constant 49 : index
    %49 = memref.load %arg2[%c49] : memref<288xf32, #tpu.memory_space<smem>>
    %c50 = arith.constant 50 : index
    %50 = memref.load %arg2[%c50] : memref<288xf32, #tpu.memory_space<smem>>
    %c51 = arith.constant 51 : index
    %51 = memref.load %arg2[%c51] : memref<288xf32, #tpu.memory_space<smem>>
    %c52 = arith.constant 52 : index
    %52 = memref.load %arg2[%c52] : memref<288xf32, #tpu.memory_space<smem>>
    %c53 = arith.constant 53 : index
    %53 = memref.load %arg2[%c53] : memref<288xf32, #tpu.memory_space<smem>>
    %c54 = arith.constant 54 : index
    %54 = memref.load %arg2[%c54] : memref<288xf32, #tpu.memory_space<smem>>
    %c55 = arith.constant 55 : index
    %55 = memref.load %arg2[%c55] : memref<288xf32, #tpu.memory_space<smem>>
    %c56 = arith.constant 56 : index
    %56 = memref.load %arg2[%c56] : memref<288xf32, #tpu.memory_space<smem>>
    %c57 = arith.constant 57 : index
    %57 = memref.load %arg2[%c57] : memref<288xf32, #tpu.memory_space<smem>>
    %c58 = arith.constant 58 : index
    %58 = memref.load %arg2[%c58] : memref<288xf32, #tpu.memory_space<smem>>
    %c59 = arith.constant 59 : index
    %59 = memref.load %arg2[%c59] : memref<288xf32, #tpu.memory_space<smem>>
    %c60 = arith.constant 60 : index
    %60 = memref.load %arg2[%c60] : memref<288xf32, #tpu.memory_space<smem>>
    %c61 = arith.constant 61 : index
    %61 = memref.load %arg2[%c61] : memref<288xf32, #tpu.memory_space<smem>>
    %c62 = arith.constant 62 : index
    %62 = memref.load %arg2[%c62] : memref<288xf32, #tpu.memory_space<smem>>
    %c63 = arith.constant 63 : index
    %63 = memref.load %arg2[%c63] : memref<288xf32, #tpu.memory_space<smem>>
    %c64 = arith.constant 64 : index
    %64 = memref.load %arg2[%c64] : memref<288xf32, #tpu.memory_space<smem>>
    %c65 = arith.constant 65 : index
    %65 = memref.load %arg2[%c65] : memref<288xf32, #tpu.memory_space<smem>>
    %c66 = arith.constant 66 : index
    %66 = memref.load %arg2[%c66] : memref<288xf32, #tpu.memory_space<smem>>
    %c67 = arith.constant 67 : index
    %67 = memref.load %arg2[%c67] : memref<288xf32, #tpu.memory_space<smem>>
    %c68 = arith.constant 68 : index
    %68 = memref.load %arg2[%c68] : memref<288xf32, #tpu.memory_space<smem>>
    %c69 = arith.constant 69 : index
    %69 = memref.load %arg2[%c69] : memref<288xf32, #tpu.memory_space<smem>>
    %c70 = arith.constant 70 : index
    %70 = memref.load %arg2[%c70] : memref<288xf32, #tpu.memory_space<smem>>
    %c71 = arith.constant 71 : index
    %71 = memref.load %arg2[%c71] : memref<288xf32, #tpu.memory_space<smem>>
    %c72 = arith.constant 72 : index
    %72 = memref.load %arg2[%c72] : memref<288xf32, #tpu.memory_space<smem>>
    %c73 = arith.constant 73 : index
    %73 = memref.load %arg2[%c73] : memref<288xf32, #tpu.memory_space<smem>>
    %c74 = arith.constant 74 : index
    %74 = memref.load %arg2[%c74] : memref<288xf32, #tpu.memory_space<smem>>
    %c75 = arith.constant 75 : index
    %75 = memref.load %arg2[%c75] : memref<288xf32, #tpu.memory_space<smem>>
    %c76 = arith.constant 76 : index
    %76 = memref.load %arg2[%c76] : memref<288xf32, #tpu.memory_space<smem>>
    %c77 = arith.constant 77 : index
    %77 = memref.load %arg2[%c77] : memref<288xf32, #tpu.memory_space<smem>>
    %c78 = arith.constant 78 : index
    %78 = memref.load %arg2[%c78] : memref<288xf32, #tpu.memory_space<smem>>
    %c79 = arith.constant 79 : index
    %79 = memref.load %arg2[%c79] : memref<288xf32, #tpu.memory_space<smem>>
    %c80 = arith.constant 80 : index
    %80 = memref.load %arg2[%c80] : memref<288xf32, #tpu.memory_space<smem>>
    %c81 = arith.constant 81 : index
    %81 = memref.load %arg2[%c81] : memref<288xf32, #tpu.memory_space<smem>>
    %c82 = arith.constant 82 : index
    %82 = memref.load %arg2[%c82] : memref<288xf32, #tpu.memory_space<smem>>
    %c83 = arith.constant 83 : index
    %83 = memref.load %arg2[%c83] : memref<288xf32, #tpu.memory_space<smem>>
    %c84 = arith.constant 84 : index
    %84 = memref.load %arg2[%c84] : memref<288xf32, #tpu.memory_space<smem>>
    %c85 = arith.constant 85 : index
    %85 = memref.load %arg2[%c85] : memref<288xf32, #tpu.memory_space<smem>>
    %c86 = arith.constant 86 : index
    %86 = memref.load %arg2[%c86] : memref<288xf32, #tpu.memory_space<smem>>
    %c87 = arith.constant 87 : index
    %87 = memref.load %arg2[%c87] : memref<288xf32, #tpu.memory_space<smem>>
    %c88 = arith.constant 88 : index
    %88 = memref.load %arg2[%c88] : memref<288xf32, #tpu.memory_space<smem>>
    %c89 = arith.constant 89 : index
    %89 = memref.load %arg2[%c89] : memref<288xf32, #tpu.memory_space<smem>>
    %c90 = arith.constant 90 : index
    %90 = memref.load %arg2[%c90] : memref<288xf32, #tpu.memory_space<smem>>
    %c91 = arith.constant 91 : index
    %91 = memref.load %arg2[%c91] : memref<288xf32, #tpu.memory_space<smem>>
    %c92 = arith.constant 92 : index
    %92 = memref.load %arg2[%c92] : memref<288xf32, #tpu.memory_space<smem>>
    %c93 = arith.constant 93 : index
    %93 = memref.load %arg2[%c93] : memref<288xf32, #tpu.memory_space<smem>>
    %c94 = arith.constant 94 : index
    %94 = memref.load %arg2[%c94] : memref<288xf32, #tpu.memory_space<smem>>
    %c95 = arith.constant 95 : index
    %95 = memref.load %arg2[%c95] : memref<288xf32, #tpu.memory_space<smem>>
    %c96 = arith.constant 96 : index
    %96 = memref.load %arg2[%c96] : memref<288xf32, #tpu.memory_space<smem>>
    %c97 = arith.constant 97 : index
    %97 = memref.load %arg2[%c97] : memref<288xf32, #tpu.memory_space<smem>>
    %c98 = arith.constant 98 : index
    %98 = memref.load %arg2[%c98] : memref<288xf32, #tpu.memory_space<smem>>
    %c99 = arith.constant 99 : index
    %99 = memref.load %arg2[%c99] : memref<288xf32, #tpu.memory_space<smem>>
    %c100 = arith.constant 100 : index
    %100 = memref.load %arg2[%c100] : memref<288xf32, #tpu.memory_space<smem>>
    %c101 = arith.constant 101 : index
    %101 = memref.load %arg2[%c101] : memref<288xf32, #tpu.memory_space<smem>>
    %c102 = arith.constant 102 : index
    %102 = memref.load %arg2[%c102] : memref<288xf32, #tpu.memory_space<smem>>
    %c103 = arith.constant 103 : index
    %103 = memref.load %arg2[%c103] : memref<288xf32, #tpu.memory_space<smem>>
    %c104 = arith.constant 104 : index
    %104 = memref.load %arg2[%c104] : memref<288xf32, #tpu.memory_space<smem>>
    %c105 = arith.constant 105 : index
    %105 = memref.load %arg2[%c105] : memref<288xf32, #tpu.memory_space<smem>>
    %c106 = arith.constant 106 : index
    %106 = memref.load %arg2[%c106] : memref<288xf32, #tpu.memory_space<smem>>
    %c107 = arith.constant 107 : index
    %107 = memref.load %arg2[%c107] : memref<288xf32, #tpu.memory_space<smem>>
    %c108 = arith.constant 108 : index
    %108 = memref.load %arg2[%c108] : memref<288xf32, #tpu.memory_space<smem>>
    %c109 = arith.constant 109 : index
    %109 = memref.load %arg2[%c109] : memref<288xf32, #tpu.memory_space<smem>>
    %c110 = arith.constant 110 : index
    %110 = memref.load %arg2[%c110] : memref<288xf32, #tpu.memory_space<smem>>
    %c111 = arith.constant 111 : index
    %111 = memref.load %arg2[%c111] : memref<288xf32, #tpu.memory_space<smem>>
    %c112 = arith.constant 112 : index
    %112 = memref.load %arg2[%c112] : memref<288xf32, #tpu.memory_space<smem>>
    %c113 = arith.constant 113 : index
    %113 = memref.load %arg2[%c113] : memref<288xf32, #tpu.memory_space<smem>>
    %c114 = arith.constant 114 : index
    %114 = memref.load %arg2[%c114] : memref<288xf32, #tpu.memory_space<smem>>
    %c115 = arith.constant 115 : index
    %115 = memref.load %arg2[%c115] : memref<288xf32, #tpu.memory_space<smem>>
    %c116 = arith.constant 116 : index
    %116 = memref.load %arg2[%c116] : memref<288xf32, #tpu.memory_space<smem>>
    %c117 = arith.constant 117 : index
    %117 = memref.load %arg2[%c117] : memref<288xf32, #tpu.memory_space<smem>>
    %c118 = arith.constant 118 : index
    %118 = memref.load %arg2[%c118] : memref<288xf32, #tpu.memory_space<smem>>
    %c119 = arith.constant 119 : index
    %119 = memref.load %arg2[%c119] : memref<288xf32, #tpu.memory_space<smem>>
    %c120 = arith.constant 120 : index
    %120 = memref.load %arg2[%c120] : memref<288xf32, #tpu.memory_space<smem>>
    %c121 = arith.constant 121 : index
    %121 = memref.load %arg2[%c121] : memref<288xf32, #tpu.memory_space<smem>>
    %c122 = arith.constant 122 : index
    %122 = memref.load %arg2[%c122] : memref<288xf32, #tpu.memory_space<smem>>
    %c123 = arith.constant 123 : index
    %123 = memref.load %arg2[%c123] : memref<288xf32, #tpu.memory_space<smem>>
    %c124 = arith.constant 124 : index
    %124 = memref.load %arg2[%c124] : memref<288xf32, #tpu.memory_space<smem>>
    %c125 = arith.constant 125 : index
    %125 = memref.load %arg2[%c125] : memref<288xf32, #tpu.memory_space<smem>>
    %c126 = arith.constant 126 : index
    %126 = memref.load %arg2[%c126] : memref<288xf32, #tpu.memory_space<smem>>
    %c127 = arith.constant 127 : index
    %127 = memref.load %arg2[%c127] : memref<288xf32, #tpu.memory_space<smem>>
    %c128 = arith.constant 128 : index
    %128 = memref.load %arg2[%c128] : memref<288xf32, #tpu.memory_space<smem>>
    %c129 = arith.constant 129 : index
    %129 = memref.load %arg2[%c129] : memref<288xf32, #tpu.memory_space<smem>>
    %c130 = arith.constant 130 : index
    %130 = memref.load %arg2[%c130] : memref<288xf32, #tpu.memory_space<smem>>
    %c131 = arith.constant 131 : index
    %131 = memref.load %arg2[%c131] : memref<288xf32, #tpu.memory_space<smem>>
    %c132 = arith.constant 132 : index
    %132 = memref.load %arg2[%c132] : memref<288xf32, #tpu.memory_space<smem>>
    %c133 = arith.constant 133 : index
    %133 = memref.load %arg2[%c133] : memref<288xf32, #tpu.memory_space<smem>>
    %c134 = arith.constant 134 : index
    %134 = memref.load %arg2[%c134] : memref<288xf32, #tpu.memory_space<smem>>
    %c135 = arith.constant 135 : index
    %135 = memref.load %arg2[%c135] : memref<288xf32, #tpu.memory_space<smem>>
    %c136 = arith.constant 136 : index
    %136 = memref.load %arg2[%c136] : memref<288xf32, #tpu.memory_space<smem>>
    %c137 = arith.constant 137 : index
    %137 = memref.load %arg2[%c137] : memref<288xf32, #tpu.memory_space<smem>>
    %c138 = arith.constant 138 : index
    %138 = memref.load %arg2[%c138] : memref<288xf32, #tpu.memory_space<smem>>
    %c139 = arith.constant 139 : index
    %139 = memref.load %arg2[%c139] : memref<288xf32, #tpu.memory_space<smem>>
    %c140 = arith.constant 140 : index
    %140 = memref.load %arg2[%c140] : memref<288xf32, #tpu.memory_space<smem>>
    %c141 = arith.constant 141 : index
    %141 = memref.load %arg2[%c141] : memref<288xf32, #tpu.memory_space<smem>>
    %c142 = arith.constant 142 : index
    %142 = memref.load %arg2[%c142] : memref<288xf32, #tpu.memory_space<smem>>
    %c143 = arith.constant 143 : index
    %143 = memref.load %arg2[%c143] : memref<288xf32, #tpu.memory_space<smem>>
    %c144 = arith.constant 144 : index
    %144 = memref.load %arg2[%c144] : memref<288xf32, #tpu.memory_space<smem>>
    %c145 = arith.constant 145 : index
    %145 = memref.load %arg2[%c145] : memref<288xf32, #tpu.memory_space<smem>>
    %c146 = arith.constant 146 : index
    %146 = memref.load %arg2[%c146] : memref<288xf32, #tpu.memory_space<smem>>
    %c147 = arith.constant 147 : index
    %147 = memref.load %arg2[%c147] : memref<288xf32, #tpu.memory_space<smem>>
    %c148 = arith.constant 148 : index
    %148 = memref.load %arg2[%c148] : memref<288xf32, #tpu.memory_space<smem>>
    %c149 = arith.constant 149 : index
    %149 = memref.load %arg2[%c149] : memref<288xf32, #tpu.memory_space<smem>>
    %c150 = arith.constant 150 : index
    %150 = memref.load %arg2[%c150] : memref<288xf32, #tpu.memory_space<smem>>
    %c151 = arith.constant 151 : index
    %151 = memref.load %arg2[%c151] : memref<288xf32, #tpu.memory_space<smem>>
    %c152 = arith.constant 152 : index
    %152 = memref.load %arg2[%c152] : memref<288xf32, #tpu.memory_space<smem>>
    %c153 = arith.constant 153 : index
    %153 = memref.load %arg2[%c153] : memref<288xf32, #tpu.memory_space<smem>>
    %c154 = arith.constant 154 : index
    %154 = memref.load %arg2[%c154] : memref<288xf32, #tpu.memory_space<smem>>
    %c155 = arith.constant 155 : index
    %155 = memref.load %arg2[%c155] : memref<288xf32, #tpu.memory_space<smem>>
    %c156 = arith.constant 156 : index
    %156 = memref.load %arg2[%c156] : memref<288xf32, #tpu.memory_space<smem>>
    %c157 = arith.constant 157 : index
    %157 = memref.load %arg2[%c157] : memref<288xf32, #tpu.memory_space<smem>>
    %c158 = arith.constant 158 : index
    %158 = memref.load %arg2[%c158] : memref<288xf32, #tpu.memory_space<smem>>
    %c159 = arith.constant 159 : index
    %159 = memref.load %arg2[%c159] : memref<288xf32, #tpu.memory_space<smem>>
    %c160 = arith.constant 160 : index
    %160 = memref.load %arg2[%c160] : memref<288xf32, #tpu.memory_space<smem>>
    %c161 = arith.constant 161 : index
    %161 = memref.load %arg2[%c161] : memref<288xf32, #tpu.memory_space<smem>>
    %c162 = arith.constant 162 : index
    %162 = memref.load %arg2[%c162] : memref<288xf32, #tpu.memory_space<smem>>
    %c163 = arith.constant 163 : index
    %163 = memref.load %arg2[%c163] : memref<288xf32, #tpu.memory_space<smem>>
    %c164 = arith.constant 164 : index
    %164 = memref.load %arg2[%c164] : memref<288xf32, #tpu.memory_space<smem>>
    %c165 = arith.constant 165 : index
    %165 = memref.load %arg2[%c165] : memref<288xf32, #tpu.memory_space<smem>>
    %c166 = arith.constant 166 : index
    %166 = memref.load %arg2[%c166] : memref<288xf32, #tpu.memory_space<smem>>
    %c167 = arith.constant 167 : index
    %167 = memref.load %arg2[%c167] : memref<288xf32, #tpu.memory_space<smem>>
    %c168 = arith.constant 168 : index
    %168 = memref.load %arg2[%c168] : memref<288xf32, #tpu.memory_space<smem>>
    %c169 = arith.constant 169 : index
    %169 = memref.load %arg2[%c169] : memref<288xf32, #tpu.memory_space<smem>>
    %c170 = arith.constant 170 : index
    %170 = memref.load %arg2[%c170] : memref<288xf32, #tpu.memory_space<smem>>
    %c171 = arith.constant 171 : index
    %171 = memref.load %arg2[%c171] : memref<288xf32, #tpu.memory_space<smem>>
    %c172 = arith.constant 172 : index
    %172 = memref.load %arg2[%c172] : memref<288xf32, #tpu.memory_space<smem>>
    %c173 = arith.constant 173 : index
    %173 = memref.load %arg2[%c173] : memref<288xf32, #tpu.memory_space<smem>>
    %c174 = arith.constant 174 : index
    %174 = memref.load %arg2[%c174] : memref<288xf32, #tpu.memory_space<smem>>
    %c175 = arith.constant 175 : index
    %175 = memref.load %arg2[%c175] : memref<288xf32, #tpu.memory_space<smem>>
    %c176 = arith.constant 176 : index
    %176 = memref.load %arg2[%c176] : memref<288xf32, #tpu.memory_space<smem>>
    %c177 = arith.constant 177 : index
    %177 = memref.load %arg2[%c177] : memref<288xf32, #tpu.memory_space<smem>>
    %c178 = arith.constant 178 : index
    %178 = memref.load %arg2[%c178] : memref<288xf32, #tpu.memory_space<smem>>
    %c179 = arith.constant 179 : index
    %179 = memref.load %arg2[%c179] : memref<288xf32, #tpu.memory_space<smem>>
    %c180 = arith.constant 180 : index
    %180 = memref.load %arg2[%c180] : memref<288xf32, #tpu.memory_space<smem>>
    %c181 = arith.constant 181 : index
    %181 = memref.load %arg2[%c181] : memref<288xf32, #tpu.memory_space<smem>>
    %c182 = arith.constant 182 : index
    %182 = memref.load %arg2[%c182] : memref<288xf32, #tpu.memory_space<smem>>
    %c183 = arith.constant 183 : index
    %183 = memref.load %arg2[%c183] : memref<288xf32, #tpu.memory_space<smem>>
    %c184 = arith.constant 184 : index
    %184 = memref.load %arg2[%c184] : memref<288xf32, #tpu.memory_space<smem>>
    %c185 = arith.constant 185 : index
    %185 = memref.load %arg2[%c185] : memref<288xf32, #tpu.memory_space<smem>>
    %c186 = arith.constant 186 : index
    %186 = memref.load %arg2[%c186] : memref<288xf32, #tpu.memory_space<smem>>
    %c187 = arith.constant 187 : index
    %187 = memref.load %arg2[%c187] : memref<288xf32, #tpu.memory_space<smem>>
    %c188 = arith.constant 188 : index
    %188 = memref.load %arg2[%c188] : memref<288xf32, #tpu.memory_space<smem>>
    %c189 = arith.constant 189 : index
    %189 = memref.load %arg2[%c189] : memref<288xf32, #tpu.memory_space<smem>>
    %c190 = arith.constant 190 : index
    %190 = memref.load %arg2[%c190] : memref<288xf32, #tpu.memory_space<smem>>
    %c191 = arith.constant 191 : index
    %191 = memref.load %arg2[%c191] : memref<288xf32, #tpu.memory_space<smem>>
    %c192 = arith.constant 192 : index
    %192 = memref.load %arg2[%c192] : memref<288xf32, #tpu.memory_space<smem>>
    %c193 = arith.constant 193 : index
    %193 = memref.load %arg2[%c193] : memref<288xf32, #tpu.memory_space<smem>>
    %c194 = arith.constant 194 : index
    %194 = memref.load %arg2[%c194] : memref<288xf32, #tpu.memory_space<smem>>
    %c195 = arith.constant 195 : index
    %195 = memref.load %arg2[%c195] : memref<288xf32, #tpu.memory_space<smem>>
    %c196 = arith.constant 196 : index
    %196 = memref.load %arg2[%c196] : memref<288xf32, #tpu.memory_space<smem>>
    %c197 = arith.constant 197 : index
    %197 = memref.load %arg2[%c197] : memref<288xf32, #tpu.memory_space<smem>>
    %c198 = arith.constant 198 : index
    %198 = memref.load %arg2[%c198] : memref<288xf32, #tpu.memory_space<smem>>
    %c199 = arith.constant 199 : index
    %199 = memref.load %arg2[%c199] : memref<288xf32, #tpu.memory_space<smem>>
    %c200 = arith.constant 200 : index
    %200 = memref.load %arg2[%c200] : memref<288xf32, #tpu.memory_space<smem>>
    %c201 = arith.constant 201 : index
    %201 = memref.load %arg2[%c201] : memref<288xf32, #tpu.memory_space<smem>>
    %c202 = arith.constant 202 : index
    %202 = memref.load %arg2[%c202] : memref<288xf32, #tpu.memory_space<smem>>
    %c203 = arith.constant 203 : index
    %203 = memref.load %arg2[%c203] : memref<288xf32, #tpu.memory_space<smem>>
    %c204 = arith.constant 204 : index
    %204 = memref.load %arg2[%c204] : memref<288xf32, #tpu.memory_space<smem>>
    %c205 = arith.constant 205 : index
    %205 = memref.load %arg2[%c205] : memref<288xf32, #tpu.memory_space<smem>>
    %c206 = arith.constant 206 : index
    %206 = memref.load %arg2[%c206] : memref<288xf32, #tpu.memory_space<smem>>
    %c207 = arith.constant 207 : index
    %207 = memref.load %arg2[%c207] : memref<288xf32, #tpu.memory_space<smem>>
    %c208 = arith.constant 208 : index
    %208 = memref.load %arg2[%c208] : memref<288xf32, #tpu.memory_space<smem>>
    %c209 = arith.constant 209 : index
    %209 = memref.load %arg2[%c209] : memref<288xf32, #tpu.memory_space<smem>>
    %c210 = arith.constant 210 : index
    %210 = memref.load %arg2[%c210] : memref<288xf32, #tpu.memory_space<smem>>
    %c211 = arith.constant 211 : index
    %211 = memref.load %arg2[%c211] : memref<288xf32, #tpu.memory_space<smem>>
    %c212 = arith.constant 212 : index
    %212 = memref.load %arg2[%c212] : memref<288xf32, #tpu.memory_space<smem>>
    %c213 = arith.constant 213 : index
    %213 = memref.load %arg2[%c213] : memref<288xf32, #tpu.memory_space<smem>>
    %c214 = arith.constant 214 : index
    %214 = memref.load %arg2[%c214] : memref<288xf32, #tpu.memory_space<smem>>
    %c215 = arith.constant 215 : index
    %215 = memref.load %arg2[%c215] : memref<288xf32, #tpu.memory_space<smem>>
    %c216 = arith.constant 216 : index
    %216 = memref.load %arg2[%c216] : memref<288xf32, #tpu.memory_space<smem>>
    %c217 = arith.constant 217 : index
    %217 = memref.load %arg2[%c217] : memref<288xf32, #tpu.memory_space<smem>>
    %c218 = arith.constant 218 : index
    %218 = memref.load %arg2[%c218] : memref<288xf32, #tpu.memory_space<smem>>
    %c219 = arith.constant 219 : index
    %219 = memref.load %arg2[%c219] : memref<288xf32, #tpu.memory_space<smem>>
    %c220 = arith.constant 220 : index
    %220 = memref.load %arg2[%c220] : memref<288xf32, #tpu.memory_space<smem>>
    %c221 = arith.constant 221 : index
    %221 = memref.load %arg2[%c221] : memref<288xf32, #tpu.memory_space<smem>>
    %c222 = arith.constant 222 : index
    %222 = memref.load %arg2[%c222] : memref<288xf32, #tpu.memory_space<smem>>
    %c223 = arith.constant 223 : index
    %223 = memref.load %arg2[%c223] : memref<288xf32, #tpu.memory_space<smem>>
    %c224 = arith.constant 224 : index
    %224 = memref.load %arg2[%c224] : memref<288xf32, #tpu.memory_space<smem>>
    %c225 = arith.constant 225 : index
    %225 = memref.load %arg2[%c225] : memref<288xf32, #tpu.memory_space<smem>>
    %c226 = arith.constant 226 : index
    %226 = memref.load %arg2[%c226] : memref<288xf32, #tpu.memory_space<smem>>
    %c227 = arith.constant 227 : index
    %227 = memref.load %arg2[%c227] : memref<288xf32, #tpu.memory_space<smem>>
    %c228 = arith.constant 228 : index
    %228 = memref.load %arg2[%c228] : memref<288xf32, #tpu.memory_space<smem>>
    %c229 = arith.constant 229 : index
    %229 = memref.load %arg2[%c229] : memref<288xf32, #tpu.memory_space<smem>>
    %c230 = arith.constant 230 : index
    %230 = memref.load %arg2[%c230] : memref<288xf32, #tpu.memory_space<smem>>
    %c231 = arith.constant 231 : index
    %231 = memref.load %arg2[%c231] : memref<288xf32, #tpu.memory_space<smem>>
    %c232 = arith.constant 232 : index
    %232 = memref.load %arg2[%c232] : memref<288xf32, #tpu.memory_space<smem>>
    %c233 = arith.constant 233 : index
    %233 = memref.load %arg2[%c233] : memref<288xf32, #tpu.memory_space<smem>>
    %c234 = arith.constant 234 : index
    %234 = memref.load %arg2[%c234] : memref<288xf32, #tpu.memory_space<smem>>
    %c235 = arith.constant 235 : index
    %235 = memref.load %arg2[%c235] : memref<288xf32, #tpu.memory_space<smem>>
    %c236 = arith.constant 236 : index
    %236 = memref.load %arg2[%c236] : memref<288xf32, #tpu.memory_space<smem>>
    %c237 = arith.constant 237 : index
    %237 = memref.load %arg2[%c237] : memref<288xf32, #tpu.memory_space<smem>>
    %c238 = arith.constant 238 : index
    %238 = memref.load %arg2[%c238] : memref<288xf32, #tpu.memory_space<smem>>
    %c239 = arith.constant 239 : index
    %239 = memref.load %arg2[%c239] : memref<288xf32, #tpu.memory_space<smem>>
    %c240 = arith.constant 240 : index
    %240 = memref.load %arg2[%c240] : memref<288xf32, #tpu.memory_space<smem>>
    %c241 = arith.constant 241 : index
    %241 = memref.load %arg2[%c241] : memref<288xf32, #tpu.memory_space<smem>>
    %c242 = arith.constant 242 : index
    %242 = memref.load %arg2[%c242] : memref<288xf32, #tpu.memory_space<smem>>
    %c243 = arith.constant 243 : index
    %243 = memref.load %arg2[%c243] : memref<288xf32, #tpu.memory_space<smem>>
    %c244 = arith.constant 244 : index
    %244 = memref.load %arg2[%c244] : memref<288xf32, #tpu.memory_space<smem>>
    %c245 = arith.constant 245 : index
    %245 = memref.load %arg2[%c245] : memref<288xf32, #tpu.memory_space<smem>>
    %c246 = arith.constant 246 : index
    %246 = memref.load %arg2[%c246] : memref<288xf32, #tpu.memory_space<smem>>
    %c247 = arith.constant 247 : index
    %247 = memref.load %arg2[%c247] : memref<288xf32, #tpu.memory_space<smem>>
    %c248 = arith.constant 248 : index
    %248 = memref.load %arg2[%c248] : memref<288xf32, #tpu.memory_space<smem>>
    %c249 = arith.constant 249 : index
    %249 = memref.load %arg2[%c249] : memref<288xf32, #tpu.memory_space<smem>>
    %c250 = arith.constant 250 : index
    %250 = memref.load %arg2[%c250] : memref<288xf32, #tpu.memory_space<smem>>
    %c251 = arith.constant 251 : index
    %251 = memref.load %arg2[%c251] : memref<288xf32, #tpu.memory_space<smem>>
    %c252 = arith.constant 252 : index
    %252 = memref.load %arg2[%c252] : memref<288xf32, #tpu.memory_space<smem>>
    %c253 = arith.constant 253 : index
    %253 = memref.load %arg2[%c253] : memref<288xf32, #tpu.memory_space<smem>>
    %c254 = arith.constant 254 : index
    %254 = memref.load %arg2[%c254] : memref<288xf32, #tpu.memory_space<smem>>
    %c255 = arith.constant 255 : index
    %255 = memref.load %arg2[%c255] : memref<288xf32, #tpu.memory_space<smem>>
    %c256 = arith.constant 256 : index
    %256 = memref.load %arg2[%c256] : memref<288xf32, #tpu.memory_space<smem>>
    %c257 = arith.constant 257 : index
    %257 = memref.load %arg2[%c257] : memref<288xf32, #tpu.memory_space<smem>>
    %c258 = arith.constant 258 : index
    %258 = memref.load %arg2[%c258] : memref<288xf32, #tpu.memory_space<smem>>
    %c259 = arith.constant 259 : index
    %259 = memref.load %arg2[%c259] : memref<288xf32, #tpu.memory_space<smem>>
    %c260 = arith.constant 260 : index
    %260 = memref.load %arg2[%c260] : memref<288xf32, #tpu.memory_space<smem>>
    %c261 = arith.constant 261 : index
    %261 = memref.load %arg2[%c261] : memref<288xf32, #tpu.memory_space<smem>>
    %c262 = arith.constant 262 : index
    %262 = memref.load %arg2[%c262] : memref<288xf32, #tpu.memory_space<smem>>
    %c263 = arith.constant 263 : index
    %263 = memref.load %arg2[%c263] : memref<288xf32, #tpu.memory_space<smem>>
    %c264 = arith.constant 264 : index
    %264 = memref.load %arg2[%c264] : memref<288xf32, #tpu.memory_space<smem>>
    %c265 = arith.constant 265 : index
    %265 = memref.load %arg2[%c265] : memref<288xf32, #tpu.memory_space<smem>>
    %c266 = arith.constant 266 : index
    %266 = memref.load %arg2[%c266] : memref<288xf32, #tpu.memory_space<smem>>
    %c267 = arith.constant 267 : index
    %267 = memref.load %arg2[%c267] : memref<288xf32, #tpu.memory_space<smem>>
    %c268 = arith.constant 268 : index
    %268 = memref.load %arg2[%c268] : memref<288xf32, #tpu.memory_space<smem>>
    %c269 = arith.constant 269 : index
    %269 = memref.load %arg2[%c269] : memref<288xf32, #tpu.memory_space<smem>>
    %c270 = arith.constant 270 : index
    %270 = memref.load %arg2[%c270] : memref<288xf32, #tpu.memory_space<smem>>
    %c271 = arith.constant 271 : index
    %271 = memref.load %arg2[%c271] : memref<288xf32, #tpu.memory_space<smem>>
    %c272 = arith.constant 272 : index
    %272 = memref.load %arg2[%c272] : memref<288xf32, #tpu.memory_space<smem>>
    %c273 = arith.constant 273 : index
    %273 = memref.load %arg2[%c273] : memref<288xf32, #tpu.memory_space<smem>>
    %c274 = arith.constant 274 : index
    %274 = memref.load %arg2[%c274] : memref<288xf32, #tpu.memory_space<smem>>
    %c275 = arith.constant 275 : index
    %275 = memref.load %arg2[%c275] : memref<288xf32, #tpu.memory_space<smem>>
    %c276 = arith.constant 276 : index
    %276 = memref.load %arg2[%c276] : memref<288xf32, #tpu.memory_space<smem>>
    %c277 = arith.constant 277 : index
    %277 = memref.load %arg2[%c277] : memref<288xf32, #tpu.memory_space<smem>>
    %c278 = arith.constant 278 : index
    %278 = memref.load %arg2[%c278] : memref<288xf32, #tpu.memory_space<smem>>
    %c279 = arith.constant 279 : index
    %279 = memref.load %arg2[%c279] : memref<288xf32, #tpu.memory_space<smem>>
    %c280 = arith.constant 280 : index
    %280 = memref.load %arg2[%c280] : memref<288xf32, #tpu.memory_space<smem>>
    %c281 = arith.constant 281 : index
    %281 = memref.load %arg2[%c281] : memref<288xf32, #tpu.memory_space<smem>>
    %c282 = arith.constant 282 : index
    %282 = memref.load %arg2[%c282] : memref<288xf32, #tpu.memory_space<smem>>
    %c283 = arith.constant 283 : index
    %283 = memref.load %arg2[%c283] : memref<288xf32, #tpu.memory_space<smem>>
    %c284 = arith.constant 284 : index
    %284 = memref.load %arg2[%c284] : memref<288xf32, #tpu.memory_space<smem>>
    %c285 = arith.constant 285 : index
    %285 = memref.load %arg2[%c285] : memref<288xf32, #tpu.memory_space<smem>>
    %c286 = arith.constant 286 : index
    %286 = memref.load %arg2[%c286] : memref<288xf32, #tpu.memory_space<smem>>
    %c287 = arith.constant 287 : index
    %287 = memref.load %arg2[%c287] : memref<288xf32, #tpu.memory_space<smem>>
    %c0_0 = arith.constant 0 : index
    %288 = memref.load %arg3[%c0_0] : memref<32xf32, #tpu.memory_space<smem>>
    %c1_1 = arith.constant 1 : index
    %289 = memref.load %arg3[%c1_1] : memref<32xf32, #tpu.memory_space<smem>>
    %c2_2 = arith.constant 2 : index
    %290 = memref.load %arg3[%c2_2] : memref<32xf32, #tpu.memory_space<smem>>
    %c3_3 = arith.constant 3 : index
    %291 = memref.load %arg3[%c3_3] : memref<32xf32, #tpu.memory_space<smem>>
    %c4_4 = arith.constant 4 : index
    %292 = memref.load %arg3[%c4_4] : memref<32xf32, #tpu.memory_space<smem>>
    %c5_5 = arith.constant 5 : index
    %293 = memref.load %arg3[%c5_5] : memref<32xf32, #tpu.memory_space<smem>>
    %c6_6 = arith.constant 6 : index
    %294 = memref.load %arg3[%c6_6] : memref<32xf32, #tpu.memory_space<smem>>
    %c7_7 = arith.constant 7 : index
    %295 = memref.load %arg3[%c7_7] : memref<32xf32, #tpu.memory_space<smem>>
    %c8_8 = arith.constant 8 : index
    %296 = memref.load %arg3[%c8_8] : memref<32xf32, #tpu.memory_space<smem>>
    %c9_9 = arith.constant 9 : index
    %297 = memref.load %arg3[%c9_9] : memref<32xf32, #tpu.memory_space<smem>>
    %c10_10 = arith.constant 10 : index
    %298 = memref.load %arg3[%c10_10] : memref<32xf32, #tpu.memory_space<smem>>
    %c11_11 = arith.constant 11 : index
    %299 = memref.load %arg3[%c11_11] : memref<32xf32, #tpu.memory_space<smem>>
    %c12_12 = arith.constant 12 : index
    %300 = memref.load %arg3[%c12_12] : memref<32xf32, #tpu.memory_space<smem>>
    %c13_13 = arith.constant 13 : index
    %301 = memref.load %arg3[%c13_13] : memref<32xf32, #tpu.memory_space<smem>>
    %c14_14 = arith.constant 14 : index
    %302 = memref.load %arg3[%c14_14] : memref<32xf32, #tpu.memory_space<smem>>
    %c15_15 = arith.constant 15 : index
    %303 = memref.load %arg3[%c15_15] : memref<32xf32, #tpu.memory_space<smem>>
    %c16_16 = arith.constant 16 : index
    %304 = memref.load %arg3[%c16_16] : memref<32xf32, #tpu.memory_space<smem>>
    %c17_17 = arith.constant 17 : index
    %305 = memref.load %arg3[%c17_17] : memref<32xf32, #tpu.memory_space<smem>>
    %c18_18 = arith.constant 18 : index
    %306 = memref.load %arg3[%c18_18] : memref<32xf32, #tpu.memory_space<smem>>
    %c19_19 = arith.constant 19 : index
    %307 = memref.load %arg3[%c19_19] : memref<32xf32, #tpu.memory_space<smem>>
    %c20_20 = arith.constant 20 : index
    %308 = memref.load %arg3[%c20_20] : memref<32xf32, #tpu.memory_space<smem>>
    %c21_21 = arith.constant 21 : index
    %309 = memref.load %arg3[%c21_21] : memref<32xf32, #tpu.memory_space<smem>>
    %c22_22 = arith.constant 22 : index
    %310 = memref.load %arg3[%c22_22] : memref<32xf32, #tpu.memory_space<smem>>
    %c23_23 = arith.constant 23 : index
    %311 = memref.load %arg3[%c23_23] : memref<32xf32, #tpu.memory_space<smem>>
    %c24_24 = arith.constant 24 : index
    %312 = memref.load %arg3[%c24_24] : memref<32xf32, #tpu.memory_space<smem>>
    %c25_25 = arith.constant 25 : index
    %313 = memref.load %arg3[%c25_25] : memref<32xf32, #tpu.memory_space<smem>>
    %c26_26 = arith.constant 26 : index
    %314 = memref.load %arg3[%c26_26] : memref<32xf32, #tpu.memory_space<smem>>
    %c27_27 = arith.constant 27 : index
    %315 = memref.load %arg3[%c27_27] : memref<32xf32, #tpu.memory_space<smem>>
    %c28_28 = arith.constant 28 : index
    %316 = memref.load %arg3[%c28_28] : memref<32xf32, #tpu.memory_space<smem>>
    %c29_29 = arith.constant 29 : index
    %317 = memref.load %arg3[%c29_29] : memref<32xf32, #tpu.memory_space<smem>>
    %c30_30 = arith.constant 30 : index
    %318 = memref.load %arg3[%c30_30] : memref<32xf32, #tpu.memory_space<smem>>
    %c31_31 = arith.constant 31 : index
    %319 = memref.load %arg3[%c31_31] : memref<32xf32, #tpu.memory_space<smem>>
    %c0_32 = arith.constant 0 : index
    %c0_33 = arith.constant 0 : index
    %c0_34 = arith.constant 0 : index
    %c0_35 = arith.constant 0 : index
    %320 = vector.load %arg4[%c0_32, %c0_33, %c0_34, %c0_35] : memref<1x9x2x128xf32, #tpu.memory_space<vmem>>, vector<1x1x2x128xf32>
    %321 = vector.shape_cast %320 : vector<1x1x2x128xf32> to vector<2x128xf32>
    %c0_36 = arith.constant 0 : index
    %c1_37 = arith.constant 1 : index
    %c0_38 = arith.constant 0 : index
    %c0_39 = arith.constant 0 : index
    %322 = vector.load %arg4[%c0_36, %c1_37, %c0_38, %c0_39] : memref<1x9x2x128xf32, #tpu.memory_space<vmem>>, vector<1x1x2x128xf32>
    %323 = vector.shape_cast %322 : vector<1x1x2x128xf32> to vector<2x128xf32>
    %c0_40 = arith.constant 0 : index
    %c2_41 = arith.constant 2 : index
    %c0_42 = arith.constant 0 : index
    %c0_43 = arith.constant 0 : index
    %324 = vector.load %arg4[%c0_40, %c2_41, %c0_42, %c0_43] : memref<1x9x2x128xf32, #tpu.memory_space<vmem>>, vector<1x1x2x128xf32>
    %325 = vector.shape_cast %324 : vector<1x1x2x128xf32> to vector<2x128xf32>
    %c0_44 = arith.constant 0 : index
    %c3_45 = arith.constant 3 : index
    %c0_46 = arith.constant 0 : index
    %c0_47 = arith.constant 0 : index
    %326 = vector.load %arg4[%c0_44, %c3_45, %c0_46, %c0_47] : memref<1x9x2x128xf32, #tpu.memory_space<vmem>>, vector<1x1x2x128xf32>
    %327 = vector.shape_cast %326 : vector<1x1x2x128xf32> to vector<2x128xf32>
    %c0_48 = arith.constant 0 : index
    %c4_49 = arith.constant 4 : index
    %c0_50 = arith.constant 0 : index
    %c0_51 = arith.constant 0 : index
    %328 = vector.load %arg4[%c0_48, %c4_49, %c0_50, %c0_51] : memref<1x9x2x128xf32, #tpu.memory_space<vmem>>, vector<1x1x2x128xf32>
    %329 = vector.shape_cast %328 : vector<1x1x2x128xf32> to vector<2x128xf32>
    %c0_52 = arith.constant 0 : index
    %c5_53 = arith.constant 5 : index
    %c0_54 = arith.constant 0 : index
    %c0_55 = arith.constant 0 : index
    %330 = vector.load %arg4[%c0_52, %c5_53, %c0_54, %c0_55] : memref<1x9x2x128xf32, #tpu.memory_space<vmem>>, vector<1x1x2x128xf32>
    %331 = vector.shape_cast %330 : vector<1x1x2x128xf32> to vector<2x128xf32>
    %c0_56 = arith.constant 0 : index
    %c6_57 = arith.constant 6 : index
    %c0_58 = arith.constant 0 : index
    %c0_59 = arith.constant 0 : index
    %332 = vector.load %arg4[%c0_56, %c6_57, %c0_58, %c0_59] : memref<1x9x2x128xf32, #tpu.memory_space<vmem>>, vector<1x1x2x128xf32>
    %333 = vector.shape_cast %332 : vector<1x1x2x128xf32> to vector<2x128xf32>
    %c0_60 = arith.constant 0 : index
    %c7_61 = arith.constant 7 : index
    %c0_62 = arith.constant 0 : index
    %c0_63 = arith.constant 0 : index
    %334 = vector.load %arg4[%c0_60, %c7_61, %c0_62, %c0_63] : memref<1x9x2x128xf32, #tpu.memory_space<vmem>>, vector<1x1x2x128xf32>
    %335 = vector.shape_cast %334 : vector<1x1x2x128xf32> to vector<2x128xf32>
    %c0_64 = arith.constant 0 : index
    %c8_65 = arith.constant 8 : index
    %c0_66 = arith.constant 0 : index
    %c0_67 = arith.constant 0 : index
    %336 = vector.load %arg4[%c0_64, %c8_65, %c0_66, %c0_67] : memref<1x9x2x128xf32, #tpu.memory_space<vmem>>, vector<1x1x2x128xf32>
    %337 = vector.shape_cast %336 : vector<1x1x2x128xf32> to vector<2x128xf32>
    %338 = vector.broadcast %288 : f32 to vector<2x128xf32>
    %339 = vector.broadcast %0 : f32 to vector<2x128xf32>
    %340 = arith.mulf %321, %339 : vector<2x128xf32>
    %341 = arith.addf %338, %340 : vector<2x128xf32>
    %342 = vector.broadcast %1 : f32 to vector<2x128xf32>
    %343 = arith.mulf %323, %342 : vector<2x128xf32>
    %344 = arith.addf %341, %343 : vector<2x128xf32>
    %345 = vector.broadcast %2 : f32 to vector<2x128xf32>
    %346 = arith.mulf %325, %345 : vector<2x128xf32>
    %347 = arith.addf %344, %346 : vector<2x128xf32>
    %348 = vector.broadcast %3 : f32 to vector<2x128xf32>
    %349 = arith.mulf %327, %348 : vector<2x128xf32>
    %350 = arith.addf %347, %349 : vector<2x128xf32>
    %351 = vector.broadcast %4 : f32 to vector<2x128xf32>
    %352 = arith.mulf %329, %351 : vector<2x128xf32>
    %353 = arith.addf %350, %352 : vector<2x128xf32>
    %354 = vector.broadcast %5 : f32 to vector<2x128xf32>
    %355 = arith.mulf %331, %354 : vector<2x128xf32>
    %356 = arith.addf %353, %355 : vector<2x128xf32>
    %357 = vector.broadcast %6 : f32 to vector<2x128xf32>
    %358 = arith.mulf %333, %357 : vector<2x128xf32>
    %359 = arith.addf %356, %358 : vector<2x128xf32>
    %360 = vector.broadcast %7 : f32 to vector<2x128xf32>
    %361 = arith.mulf %335, %360 : vector<2x128xf32>
    %362 = arith.addf %359, %361 : vector<2x128xf32>
    %363 = vector.broadcast %8 : f32 to vector<2x128xf32>
    %364 = arith.mulf %337, %363 : vector<2x128xf32>
    %365 = arith.addf %362, %364 : vector<2x128xf32>
    %c0_68 = arith.constant 0 : index
    %c0_69 = arith.constant 0 : index
    %c0_70 = arith.constant 0 : index
    %c0_71 = arith.constant 0 : index
    %366 = vector.load %arg5[%c0_68, %c0_69, %c0_70, %c0_71] : memref<1x32x2x128xf32, #tpu.memory_space<vmem>>, vector<1x1x2x128xf32>
    %367 = vector.shape_cast %366 : vector<1x1x2x128xf32> to vector<2x128xf32>
    %368 = vector.shape_cast %365 : vector<2x128xf32> to vector<1x1x2x128xf32>
    tpu.vector_store %arg5[%c0_68, %c0_69, %c0_70, %c0_71], %368 {strides = array<i32>} : memref<1x32x2x128xf32, #tpu.memory_space<vmem>>, vector<1x1x2x128xf32>,
    %369 = vector.broadcast %289 : f32 to vector<2x128xf32>
    %370 = vector.broadcast %9 : f32 to vector<2x128xf32>
    %371 = arith.mulf %321, %370 : vector<2x128xf32>
    %372 = arith.addf %369, %371 : vector<2x128xf32>
    %373 = vector.broadcast %10 : f32 to vector<2x128xf32>
    %374 = arith.mulf %323, %373 : vector<2x128xf32>
    %375 = arith.addf %372, %374 : vector<2x128xf32>
    %376 = vector.broadcast %11 : f32 to vector<2x128xf32>
    %377 = arith.mulf %325, %376 : vector<2x128xf32>
    %378 = arith.addf %375, %377 : vector<2x128xf32>
    %379 = vector.broadcast %12 : f32 to vector<2x128xf32>
    %380 = arith.mulf %327, %379 : vector<2x128xf32>
    %381 = arith.addf %378, %380 : vector<2x128xf32>
    %382 = vector.broadcast %13 : f32 to vector<2x128xf32>
    %383 = arith.mulf %329, %382 : vector<2x128xf32>
    %384 = arith.addf %381, %383 : vector<2x128xf32>
    %385 = vector.broadcast %14 : f32 to vector<2x128xf32>
    %386 = arith.mulf %331, %385 : vector<2x128xf32>
    %387 = arith.addf %384, %386 : vector<2x128xf32>
    %388 = vector.broadcast %15 : f32 to vector<2x128xf32>
    %389 = arith.mulf %333, %388 : vector<2x128xf32>
    %390 = arith.addf %387, %389 : vector<2x128xf32>
    %391 = vector.broadcast %16 : f32 to vector<2x128xf32>
    %392 = arith.mulf %335, %391 : vector<2x128xf32>
    %393 = arith.addf %390, %392 : vector<2x128xf32>
    %394 = vector.broadcast %17 : f32 to vector<2x128xf32>
    %395 = arith.mulf %337, %394 : vector<2x128xf32>
    %396 = arith.addf %393, %395 : vector<2x128xf32>
    %c0_72 = arith.constant 0 : index
    %c1_73 = arith.constant 1 : index
    %c0_74 = arith.constant 0 : index
    %c0_75 = arith.constant 0 : index
    %397 = vector.load %arg5[%c0_72, %c1_73, %c0_74, %c0_75] : memref<1x32x2x128xf32, #tpu.memory_space<vmem>>, vector<1x1x2x128xf32>
    %398 = vector.shape_cast %397 : vector<1x1x2x128xf32> to vector<2x128xf32>
    %399 = vector.shape_cast %396 : vector<2x128xf32> to vector<1x1x2x128xf32>
    tpu.vector_store %arg5[%c0_72, %c1_73, %c0_74, %c0_75], %399 {strides = array<i32>} : memref<1x32x2x128xf32, #tpu.memory_space<vmem>>, vector<1x1x2x128xf32>,
    %400 = vector.broadcast %290 : f32 to vector<2x128xf32>
    %401 = vector.broadcast %18 : f32 to vector<2x128xf32>
    %402 = arith.mulf %321, %401 : vector<2x128xf32>
    %403 = arith.addf %400, %402 : vector<2x128xf32>
    %404 = vector.broadcast %19 : f32 to vector<2x128xf32>
    %405 = arith.mulf %323, %404 : vector<2x128xf32>
    %406 = arith.addf %403, %405 : vector<2x128xf32>
    %407 = vector.broadcast %20 : f32 to vector<2x128xf32>
    %408 = arith.mulf %325, %407 : vector<2x128xf32>
    %409 = arith.addf %406, %408 : vector<2x128xf32>
    %410 = vector.broadcast %21 : f32 to vector<2x128xf32>
    %411 = arith.mulf %327, %410 : vector<2x128xf32>
    %412 = arith.addf %409, %411 : vector<2x128xf32>
    %413 = vector.broadcast %22 : f32 to vector<2x128xf32>
    %414 = arith.mulf %329, %413 : vector<2x128xf32>
    %415 = arith.addf %412, %414 : vector<2x128xf32>
    %416 = vector.broadcast %23 : f32 to vector<2x128xf32>
    %417 = arith.mulf %331, %416 : vector<2x128xf32>
    %418 = arith.addf %415, %417 : vector<2x128xf32>
    %419 = vector.broadcast %24 : f32 to vector<2x128xf32>
    %420 = arith.mulf %333, %419 : vector<2x128xf32>
    %421 = arith.addf %418, %420 : vector<2x128xf32>
    %422 = vector.broadcast %25 : f32 to vector<2x128xf32>
    %423 = arith.mulf %335, %422 : vector<2x128xf32>
    %424 = arith.addf %421, %423 : vector<2x128xf32>
    %425 = vector.broadcast %26 : f32 to vector<2x128xf32>
    %426 = arith.mulf %337, %425 : vector<2x128xf32>
    %427 = arith.addf %424, %426 : vector<2x128xf32>
    %c0_76 = arith.constant 0 : index
    %c2_77 = arith.constant 2 : index
    %c0_78 = arith.constant 0 : index
    %c0_79 = arith.constant 0 : index
    %428 = vector.load %arg5[%c0_76, %c2_77, %c0_78, %c0_79] : memref<1x32x2x128xf32, #tpu.memory_space<vmem>>, vector<1x1x2x128xf32>
    %429 = vector.shape_cast %428 : vector<1x1x2x128xf32> to vector<2x128xf32>
    %430 = vector.shape_cast %427 : vector<2x128xf32> to vector<1x1x2x128xf32>
    tpu.vector_store %arg5[%c0_76, %c2_77, %c0_78, %c0_79], %430 {strides = array<i32>} : memref<1x32x2x128xf32, #tpu.memory_space<vmem>>, vector<1x1x2x128xf32>,
    %431 = vector.broadcast %291 : f32 to vector<2x128xf32>
    %432 = vector.broadcast %27 : f32 to vector<2x128xf32>
    %433 = arith.mulf %321, %432 : vector<2x128xf32>
    %434 = arith.addf %431, %433 : vector<2x128xf32>
    %435 = vector.broadcast %28 : f32 to vector<2x128xf32>
    %436 = arith.mulf %323, %435 : vector<2x128xf32>
    %437 = arith.addf %434, %436 : vector<2x128xf32>
    %438 = vector.broadcast %29 : f32 to vector<2x128xf32>
    %439 = arith.mulf %325, %438 : vector<2x128xf32>
    %440 = arith.addf %437, %439 : vector<2x128xf32>
    %441 = vector.broadcast %30 : f32 to vector<2x128xf32>
    %442 = arith.mulf %327, %441 : vector<2x128xf32>
    %443 = arith.addf %440, %442 : vector<2x128xf32>
    %444 = vector.broadcast %31 : f32 to vector<2x128xf32>
    %445 = arith.mulf %329, %444 : vector<2x128xf32>
    %446 = arith.addf %443, %445 : vector<2x128xf32>
    %447 = vector.broadcast %32 : f32 to vector<2x128xf32>
    %448 = arith.mulf %331, %447 : vector<2x128xf32>
    %449 = arith.addf %446, %448 : vector<2x128xf32>
    %450 = vector.broadcast %33 : f32 to vector<2x128xf32>
    %451 = arith.mulf %333, %450 : vector<2x128xf32>
    %452 = arith.addf %449, %451 : vector<2x128xf32>
    %453 = vector.broadcast %34 : f32 to vector<2x128xf32>
    %454 = arith.mulf %335, %453 : vector<2x128xf32>
    %455 = arith.addf %452, %454 : vector<2x128xf32>
    %456 = vector.broadcast %35 : f32 to vector<2x128xf32>
    %457 = arith.mulf %337, %456 : vector<2x128xf32>
    %458 = arith.addf %455, %457 : vector<2x128xf32>
    %c0_80 = arith.constant 0 : index
    %c3_81 = arith.constant 3 : index
    %c0_82 = arith.constant 0 : index
    %c0_83 = arith.constant 0 : index
    %459 = vector.load %arg5[%c0_80, %c3_81, %c0_82, %c0_83] : memref<1x32x2x128xf32, #tpu.memory_space<vmem>>, vector<1x1x2x128xf32>
    %460 = vector.shape_cast %459 : vector<1x1x2x128xf32> to vector<2x128xf32>
    %461 = vector.shape_cast %458 : vector<2x128xf32> to vector<1x1x2x128xf32>
    tpu.vector_store %arg5[%c0_80, %c3_81, %c0_82, %c0_83], %461 {strides = array<i32>} : memref<1x32x2x128xf32, #tpu.memory_space<vmem>>, vector<1x1x2x128xf32>,
    %462 = vector.broadcast %292 : f32 to vector<2x128xf32>
    %463 = vector.broadcast %36 : f32 to vector<2x128xf32>
    %464 = arith.mulf %321, %463 : vector<2x128xf32>
    %465 = arith.addf %462, %464 : vector<2x128xf32>
    %466 = vector.broadcast %37 : f32 to vector<2x128xf32>
    %467 = arith.mulf %323, %466 : vector<2x128xf32>
    %468 = arith.addf %465, %467 : vector<2x128xf32>
    %469 = vector.broadcast %38 : f32 to vector<2x128xf32>
    %470 = arith.mulf %325, %469 : vector<2x128xf32>
    %471 = arith.addf %468, %470 : vector<2x128xf32>
    %472 = vector.broadcast %39 : f32 to vector<2x128xf32>
    %473 = arith.mulf %327, %472 : vector<2x128xf32>
    %474 = arith.addf %471, %473 : vector<2x128xf32>
    %475 = vector.broadcast %40 : f32 to vector<2x128xf32>
    %476 = arith.mulf %329, %475 : vector<2x128xf32>
    %477 = arith.addf %474, %476 : vector<2x128xf32>
    %478 = vector.broadcast %41 : f32 to vector<2x128xf32>
    %479 = arith.mulf %331, %478 : vector<2x128xf32>
    %480 = arith.addf %477, %479 : vector<2x128xf32>
    %481 = vector.broadcast %42 : f32 to vector<2x128xf32>
    %482 = arith.mulf %333, %481 : vector<2x128xf32>
    %483 = arith.addf %480, %482 : vector<2x128xf32>
    %484 = vector.broadcast %43 : f32 to vector<2x128xf32>
    %485 = arith.mulf %335, %484 : vector<2x128xf32>
    %486 = arith.addf %483, %485 : vector<2x128xf32>
    %487 = vector.broadcast %44 : f32 to vector<2x128xf32>
    %488 = arith.mulf %337, %487 : vector<2x128xf32>
    %489 = arith.addf %486, %488 : vector<2x128xf32>
    %c0_84 = arith.constant 0 : index
    %c4_85 = arith.constant 4 : index
    %c0_86 = arith.constant 0 : index
    %c0_87 = arith.constant 0 : index
    %490 = vector.load %arg5[%c0_84, %c4_85, %c0_86, %c0_87] : memref<1x32x2x128xf32, #tpu.memory_space<vmem>>, vector<1x1x2x128xf32>
    %491 = vector.shape_cast %490 : vector<1x1x2x128xf32> to vector<2x128xf32>
    %492 = vector.shape_cast %489 : vector<2x128xf32> to vector<1x1x2x128xf32>
    tpu.vector_store %arg5[%c0_84, %c4_85, %c0_86, %c0_87], %492 {strides = array<i32>} : memref<1x32x2x128xf32, #tpu.memory_space<vmem>>, vector<1x1x2x128xf32>,
    %493 = vector.broadcast %293 : f32 to vector<2x128xf32>
    %494 = vector.broadcast %45 : f32 to vector<2x128xf32>
    %495 = arith.mulf %321, %494 : vector<2x128xf32>
    %496 = arith.addf %493, %495 : vector<2x128xf32>
    %497 = vector.broadcast %46 : f32 to vector<2x128xf32>
    %498 = arith.mulf %323, %497 : vector<2x128xf32>
    %499 = arith.addf %496, %498 : vector<2x128xf32>
    %500 = vector.broadcast %47 : f32 to vector<2x128xf32>
    %501 = arith.mulf %325, %500 : vector<2x128xf32>
    %502 = arith.addf %499, %501 : vector<2x128xf32>
    %503 = vector.broadcast %48 : f32 to vector<2x128xf32>
    %504 = arith.mulf %327, %503 : vector<2x128xf32>
    %505 = arith.addf %502, %504 : vector<2x128xf32>
    %506 = vector.broadcast %49 : f32 to vector<2x128xf32>
    %507 = arith.mulf %329, %506 : vector<2x128xf32>
    %508 = arith.addf %505, %507 : vector<2x128xf32>
    %509 = vector.broadcast %50 : f32 to vector<2x128xf32>
    %510 = arith.mulf %331, %509 : vector<2x128xf32>
    %511 = arith.addf %508, %510 : vector<2x128xf32>
    %512 = vector.broadcast %51 : f32 to vector<2x128xf32>
    %513 = arith.mulf %333, %512 : vector<2x128xf32>
    %514 = arith.addf %511, %513 : vector<2x128xf32>
    %515 = vector.broadcast %52 : f32 to vector<2x128xf32>
    %516 = arith.mulf %335, %515 : vector<2x128xf32>
    %517 = arith.addf %514, %516 : vector<2x128xf32>
    %518 = vector.broadcast %53 : f32 to vector<2x128xf32>
    %519 = arith.mulf %337, %518 : vector<2x128xf32>
    %520 = arith.addf %517, %519 : vector<2x128xf32>
    %c0_88 = arith.constant 0 : index
    %c5_89 = arith.constant 5 : index
    %c0_90 = arith.constant 0 : index
    %c0_91 = arith.constant 0 : index
    %521 = vector.load %arg5[%c0_88, %c5_89, %c0_90, %c0_91] : memref<1x32x2x128xf32, #tpu.memory_space<vmem>>, vector<1x1x2x128xf32>
    %522 = vector.shape_cast %521 : vector<1x1x2x128xf32> to vector<2x128xf32>
    %523 = vector.shape_cast %520 : vector<2x128xf32> to vector<1x1x2x128xf32>
    tpu.vector_store %arg5[%c0_88, %c5_89, %c0_90, %c0_91], %523 {strides = array<i32>} : memref<1x32x2x128xf32, #tpu.memory_space<vmem>>, vector<1x1x2x128xf32>,
    %524 = vector.broadcast %294 : f32 to vector<2x128xf32>
    %525 = vector.broadcast %54 : f32 to vector<2x128xf32>
    %526 = arith.mulf %321, %525 : vector<2x128xf32>
    %527 = arith.addf %524, %526 : vector<2x128xf32>
    %528 = vector.broadcast %55 : f32 to vector<2x128xf32>
    %529 = arith.mulf %323, %528 : vector<2x128xf32>
    %530 = arith.addf %527, %529 : vector<2x128xf32>
    %531 = vector.broadcast %56 : f32 to vector<2x128xf32>
    %532 = arith.mulf %325, %531 : vector<2x128xf32>
    %533 = arith.addf %530, %532 : vector<2x128xf32>
    %534 = vector.broadcast %57 : f32 to vector<2x128xf32>
    %535 = arith.mulf %327, %534 : vector<2x128xf32>
    %536 = arith.addf %533, %535 : vector<2x128xf32>
    %537 = vector.broadcast %58 : f32 to vector<2x128xf32>
    %538 = arith.mulf %329, %537 : vector<2x128xf32>
    %539 = arith.addf %536, %538 : vector<2x128xf32>
    %540 = vector.broadcast %59 : f32 to vector<2x128xf32>
    %541 = arith.mulf %331, %540 : vector<2x128xf32>
    %542 = arith.addf %539, %541 : vector<2x128xf32>
    %543 = vector.broadcast %60 : f32 to vector<2x128xf32>
    %544 = arith.mulf %333, %543 : vector<2x128xf32>
    %545 = arith.addf %542, %544 : vector<2x128xf32>
    %546 = vector.broadcast %61 : f32 to vector<2x128xf32>
    %547 = arith.mulf %335, %546 : vector<2x128xf32>
    %548 = arith.addf %545, %547 : vector<2x128xf32>
    %549 = vector.broadcast %62 : f32 to vector<2x128xf32>
    %550 = arith.mulf %337, %549 : vector<2x128xf32>
    %551 = arith.addf %548, %550 : vector<2x128xf32>
    %c0_92 = arith.constant 0 : index
    %c6_93 = arith.constant 6 : index
    %c0_94 = arith.constant 0 : index
    %c0_95 = arith.constant 0 : index
    %552 = vector.load %arg5[%c0_92, %c6_93, %c0_94, %c0_95] : memref<1x32x2x128xf32, #tpu.memory_space<vmem>>, vector<1x1x2x128xf32>
    %553 = vector.shape_cast %552 : vector<1x1x2x128xf32> to vector<2x128xf32>
    %554 = vector.shape_cast %551 : vector<2x128xf32> to vector<1x1x2x128xf32>
    tpu.vector_store %arg5[%c0_92, %c6_93, %c0_94, %c0_95], %554 {strides = array<i32>} : memref<1x32x2x128xf32, #tpu.memory_space<vmem>>, vector<1x1x2x128xf32>,
    %555 = vector.broadcast %295 : f32 to vector<2x128xf32>
    %556 = vector.broadcast %63 : f32 to vector<2x128xf32>
    %557 = arith.mulf %321, %556 : vector<2x128xf32>
    %558 = arith.addf %555, %557 : vector<2x128xf32>
    %559 = vector.broadcast %64 : f32 to vector<2x128xf32>
    %560 = arith.mulf %323, %559 : vector<2x128xf32>
    %561 = arith.addf %558, %560 : vector<2x128xf32>
    %562 = vector.broadcast %65 : f32 to vector<2x128xf32>
    %563 = arith.mulf %325, %562 : vector<2x128xf32>
    %564 = arith.addf %561, %563 : vector<2x128xf32>
    %565 = vector.broadcast %66 : f32 to vector<2x128xf32>
    %566 = arith.mulf %327, %565 : vector<2x128xf32>
    %567 = arith.addf %564, %566 : vector<2x128xf32>
    %568 = vector.broadcast %67 : f32 to vector<2x128xf32>
    %569 = arith.mulf %329, %568 : vector<2x128xf32>
    %570 = arith.addf %567, %569 : vector<2x128xf32>
    %571 = vector.broadcast %68 : f32 to vector<2x128xf32>
    %572 = arith.mulf %331, %571 : vector<2x128xf32>
    %573 = arith.addf %570, %572 : vector<2x128xf32>
    %574 = vector.broadcast %69 : f32 to vector<2x128xf32>
    %575 = arith.mulf %333, %574 : vector<2x128xf32>
    %576 = arith.addf %573, %575 : vector<2x128xf32>
    %577 = vector.broadcast %70 : f32 to vector<2x128xf32>
    %578 = arith.mulf %335, %577 : vector<2x128xf32>
    %579 = arith.addf %576, %578 : vector<2x128xf32>
    %580 = vector.broadcast %71 : f32 to vector<2x128xf32>
    %581 = arith.mulf %337, %580 : vector<2x128xf32>
    %582 = arith.addf %579, %581 : vector<2x128xf32>
    %c0_96 = arith.constant 0 : index
    %c7_97 = arith.constant 7 : index
    %c0_98 = arith.constant 0 : index
    %c0_99 = arith.constant 0 : index
    %583 = vector.load %arg5[%c0_96, %c7_97, %c0_98, %c0_99] : memref<1x32x2x128xf32, #tpu.memory_space<vmem>>, vector<1x1x2x128xf32>
    %584 = vector.shape_cast %583 : vector<1x1x2x128xf32> to vector<2x128xf32>
    %585 = vector.shape_cast %582 : vector<2x128xf32> to vector<1x1x2x128xf32>
    tpu.vector_store %arg5[%c0_96, %c7_97, %c0_98, %c0_99], %585 {strides = array<i32>} : memref<1x32x2x128xf32, #tpu.memory_space<vmem>>, vector<1x1x2x128xf32>,
    %586 = vector.broadcast %296 : f32 to vector<2x128xf32>
    %587 = vector.broadcast %72 : f32 to vector<2x128xf32>
    %588 = arith.mulf %321, %587 : vector<2x128xf32>
    %589 = arith.addf %586, %588 : vector<2x128xf32>
    %590 = vector.broadcast %73 : f32 to vector<2x128xf32>
    %591 = arith.mulf %323, %590 : vector<2x128xf32>
    %592 = arith.addf %589, %591 : vector<2x128xf32>
    %593 = vector.broadcast %74 : f32 to vector<2x128xf32>
    %594 = arith.mulf %325, %593 : vector<2x128xf32>
    %595 = arith.addf %592, %594 : vector<2x128xf32>
    %596 = vector.broadcast %75 : f32 to vector<2x128xf32>
    %597 = arith.mulf %327, %596 : vector<2x128xf32>
    %598 = arith.addf %595, %597 : vector<2x128xf32>
    %599 = vector.broadcast %76 : f32 to vector<2x128xf32>
    %600 = arith.mulf %329, %599 : vector<2x128xf32>
    %601 = arith.addf %598, %600 : vector<2x128xf32>
    %602 = vector.broadcast %77 : f32 to vector<2x128xf32>
    %603 = arith.mulf %331, %602 : vector<2x128xf32>
    %604 = arith.addf %601, %603 : vector<2x128xf32>
    %605 = vector.broadcast %78 : f32 to vector<2x128xf32>
    %606 = arith.mulf %333, %605 : vector<2x128xf32>
    %607 = arith.addf %604, %606 : vector<2x128xf32>
    %608 = vector.broadcast %79 : f32 to vector<2x128xf32>
    %609 = arith.mulf %335, %608 : vector<2x128xf32>
    %610 = arith.addf %607, %609 : vector<2x128xf32>
    %611 = vector.broadcast %80 : f32 to vector<2x128xf32>
    %612 = arith.mulf %337, %611 : vector<2x128xf32>
    %613 = arith.addf %610, %612 : vector<2x128xf32>
    %c0_100 = arith.constant 0 : index
    %c8_101 = arith.constant 8 : index
    %c0_102 = arith.constant 0 : index
    %c0_103 = arith.constant 0 : index
    %614 = vector.load %arg5[%c0_100, %c8_101, %c0_102, %c0_103] : memref<1x32x2x128xf32, #tpu.memory_space<vmem>>, vector<1x1x2x128xf32>
    %615 = vector.shape_cast %614 : vector<1x1x2x128xf32> to vector<2x128xf32>
    %616 = vector.shape_cast %613 : vector<2x128xf32> to vector<1x1x2x128xf32>
    tpu.vector_store %arg5[%c0_100, %c8_101, %c0_102, %c0_103], %616 {strides = array<i32>} : memref<1x32x2x128xf32, #tpu.memory_space<vmem>>, vector<1x1x2x128xf32>,
    %617 = vector.broadcast %297 : f32 to vector<2x128xf32>
    %618 = vector.broadcast %81 : f32 to vector<2x128xf32>
    %619 = arith.mulf %321, %618 : vector<2x128xf32>
    %620 = arith.addf %617, %619 : vector<2x128xf32>
    %621 = vector.broadcast %82 : f32 to vector<2x128xf32>
    %622 = arith.mulf %323, %621 : vector<2x128xf32>
    %623 = arith.addf %620, %622 : vector<2x128xf32>
    %624 = vector.broadcast %83 : f32 to vector<2x128xf32>
    %625 = arith.mulf %325, %624 : vector<2x128xf32>
    %626 = arith.addf %623, %625 : vector<2x128xf32>
    %627 = vector.broadcast %84 : f32 to vector<2x128xf32>
    %628 = arith.mulf %327, %627 : vector<2x128xf32>
    %629 = arith.addf %626, %628 : vector<2x128xf32>
    %630 = vector.broadcast %85 : f32 to vector<2x128xf32>
    %631 = arith.mulf %329, %630 : vector<2x128xf32>
    %632 = arith.addf %629, %631 : vector<2x128xf32>
    %633 = vector.broadcast %86 : f32 to vector<2x128xf32>
    %634 = arith.mulf %331, %633 : vector<2x128xf32>
    %635 = arith.addf %632, %634 : vector<2x128xf32>
    %636 = vector.broadcast %87 : f32 to vector<2x128xf32>
    %637 = arith.mulf %333, %636 : vector<2x128xf32>
    %638 = arith.addf %635, %637 : vector<2x128xf32>
    %639 = vector.broadcast %88 : f32 to vector<2x128xf32>
    %640 = arith.mulf %335, %639 : vector<2x128xf32>
    %641 = arith.addf %638, %640 : vector<2x128xf32>
    %642 = vector.broadcast %89 : f32 to vector<2x128xf32>
    %643 = arith.mulf %337, %642 : vector<2x128xf32>
    %644 = arith.addf %641, %643 : vector<2x128xf32>
    %c0_104 = arith.constant 0 : index
    %c9_105 = arith.constant 9 : index
    %c0_106 = arith.constant 0 : index
    %c0_107 = arith.constant 0 : index
    %645 = vector.load %arg5[%c0_104, %c9_105, %c0_106, %c0_107] : memref<1x32x2x128xf32, #tpu.memory_space<vmem>>, vector<1x1x2x128xf32>
    %646 = vector.shape_cast %645 : vector<1x1x2x128xf32> to vector<2x128xf32>
    %647 = vector.shape_cast %644 : vector<2x128xf32> to vector<1x1x2x128xf32>
    tpu.vector_store %arg5[%c0_104, %c9_105, %c0_106, %c0_107], %647 {strides = array<i32>} : memref<1x32x2x128xf32, #tpu.memory_space<vmem>>, vector<1x1x2x128xf32>,
    %648 = vector.broadcast %298 : f32 to vector<2x128xf32>
    %649 = vector.broadcast %90 : f32 to vector<2x128xf32>
    %650 = arith.mulf %321, %649 : vector<2x128xf32>
    %651 = arith.addf %648, %650 : vector<2x128xf32>
    %652 = vector.broadcast %91 : f32 to vector<2x128xf32>
    %653 = arith.mulf %323, %652 : vector<2x128xf32>
    %654 = arith.addf %651, %653 : vector<2x128xf32>
    %655 = vector.broadcast %92 : f32 to vector<2x128xf32>
    %656 = arith.mulf %325, %655 : vector<2x128xf32>
    %657 = arith.addf %654, %656 : vector<2x128xf32>
    %658 = vector.broadcast %93 : f32 to vector<2x128xf32>
    %659 = arith.mulf %327, %658 : vector<2x128xf32>
    %660 = arith.addf %657, %659 : vector<2x128xf32>
    %661 = vector.broadcast %94 : f32 to vector<2x128xf32>
    %662 = arith.mulf %329, %661 : vector<2x128xf32>
    %663 = arith.addf %660, %662 : vector<2x128xf32>
    %664 = vector.broadcast %95 : f32 to vector<2x128xf32>
    %665 = arith.mulf %331, %664 : vector<2x128xf32>
    %666 = arith.addf %663, %665 : vector<2x128xf32>
    %667 = vector.broadcast %96 : f32 to vector<2x128xf32>
    %668 = arith.mulf %333, %667 : vector<2x128xf32>
    %669 = arith.addf %666, %668 : vector<2x128xf32>
    %670 = vector.broadcast %97 : f32 to vector<2x128xf32>
    %671 = arith.mulf %335, %670 : vector<2x128xf32>
    %672 = arith.addf %669, %671 : vector<2x128xf32>
    %673 = vector.broadcast %98 : f32 to vector<2x128xf32>
    %674 = arith.mulf %337, %673 : vector<2x128xf32>
    %675 = arith.addf %672, %674 : vector<2x128xf32>
    %c0_108 = arith.constant 0 : index
    %c10_109 = arith.constant 10 : index
    %c0_110 = arith.constant 0 : index
    %c0_111 = arith.constant 0 : index
    %676 = vector.load %arg5[%c0_108, %c10_109, %c0_110, %c0_111] : memref<1x32x2x128xf32, #tpu.memory_space<vmem>>, vector<1x1x2x128xf32>
    %677 = vector.shape_cast %676 : vector<1x1x2x128xf32> to vector<2x128xf32>
    %678 = vector.shape_cast %675 : vector<2x128xf32> to vector<1x1x2x128xf32>
    tpu.vector_store %arg5[%c0_108, %c10_109, %c0_110, %c0_111], %678 {strides = array<i32>} : memref<1x32x2x128xf32, #tpu.memory_space<vmem>>, vector<1x1x2x128xf32>,
    %679 = vector.broadcast %299 : f32 to vector<2x128xf32>
    %680 = vector.broadcast %99 : f32 to vector<2x128xf32>
    %681 = arith.mulf %321, %680 : vector<2x128xf32>
    %682 = arith.addf %679, %681 : vector<2x128xf32>
    %683 = vector.broadcast %100 : f32 to vector<2x128xf32>
    %684 = arith.mulf %323, %683 : vector<2x128xf32>
    %685 = arith.addf %682, %684 : vector<2x128xf32>
    %686 = vector.broadcast %101 : f32 to vector<2x128xf32>
    %687 = arith.mulf %325, %686 : vector<2x128xf32>
    %688 = arith.addf %685, %687 : vector<2x128xf32>
    %689 = vector.broadcast %102 : f32 to vector<2x128xf32>
    %690 = arith.mulf %327, %689 : vector<2x128xf32>
    %691 = arith.addf %688, %690 : vector<2x128xf32>
    %692 = vector.broadcast %103 : f32 to vector<2x128xf32>
    %693 = arith.mulf %329, %692 : vector<2x128xf32>
    %694 = arith.addf %691, %693 : vector<2x128xf32>
    %695 = vector.broadcast %104 : f32 to vector<2x128xf32>
    %696 = arith.mulf %331, %695 : vector<2x128xf32>
    %697 = arith.addf %694, %696 : vector<2x128xf32>
    %698 = vector.broadcast %105 : f32 to vector<2x128xf32>
    %699 = arith.mulf %333, %698 : vector<2x128xf32>
    %700 = arith.addf %697, %699 : vector<2x128xf32>
    %701 = vector.broadcast %106 : f32 to vector<2x128xf32>
    %702 = arith.mulf %335, %701 : vector<2x128xf32>
    %703 = arith.addf %700, %702 : vector<2x128xf32>
    %704 = vector.broadcast %107 : f32 to vector<2x128xf32>
    %705 = arith.mulf %337, %704 : vector<2x128xf32>
    %706 = arith.addf %703, %705 : vector<2x128xf32>
    %c0_112 = arith.constant 0 : index
    %c11_113 = arith.constant 11 : index
    %c0_114 = arith.constant 0 : index
    %c0_115 = arith.constant 0 : index
    %707 = vector.load %arg5[%c0_112, %c11_113, %c0_114, %c0_115] : memref<1x32x2x128xf32, #tpu.memory_space<vmem>>, vector<1x1x2x128xf32>
    %708 = vector.shape_cast %707 : vector<1x1x2x128xf32> to vector<2x128xf32>
    %709 = vector.shape_cast %706 : vector<2x128xf32> to vector<1x1x2x128xf32>
    tpu.vector_store %arg5[%c0_112, %c11_113, %c0_114, %c0_115], %709 {strides = array<i32>} : memref<1x32x2x128xf32, #tpu.memory_space<vmem>>, vector<1x1x2x128xf32>,
    %710 = vector.broadcast %300 : f32 to vector<2x128xf32>
    %711 = vector.broadcast %108 : f32 to vector<2x128xf32>
    %712 = arith.mulf %321, %711 : vector<2x128xf32>
    %713 = arith.addf %710, %712 : vector<2x128xf32>
    %714 = vector.broadcast %109 : f32 to vector<2x128xf32>
    %715 = arith.mulf %323, %714 : vector<2x128xf32>
    %716 = arith.addf %713, %715 : vector<2x128xf32>
    %717 = vector.broadcast %110 : f32 to vector<2x128xf32>
    %718 = arith.mulf %325, %717 : vector<2x128xf32>
    %719 = arith.addf %716, %718 : vector<2x128xf32>
    %720 = vector.broadcast %111 : f32 to vector<2x128xf32>
    %721 = arith.mulf %327, %720 : vector<2x128xf32>
    %722 = arith.addf %719, %721 : vector<2x128xf32>
    %723 = vector.broadcast %112 : f32 to vector<2x128xf32>
    %724 = arith.mulf %329, %723 : vector<2x128xf32>
    %725 = arith.addf %722, %724 : vector<2x128xf32>
    %726 = vector.broadcast %113 : f32 to vector<2x128xf32>
    %727 = arith.mulf %331, %726 : vector<2x128xf32>
    %728 = arith.addf %725, %727 : vector<2x128xf32>
    %729 = vector.broadcast %114 : f32 to vector<2x128xf32>
    %730 = arith.mulf %333, %729 : vector<2x128xf32>
    %731 = arith.addf %728, %730 : vector<2x128xf32>
    %732 = vector.broadcast %115 : f32 to vector<2x128xf32>
    %733 = arith.mulf %335, %732 : vector<2x128xf32>
    %734 = arith.addf %731, %733 : vector<2x128xf32>
    %735 = vector.broadcast %116 : f32 to vector<2x128xf32>
    %736 = arith.mulf %337, %735 : vector<2x128xf32>
    %737 = arith.addf %734, %736 : vector<2x128xf32>
    %c0_116 = arith.constant 0 : index
    %c12_117 = arith.constant 12 : index
    %c0_118 = arith.constant 0 : index
    %c0_119 = arith.constant 0 : index
    %738 = vector.load %arg5[%c0_116, %c12_117, %c0_118, %c0_119] : memref<1x32x2x128xf32, #tpu.memory_space<vmem>>, vector<1x1x2x128xf32>
    %739 = vector.shape_cast %738 : vector<1x1x2x128xf32> to vector<2x128xf32>
    %740 = vector.shape_cast %737 : vector<2x128xf32> to vector<1x1x2x128xf32>
    tpu.vector_store %arg5[%c0_116, %c12_117, %c0_118, %c0_119], %740 {strides = array<i32>} : memref<1x32x2x128xf32, #tpu.memory_space<vmem>>, vector<1x1x2x128xf32>,
    %741 = vector.broadcast %301 : f32 to vector<2x128xf32>
    %742 = vector.broadcast %117 : f32 to vector<2x128xf32>
    %743 = arith.mulf %321, %742 : vector<2x128xf32>
    %744 = arith.addf %741, %743 : vector<2x128xf32>
    %745 = vector.broadcast %118 : f32 to vector<2x128xf32>
    %746 = arith.mulf %323, %745 : vector<2x128xf32>
    %747 = arith.addf %744, %746 : vector<2x128xf32>
    %748 = vector.broadcast %119 : f32 to vector<2x128xf32>
    %749 = arith.mulf %325, %748 : vector<2x128xf32>
    %750 = arith.addf %747, %749 : vector<2x128xf32>
    %751 = vector.broadcast %120 : f32 to vector<2x128xf32>
    %752 = arith.mulf %327, %751 : vector<2x128xf32>
    %753 = arith.addf %750, %752 : vector<2x128xf32>
    %754 = vector.broadcast %121 : f32 to vector<2x128xf32>
    %755 = arith.mulf %329, %754 : vector<2x128xf32>
    %756 = arith.addf %753, %755 : vector<2x128xf32>
    %757 = vector.broadcast %122 : f32 to vector<2x128xf32>
    %758 = arith.mulf %331, %757 : vector<2x128xf32>
    %759 = arith.addf %756, %758 : vector<2x128xf32>
    %760 = vector.broadcast %123 : f32 to vector<2x128xf32>
    %761 = arith.mulf %333, %760 : vector<2x128xf32>
    %762 = arith.addf %759, %761 : vector<2x128xf32>
    %763 = vector.broadcast %124 : f32 to vector<2x128xf32>
    %764 = arith.mulf %335, %763 : vector<2x128xf32>
    %765 = arith.addf %762, %764 : vector<2x128xf32>
    %766 = vector.broadcast %125 : f32 to vector<2x128xf32>
    %767 = arith.mulf %337, %766 : vector<2x128xf32>
    %768 = arith.addf %765, %767 : vector<2x128xf32>
    %c0_120 = arith.constant 0 : index
    %c13_121 = arith.constant 13 : index
    %c0_122 = arith.constant 0 : index
    %c0_123 = arith.constant 0 : index
    %769 = vector.load %arg5[%c0_120, %c13_121, %c0_122, %c0_123] : memref<1x32x2x128xf32, #tpu.memory_space<vmem>>, vector<1x1x2x128xf32>
    %770 = vector.shape_cast %769 : vector<1x1x2x128xf32> to vector<2x128xf32>
    %771 = vector.shape_cast %768 : vector<2x128xf32> to vector<1x1x2x128xf32>
    tpu.vector_store %arg5[%c0_120, %c13_121, %c0_122, %c0_123], %771 {strides = array<i32>} : memref<1x32x2x128xf32, #tpu.memory_space<vmem>>, vector<1x1x2x128xf32>,
    %772 = vector.broadcast %302 : f32 to vector<2x128xf32>
    %773 = vector.broadcast %126 : f32 to vector<2x128xf32>
    %774 = arith.mulf %321, %773 : vector<2x128xf32>
    %775 = arith.addf %772, %774 : vector<2x128xf32>
    %776 = vector.broadcast %127 : f32 to vector<2x128xf32>
    %777 = arith.mulf %323, %776 : vector<2x128xf32>
    %778 = arith.addf %775, %777 : vector<2x128xf32>
    %779 = vector.broadcast %128 : f32 to vector<2x128xf32>
    %780 = arith.mulf %325, %779 : vector<2x128xf32>
    %781 = arith.addf %778, %780 : vector<2x128xf32>
    %782 = vector.broadcast %129 : f32 to vector<2x128xf32>
    %783 = arith.mulf %327, %782 : vector<2x128xf32>
    %784 = arith.addf %781, %783 : vector<2x128xf32>
    %785 = vector.broadcast %130 : f32 to vector<2x128xf32>
    %786 = arith.mulf %329, %785 : vector<2x128xf32>
    %787 = arith.addf %784, %786 : vector<2x128xf32>
    %788 = vector.broadcast %131 : f32 to vector<2x128xf32>
    %789 = arith.mulf %331, %788 : vector<2x128xf32>
    %790 = arith.addf %787, %789 : vector<2x128xf32>
    %791 = vector.broadcast %132 : f32 to vector<2x128xf32>
    %792 = arith.mulf %333, %791 : vector<2x128xf32>
    %793 = arith.addf %790, %792 : vector<2x128xf32>
    %794 = vector.broadcast %133 : f32 to vector<2x128xf32>
    %795 = arith.mulf %335, %794 : vector<2x128xf32>
    %796 = arith.addf %793, %795 : vector<2x128xf32>
    %797 = vector.broadcast %134 : f32 to vector<2x128xf32>
    %798 = arith.mulf %337, %797 : vector<2x128xf32>
    %799 = arith.addf %796, %798 : vector<2x128xf32>
    %c0_124 = arith.constant 0 : index
    %c14_125 = arith.constant 14 : index
    %c0_126 = arith.constant 0 : index
    %c0_127 = arith.constant 0 : index
    %800 = vector.load %arg5[%c0_124, %c14_125, %c0_126, %c0_127] : memref<1x32x2x128xf32, #tpu.memory_space<vmem>>, vector<1x1x2x128xf32>
    %801 = vector.shape_cast %800 : vector<1x1x2x128xf32> to vector<2x128xf32>
    %802 = vector.shape_cast %799 : vector<2x128xf32> to vector<1x1x2x128xf32>
    tpu.vector_store %arg5[%c0_124, %c14_125, %c0_126, %c0_127], %802 {strides = array<i32>} : memref<1x32x2x128xf32, #tpu.memory_space<vmem>>, vector<1x1x2x128xf32>,
    %803 = vector.broadcast %303 : f32 to vector<2x128xf32>
    %804 = vector.broadcast %135 : f32 to vector<2x128xf32>
    %805 = arith.mulf %321, %804 : vector<2x128xf32>
    %806 = arith.addf %803, %805 : vector<2x128xf32>
    %807 = vector.broadcast %136 : f32 to vector<2x128xf32>
    %808 = arith.mulf %323, %807 : vector<2x128xf32>
    %809 = arith.addf %806, %808 : vector<2x128xf32>
    %810 = vector.broadcast %137 : f32 to vector<2x128xf32>
    %811 = arith.mulf %325, %810 : vector<2x128xf32>
    %812 = arith.addf %809, %811 : vector<2x128xf32>
    %813 = vector.broadcast %138 : f32 to vector<2x128xf32>
    %814 = arith.mulf %327, %813 : vector<2x128xf32>
    %815 = arith.addf %812, %814 : vector<2x128xf32>
    %816 = vector.broadcast %139 : f32 to vector<2x128xf32>
    %817 = arith.mulf %329, %816 : vector<2x128xf32>
    %818 = arith.addf %815, %817 : vector<2x128xf32>
    %819 = vector.broadcast %140 : f32 to vector<2x128xf32>
    %820 = arith.mulf %331, %819 : vector<2x128xf32>
    %821 = arith.addf %818, %820 : vector<2x128xf32>
    %822 = vector.broadcast %141 : f32 to vector<2x128xf32>
    %823 = arith.mulf %333, %822 : vector<2x128xf32>
    %824 = arith.addf %821, %823 : vector<2x128xf32>
    %825 = vector.broadcast %142 : f32 to vector<2x128xf32>
    %826 = arith.mulf %335, %825 : vector<2x128xf32>
    %827 = arith.addf %824, %826 : vector<2x128xf32>
    %828 = vector.broadcast %143 : f32 to vector<2x128xf32>
    %829 = arith.mulf %337, %828 : vector<2x128xf32>
    %830 = arith.addf %827, %829 : vector<2x128xf32>
    %c0_128 = arith.constant 0 : index
    %c15_129 = arith.constant 15 : index
    %c0_130 = arith.constant 0 : index
    %c0_131 = arith.constant 0 : index
    %831 = vector.load %arg5[%c0_128, %c15_129, %c0_130, %c0_131] : memref<1x32x2x128xf32, #tpu.memory_space<vmem>>, vector<1x1x2x128xf32>
    %832 = vector.shape_cast %831 : vector<1x1x2x128xf32> to vector<2x128xf32>
    %833 = vector.shape_cast %830 : vector<2x128xf32> to vector<1x1x2x128xf32>
    tpu.vector_store %arg5[%c0_128, %c15_129, %c0_130, %c0_131], %833 {strides = array<i32>} : memref<1x32x2x128xf32, #tpu.memory_space<vmem>>, vector<1x1x2x128xf32>,
    %834 = vector.broadcast %304 : f32 to vector<2x128xf32>
    %835 = vector.broadcast %144 : f32 to vector<2x128xf32>
    %836 = arith.mulf %321, %835 : vector<2x128xf32>
    %837 = arith.addf %834, %836 : vector<2x128xf32>
    %838 = vector.broadcast %145 : f32 to vector<2x128xf32>
    %839 = arith.mulf %323, %838 : vector<2x128xf32>
    %840 = arith.addf %837, %839 : vector<2x128xf32>
    %841 = vector.broadcast %146 : f32 to vector<2x128xf32>
    %842 = arith.mulf %325, %841 : vector<2x128xf32>
    %843 = arith.addf %840, %842 : vector<2x128xf32>
    %844 = vector.broadcast %147 : f32 to vector<2x128xf32>
    %845 = arith.mulf %327, %844 : vector<2x128xf32>
    %846 = arith.addf %843, %845 : vector<2x128xf32>
    %847 = vector.broadcast %148 : f32 to vector<2x128xf32>
    %848 = arith.mulf %329, %847 : vector<2x128xf32>
    %849 = arith.addf %846, %848 : vector<2x128xf32>
    %850 = vector.broadcast %149 : f32 to vector<2x128xf32>
    %851 = arith.mulf %331, %850 : vector<2x128xf32>
    %852 = arith.addf %849, %851 : vector<2x128xf32>
    %853 = vector.broadcast %150 : f32 to vector<2x128xf32>
    %854 = arith.mulf %333, %853 : vector<2x128xf32>
    %855 = arith.addf %852, %854 : vector<2x128xf32>
    %856 = vector.broadcast %151 : f32 to vector<2x128xf32>
    %857 = arith.mulf %335, %856 : vector<2x128xf32>
    %858 = arith.addf %855, %857 : vector<2x128xf32>
    %859 = vector.broadcast %152 : f32 to vector<2x128xf32>
    %860 = arith.mulf %337, %859 : vector<2x128xf32>
    %861 = arith.addf %858, %860 : vector<2x128xf32>
    %c0_132 = arith.constant 0 : index
    %c16_133 = arith.constant 16 : index
    %c0_134 = arith.constant 0 : index
    %c0_135 = arith.constant 0 : index
    %862 = vector.load %arg5[%c0_132, %c16_133, %c0_134, %c0_135] : memref<1x32x2x128xf32, #tpu.memory_space<vmem>>, vector<1x1x2x128xf32>
    %863 = vector.shape_cast %862 : vector<1x1x2x128xf32> to vector<2x128xf32>
    %864 = vector.shape_cast %861 : vector<2x128xf32> to vector<1x1x2x128xf32>
    tpu.vector_store %arg5[%c0_132, %c16_133, %c0_134, %c0_135], %864 {strides = array<i32>} : memref<1x32x2x128xf32, #tpu.memory_space<vmem>>, vector<1x1x2x128xf32>,
    %865 = vector.broadcast %305 : f32 to vector<2x128xf32>
    %866 = vector.broadcast %153 : f32 to vector<2x128xf32>
    %867 = arith.mulf %321, %866 : vector<2x128xf32>
    %868 = arith.addf %865, %867 : vector<2x128xf32>
    %869 = vector.broadcast %154 : f32 to vector<2x128xf32>
    %870 = arith.mulf %323, %869 : vector<2x128xf32>
    %871 = arith.addf %868, %870 : vector<2x128xf32>
    %872 = vector.broadcast %155 : f32 to vector<2x128xf32>
    %873 = arith.mulf %325, %872 : vector<2x128xf32>
    %874 = arith.addf %871, %873 : vector<2x128xf32>
    %875 = vector.broadcast %156 : f32 to vector<2x128xf32>
    %876 = arith.mulf %327, %875 : vector<2x128xf32>
    %877 = arith.addf %874, %876 : vector<2x128xf32>
    %878 = vector.broadcast %157 : f32 to vector<2x128xf32>
    %879 = arith.mulf %329, %878 : vector<2x128xf32>
    %880 = arith.addf %877, %879 : vector<2x128xf32>
    %881 = vector.broadcast %158 : f32 to vector<2x128xf32>
    %882 = arith.mulf %331, %881 : vector<2x128xf32>
    %883 = arith.addf %880, %882 : vector<2x128xf32>
    %884 = vector.broadcast %159 : f32 to vector<2x128xf32>
    %885 = arith.mulf %333, %884 : vector<2x128xf32>
    %886 = arith.addf %883, %885 : vector<2x128xf32>
    %887 = vector.broadcast %160 : f32 to vector<2x128xf32>
    %888 = arith.mulf %335, %887 : vector<2x128xf32>
    %889 = arith.addf %886, %888 : vector<2x128xf32>
    %890 = vector.broadcast %161 : f32 to vector<2x128xf32>
    %891 = arith.mulf %337, %890 : vector<2x128xf32>
    %892 = arith.addf %889, %891 : vector<2x128xf32>
    %c0_136 = arith.constant 0 : index
    %c17_137 = arith.constant 17 : index
    %c0_138 = arith.constant 0 : index
    %c0_139 = arith.constant 0 : index
    %893 = vector.load %arg5[%c0_136, %c17_137, %c0_138, %c0_139] : memref<1x32x2x128xf32, #tpu.memory_space<vmem>>, vector<1x1x2x128xf32>
    %894 = vector.shape_cast %893 : vector<1x1x2x128xf32> to vector<2x128xf32>
    %895 = vector.shape_cast %892 : vector<2x128xf32> to vector<1x1x2x128xf32>
    tpu.vector_store %arg5[%c0_136, %c17_137, %c0_138, %c0_139], %895 {strides = array<i32>} : memref<1x32x2x128xf32, #tpu.memory_space<vmem>>, vector<1x1x2x128xf32>,
    %896 = vector.broadcast %306 : f32 to vector<2x128xf32>
    %897 = vector.broadcast %162 : f32 to vector<2x128xf32>
    %898 = arith.mulf %321, %897 : vector<2x128xf32>
    %899 = arith.addf %896, %898 : vector<2x128xf32>
    %900 = vector.broadcast %163 : f32 to vector<2x128xf32>
    %901 = arith.mulf %323, %900 : vector<2x128xf32>
    %902 = arith.addf %899, %901 : vector<2x128xf32>
    %903 = vector.broadcast %164 : f32 to vector<2x128xf32>
    %904 = arith.mulf %325, %903 : vector<2x128xf32>
    %905 = arith.addf %902, %904 : vector<2x128xf32>
    %906 = vector.broadcast %165 : f32 to vector<2x128xf32>
    %907 = arith.mulf %327, %906 : vector<2x128xf32>
    %908 = arith.addf %905, %907 : vector<2x128xf32>
    %909 = vector.broadcast %166 : f32 to vector<2x128xf32>
    %910 = arith.mulf %329, %909 : vector<2x128xf32>
    %911 = arith.addf %908, %910 : vector<2x128xf32>
    %912 = vector.broadcast %167 : f32 to vector<2x128xf32>
    %913 = arith.mulf %331, %912 : vector<2x128xf32>
    %914 = arith.addf %911, %913 : vector<2x128xf32>
    %915 = vector.broadcast %168 : f32 to vector<2x128xf32>
    %916 = arith.mulf %333, %915 : vector<2x128xf32>
    %917 = arith.addf %914, %916 : vector<2x128xf32>
    %918 = vector.broadcast %169 : f32 to vector<2x128xf32>
    %919 = arith.mulf %335, %918 : vector<2x128xf32>
    %920 = arith.addf %917, %919 : vector<2x128xf32>
    %921 = vector.broadcast %170 : f32 to vector<2x128xf32>
    %922 = arith.mulf %337, %921 : vector<2x128xf32>
    %923 = arith.addf %920, %922 : vector<2x128xf32>
    %c0_140 = arith.constant 0 : index
    %c18_141 = arith.constant 18 : index
    %c0_142 = arith.constant 0 : index
    %c0_143 = arith.constant 0 : index
    %924 = vector.load %arg5[%c0_140, %c18_141, %c0_142, %c0_143] : memref<1x32x2x128xf32, #tpu.memory_space<vmem>>, vector<1x1x2x128xf32>
    %925 = vector.shape_cast %924 : vector<1x1x2x128xf32> to vector<2x128xf32>
    %926 = vector.shape_cast %923 : vector<2x128xf32> to vector<1x1x2x128xf32>
    tpu.vector_store %arg5[%c0_140, %c18_141, %c0_142, %c0_143], %926 {strides = array<i32>} : memref<1x32x2x128xf32, #tpu.memory_space<vmem>>, vector<1x1x2x128xf32>,
    %927 = vector.broadcast %307 : f32 to vector<2x128xf32>
    %928 = vector.broadcast %171 : f32 to vector<2x128xf32>
    %929 = arith.mulf %321, %928 : vector<2x128xf32>
    %930 = arith.addf %927, %929 : vector<2x128xf32>
    %931 = vector.broadcast %172 : f32 to vector<2x128xf32>
    %932 = arith.mulf %323, %931 : vector<2x128xf32>
    %933 = arith.addf %930, %932 : vector<2x128xf32>
    %934 = vector.broadcast %173 : f32 to vector<2x128xf32>
    %935 = arith.mulf %325, %934 : vector<2x128xf32>
    %936 = arith.addf %933, %935 : vector<2x128xf32>
    %937 = vector.broadcast %174 : f32 to vector<2x128xf32>
    %938 = arith.mulf %327, %937 : vector<2x128xf32>
    %939 = arith.addf %936, %938 : vector<2x128xf32>
    %940 = vector.broadcast %175 : f32 to vector<2x128xf32>
    %941 = arith.mulf %329, %940 : vector<2x128xf32>
    %942 = arith.addf %939, %941 : vector<2x128xf32>
    %943 = vector.broadcast %176 : f32 to vector<2x128xf32>
    %944 = arith.mulf %331, %943 : vector<2x128xf32>
    %945 = arith.addf %942, %944 : vector<2x128xf32>
    %946 = vector.broadcast %177 : f32 to vector<2x128xf32>
    %947 = arith.mulf %333, %946 : vector<2x128xf32>
    %948 = arith.addf %945, %947 : vector<2x128xf32>
    %949 = vector.broadcast %178 : f32 to vector<2x128xf32>
    %950 = arith.mulf %335, %949 : vector<2x128xf32>
    %951 = arith.addf %948, %950 : vector<2x128xf32>
    %952 = vector.broadcast %179 : f32 to vector<2x128xf32>
    %953 = arith.mulf %337, %952 : vector<2x128xf32>
    %954 = arith.addf %951, %953 : vector<2x128xf32>
    %c0_144 = arith.constant 0 : index
    %c19_145 = arith.constant 19 : index
    %c0_146 = arith.constant 0 : index
    %c0_147 = arith.constant 0 : index
    %955 = vector.load %arg5[%c0_144, %c19_145, %c0_146, %c0_147] : memref<1x32x2x128xf32, #tpu.memory_space<vmem>>, vector<1x1x2x128xf32>
    %956 = vector.shape_cast %955 : vector<1x1x2x128xf32> to vector<2x128xf32>
    %957 = vector.shape_cast %954 : vector<2x128xf32> to vector<1x1x2x128xf32>
    tpu.vector_store %arg5[%c0_144, %c19_145, %c0_146, %c0_147], %957 {strides = array<i32>} : memref<1x32x2x128xf32, #tpu.memory_space<vmem>>, vector<1x1x2x128xf32>,
    %958 = vector.broadcast %308 : f32 to vector<2x128xf32>
    %959 = vector.broadcast %180 : f32 to vector<2x128xf32>
    %960 = arith.mulf %321, %959 : vector<2x128xf32>
    %961 = arith.addf %958, %960 : vector<2x128xf32>
    %962 = vector.broadcast %181 : f32 to vector<2x128xf32>
    %963 = arith.mulf %323, %962 : vector<2x128xf32>
    %964 = arith.addf %961, %963 : vector<2x128xf32>
    %965 = vector.broadcast %182 : f32 to vector<2x128xf32>
    %966 = arith.mulf %325, %965 : vector<2x128xf32>
    %967 = arith.addf %964, %966 : vector<2x128xf32>
    %968 = vector.broadcast %183 : f32 to vector<2x128xf32>
    %969 = arith.mulf %327, %968 : vector<2x128xf32>
    %970 = arith.addf %967, %969 : vector<2x128xf32>
    %971 = vector.broadcast %184 : f32 to vector<2x128xf32>
    %972 = arith.mulf %329, %971 : vector<2x128xf32>
    %973 = arith.addf %970, %972 : vector<2x128xf32>
    %974 = vector.broadcast %185 : f32 to vector<2x128xf32>
    %975 = arith.mulf %331, %974 : vector<2x128xf32>
    %976 = arith.addf %973, %975 : vector<2x128xf32>
    %977 = vector.broadcast %186 : f32 to vector<2x128xf32>
    %978 = arith.mulf %333, %977 : vector<2x128xf32>
    %979 = arith.addf %976, %978 : vector<2x128xf32>
    %980 = vector.broadcast %187 : f32 to vector<2x128xf32>
    %981 = arith.mulf %335, %980 : vector<2x128xf32>
    %982 = arith.addf %979, %981 : vector<2x128xf32>
    %983 = vector.broadcast %188 : f32 to vector<2x128xf32>
    %984 = arith.mulf %337, %983 : vector<2x128xf32>
    %985 = arith.addf %982, %984 : vector<2x128xf32>
    %c0_148 = arith.constant 0 : index
    %c20_149 = arith.constant 20 : index
    %c0_150 = arith.constant 0 : index
    %c0_151 = arith.constant 0 : index
    %986 = vector.load %arg5[%c0_148, %c20_149, %c0_150, %c0_151] : memref<1x32x2x128xf32, #tpu.memory_space<vmem>>, vector<1x1x2x128xf32>
    %987 = vector.shape_cast %986 : vector<1x1x2x128xf32> to vector<2x128xf32>
    %988 = vector.shape_cast %985 : vector<2x128xf32> to vector<1x1x2x128xf32>
    tpu.vector_store %arg5[%c0_148, %c20_149, %c0_150, %c0_151], %988 {strides = array<i32>} : memref<1x32x2x128xf32, #tpu.memory_space<vmem>>, vector<1x1x2x128xf32>,
    %989 = vector.broadcast %309 : f32 to vector<2x128xf32>
    %990 = vector.broadcast %189 : f32 to vector<2x128xf32>
    %991 = arith.mulf %321, %990 : vector<2x128xf32>
    %992 = arith.addf %989, %991 : vector<2x128xf32>
    %993 = vector.broadcast %190 : f32 to vector<2x128xf32>
    %994 = arith.mulf %323, %993 : vector<2x128xf32>
    %995 = arith.addf %992, %994 : vector<2x128xf32>
    %996 = vector.broadcast %191 : f32 to vector<2x128xf32>
    %997 = arith.mulf %325, %996 : vector<2x128xf32>
    %998 = arith.addf %995, %997 : vector<2x128xf32>
    %999 = vector.broadcast %192 : f32 to vector<2x128xf32>
    %1000 = arith.mulf %327, %999 : vector<2x128xf32>
    %1001 = arith.addf %998, %1000 : vector<2x128xf32>
    %1002 = vector.broadcast %193 : f32 to vector<2x128xf32>
    %1003 = arith.mulf %329, %1002 : vector<2x128xf32>
    %1004 = arith.addf %1001, %1003 : vector<2x128xf32>
    %1005 = vector.broadcast %194 : f32 to vector<2x128xf32>
    %1006 = arith.mulf %331, %1005 : vector<2x128xf32>
    %1007 = arith.addf %1004, %1006 : vector<2x128xf32>
    %1008 = vector.broadcast %195 : f32 to vector<2x128xf32>
    %1009 = arith.mulf %333, %1008 : vector<2x128xf32>
    %1010 = arith.addf %1007, %1009 : vector<2x128xf32>
    %1011 = vector.broadcast %196 : f32 to vector<2x128xf32>
    %1012 = arith.mulf %335, %1011 : vector<2x128xf32>
    %1013 = arith.addf %1010, %1012 : vector<2x128xf32>
    %1014 = vector.broadcast %197 : f32 to vector<2x128xf32>
    %1015 = arith.mulf %337, %1014 : vector<2x128xf32>
    %1016 = arith.addf %1013, %1015 : vector<2x128xf32>
    %c0_152 = arith.constant 0 : index
    %c21_153 = arith.constant 21 : index
    %c0_154 = arith.constant 0 : index
    %c0_155 = arith.constant 0 : index
    %1017 = vector.load %arg5[%c0_152, %c21_153, %c0_154, %c0_155] : memref<1x32x2x128xf32, #tpu.memory_space<vmem>>, vector<1x1x2x128xf32>
    %1018 = vector.shape_cast %1017 : vector<1x1x2x128xf32> to vector<2x128xf32>
    %1019 = vector.shape_cast %1016 : vector<2x128xf32> to vector<1x1x2x128xf32>
    tpu.vector_store %arg5[%c0_152, %c21_153, %c0_154, %c0_155], %1019 {strides = array<i32>} : memref<1x32x2x128xf32, #tpu.memory_space<vmem>>, vector<1x1x2x128xf32>,
    %1020 = vector.broadcast %310 : f32 to vector<2x128xf32>
    %1021 = vector.broadcast %198 : f32 to vector<2x128xf32>
    %1022 = arith.mulf %321, %1021 : vector<2x128xf32>
    %1023 = arith.addf %1020, %1022 : vector<2x128xf32>
    %1024 = vector.broadcast %199 : f32 to vector<2x128xf32>
    %1025 = arith.mulf %323, %1024 : vector<2x128xf32>
    %1026 = arith.addf %1023, %1025 : vector<2x128xf32>
    %1027 = vector.broadcast %200 : f32 to vector<2x128xf32>
    %1028 = arith.mulf %325, %1027 : vector<2x128xf32>
    %1029 = arith.addf %1026, %1028 : vector<2x128xf32>
    %1030 = vector.broadcast %201 : f32 to vector<2x128xf32>
    %1031 = arith.mulf %327, %1030 : vector<2x128xf32>
    %1032 = arith.addf %1029, %1031 : vector<2x128xf32>
    %1033 = vector.broadcast %202 : f32 to vector<2x128xf32>
    %1034 = arith.mulf %329, %1033 : vector<2x128xf32>
    %1035 = arith.addf %1032, %1034 : vector<2x128xf32>
    %1036 = vector.broadcast %203 : f32 to vector<2x128xf32>
    %1037 = arith.mulf %331, %1036 : vector<2x128xf32>
    %1038 = arith.addf %1035, %1037 : vector<2x128xf32>
    %1039 = vector.broadcast %204 : f32 to vector<2x128xf32>
    %1040 = arith.mulf %333, %1039 : vector<2x128xf32>
    %1041 = arith.addf %1038, %1040 : vector<2x128xf32>
    %1042 = vector.broadcast %205 : f32 to vector<2x128xf32>
    %1043 = arith.mulf %335, %1042 : vector<2x128xf32>
    %1044 = arith.addf %1041, %1043 : vector<2x128xf32>
    %1045 = vector.broadcast %206 : f32 to vector<2x128xf32>
    %1046 = arith.mulf %337, %1045 : vector<2x128xf32>
    %1047 = arith.addf %1044, %1046 : vector<2x128xf32>
    %c0_156 = arith.constant 0 : index
    %c22_157 = arith.constant 22 : index
    %c0_158 = arith.constant 0 : index
    %c0_159 = arith.constant 0 : index
    %1048 = vector.load %arg5[%c0_156, %c22_157, %c0_158, %c0_159] : memref<1x32x2x128xf32, #tpu.memory_space<vmem>>, vector<1x1x2x128xf32>
    %1049 = vector.shape_cast %1048 : vector<1x1x2x128xf32> to vector<2x128xf32>
    %1050 = vector.shape_cast %1047 : vector<2x128xf32> to vector<1x1x2x128xf32>
    tpu.vector_store %arg5[%c0_156, %c22_157, %c0_158, %c0_159], %1050 {strides = array<i32>} : memref<1x32x2x128xf32, #tpu.memory_space<vmem>>, vector<1x1x2x128xf32>,
    %1051 = vector.broadcast %311 : f32 to vector<2x128xf32>
    %1052 = vector.broadcast %207 : f32 to vector<2x128xf32>
    %1053 = arith.mulf %321, %1052 : vector<2x128xf32>
    %1054 = arith.addf %1051, %1053 : vector<2x128xf32>
    %1055 = vector.broadcast %208 : f32 to vector<2x128xf32>
    %1056 = arith.mulf %323, %1055 : vector<2x128xf32>
    %1057 = arith.addf %1054, %1056 : vector<2x128xf32>
    %1058 = vector.broadcast %209 : f32 to vector<2x128xf32>
    %1059 = arith.mulf %325, %1058 : vector<2x128xf32>
    %1060 = arith.addf %1057, %1059 : vector<2x128xf32>
    %1061 = vector.broadcast %210 : f32 to vector<2x128xf32>
    %1062 = arith.mulf %327, %1061 : vector<2x128xf32>
    %1063 = arith.addf %1060, %1062 : vector<2x128xf32>
    %1064 = vector.broadcast %211 : f32 to vector<2x128xf32>
    %1065 = arith.mulf %329, %1064 : vector<2x128xf32>
    %1066 = arith.addf %1063, %1065 : vector<2x128xf32>
    %1067 = vector.broadcast %212 : f32 to vector<2x128xf32>
    %1068 = arith.mulf %331, %1067 : vector<2x128xf32>
    %1069 = arith.addf %1066, %1068 : vector<2x128xf32>
    %1070 = vector.broadcast %213 : f32 to vector<2x128xf32>
    %1071 = arith.mulf %333, %1070 : vector<2x128xf32>
    %1072 = arith.addf %1069, %1071 : vector<2x128xf32>
    %1073 = vector.broadcast %214 : f32 to vector<2x128xf32>
    %1074 = arith.mulf %335, %1073 : vector<2x128xf32>
    %1075 = arith.addf %1072, %1074 : vector<2x128xf32>
    %1076 = vector.broadcast %215 : f32 to vector<2x128xf32>
    %1077 = arith.mulf %337, %1076 : vector<2x128xf32>
    %1078 = arith.addf %1075, %1077 : vector<2x128xf32>
    %c0_160 = arith.constant 0 : index
    %c23_161 = arith.constant 23 : index
    %c0_162 = arith.constant 0 : index
    %c0_163 = arith.constant 0 : index
    %1079 = vector.load %arg5[%c0_160, %c23_161, %c0_162, %c0_163] : memref<1x32x2x128xf32, #tpu.memory_space<vmem>>, vector<1x1x2x128xf32>
    %1080 = vector.shape_cast %1079 : vector<1x1x2x128xf32> to vector<2x128xf32>
    %1081 = vector.shape_cast %1078 : vector<2x128xf32> to vector<1x1x2x128xf32>
    tpu.vector_store %arg5[%c0_160, %c23_161, %c0_162, %c0_163], %1081 {strides = array<i32>} : memref<1x32x2x128xf32, #tpu.memory_space<vmem>>, vector<1x1x2x128xf32>,
    %1082 = vector.broadcast %312 : f32 to vector<2x128xf32>
    %1083 = vector.broadcast %216 : f32 to vector<2x128xf32>
    %1084 = arith.mulf %321, %1083 : vector<2x128xf32>
    %1085 = arith.addf %1082, %1084 : vector<2x128xf32>
    %1086 = vector.broadcast %217 : f32 to vector<2x128xf32>
    %1087 = arith.mulf %323, %1086 : vector<2x128xf32>
    %1088 = arith.addf %1085, %1087 : vector<2x128xf32>
    %1089 = vector.broadcast %218 : f32 to vector<2x128xf32>
    %1090 = arith.mulf %325, %1089 : vector<2x128xf32>
    %1091 = arith.addf %1088, %1090 : vector<2x128xf32>
    %1092 = vector.broadcast %219 : f32 to vector<2x128xf32>
    %1093 = arith.mulf %327, %1092 : vector<2x128xf32>
    %1094 = arith.addf %1091, %1093 : vector<2x128xf32>
    %1095 = vector.broadcast %220 : f32 to vector<2x128xf32>
    %1096 = arith.mulf %329, %1095 : vector<2x128xf32>
    %1097 = arith.addf %1094, %1096 : vector<2x128xf32>
    %1098 = vector.broadcast %221 : f32 to vector<2x128xf32>
    %1099 = arith.mulf %331, %1098 : vector<2x128xf32>
    %1100 = arith.addf %1097, %1099 : vector<2x128xf32>
    %1101 = vector.broadcast %222 : f32 to vector<2x128xf32>
    %1102 = arith.mulf %333, %1101 : vector<2x128xf32>
    %1103 = arith.addf %1100, %1102 : vector<2x128xf32>
    %1104 = vector.broadcast %223 : f32 to vector<2x128xf32>
    %1105 = arith.mulf %335, %1104 : vector<2x128xf32>
    %1106 = arith.addf %1103, %1105 : vector<2x128xf32>
    %1107 = vector.broadcast %224 : f32 to vector<2x128xf32>
    %1108 = arith.mulf %337, %1107 : vector<2x128xf32>
    %1109 = arith.addf %1106, %1108 : vector<2x128xf32>
    %c0_164 = arith.constant 0 : index
    %c24_165 = arith.constant 24 : index
    %c0_166 = arith.constant 0 : index
    %c0_167 = arith.constant 0 : index
    %1110 = vector.load %arg5[%c0_164, %c24_165, %c0_166, %c0_167] : memref<1x32x2x128xf32, #tpu.memory_space<vmem>>, vector<1x1x2x128xf32>
    %1111 = vector.shape_cast %1110 : vector<1x1x2x128xf32> to vector<2x128xf32>
    %1112 = vector.shape_cast %1109 : vector<2x128xf32> to vector<1x1x2x128xf32>
    tpu.vector_store %arg5[%c0_164, %c24_165, %c0_166, %c0_167], %1112 {strides = array<i32>} : memref<1x32x2x128xf32, #tpu.memory_space<vmem>>, vector<1x1x2x128xf32>,
    %1113 = vector.broadcast %313 : f32 to vector<2x128xf32>
    %1114 = vector.broadcast %225 : f32 to vector<2x128xf32>
    %1115 = arith.mulf %321, %1114 : vector<2x128xf32>
    %1116 = arith.addf %1113, %1115 : vector<2x128xf32>
    %1117 = vector.broadcast %226 : f32 to vector<2x128xf32>
    %1118 = arith.mulf %323, %1117 : vector<2x128xf32>
    %1119 = arith.addf %1116, %1118 : vector<2x128xf32>
    %1120 = vector.broadcast %227 : f32 to vector<2x128xf32>
    %1121 = arith.mulf %325, %1120 : vector<2x128xf32>
    %1122 = arith.addf %1119, %1121 : vector<2x128xf32>
    %1123 = vector.broadcast %228 : f32 to vector<2x128xf32>
    %1124 = arith.mulf %327, %1123 : vector<2x128xf32>
    %1125 = arith.addf %1122, %1124 : vector<2x128xf32>
    %1126 = vector.broadcast %229 : f32 to vector<2x128xf32>
    %1127 = arith.mulf %329, %1126 : vector<2x128xf32>
    %1128 = arith.addf %1125, %1127 : vector<2x128xf32>
    %1129 = vector.broadcast %230 : f32 to vector<2x128xf32>
    %1130 = arith.mulf %331, %1129 : vector<2x128xf32>
    %1131 = arith.addf %1128, %1130 : vector<2x128xf32>
    %1132 = vector.broadcast %231 : f32 to vector<2x128xf32>
    %1133 = arith.mulf %333, %1132 : vector<2x128xf32>
    %1134 = arith.addf %1131, %1133 : vector<2x128xf32>
    %1135 = vector.broadcast %232 : f32 to vector<2x128xf32>
    %1136 = arith.mulf %335, %1135 : vector<2x128xf32>
    %1137 = arith.addf %1134, %1136 : vector<2x128xf32>
    %1138 = vector.broadcast %233 : f32 to vector<2x128xf32>
    %1139 = arith.mulf %337, %1138 : vector<2x128xf32>
    %1140 = arith.addf %1137, %1139 : vector<2x128xf32>
    %c0_168 = arith.constant 0 : index
    %c25_169 = arith.constant 25 : index
    %c0_170 = arith.constant 0 : index
    %c0_171 = arith.constant 0 : index
    %1141 = vector.load %arg5[%c0_168, %c25_169, %c0_170, %c0_171] : memref<1x32x2x128xf32, #tpu.memory_space<vmem>>, vector<1x1x2x128xf32>
    %1142 = vector.shape_cast %1141 : vector<1x1x2x128xf32> to vector<2x128xf32>
    %1143 = vector.shape_cast %1140 : vector<2x128xf32> to vector<1x1x2x128xf32>
    tpu.vector_store %arg5[%c0_168, %c25_169, %c0_170, %c0_171], %1143 {strides = array<i32>} : memref<1x32x2x128xf32, #tpu.memory_space<vmem>>, vector<1x1x2x128xf32>,
    %1144 = vector.broadcast %314 : f32 to vector<2x128xf32>
    %1145 = vector.broadcast %234 : f32 to vector<2x128xf32>
    %1146 = arith.mulf %321, %1145 : vector<2x128xf32>
    %1147 = arith.addf %1144, %1146 : vector<2x128xf32>
    %1148 = vector.broadcast %235 : f32 to vector<2x128xf32>
    %1149 = arith.mulf %323, %1148 : vector<2x128xf32>
    %1150 = arith.addf %1147, %1149 : vector<2x128xf32>
    %1151 = vector.broadcast %236 : f32 to vector<2x128xf32>
    %1152 = arith.mulf %325, %1151 : vector<2x128xf32>
    %1153 = arith.addf %1150, %1152 : vector<2x128xf32>
    %1154 = vector.broadcast %237 : f32 to vector<2x128xf32>
    %1155 = arith.mulf %327, %1154 : vector<2x128xf32>
    %1156 = arith.addf %1153, %1155 : vector<2x128xf32>
    %1157 = vector.broadcast %238 : f32 to vector<2x128xf32>
    %1158 = arith.mulf %329, %1157 : vector<2x128xf32>
    %1159 = arith.addf %1156, %1158 : vector<2x128xf32>
    %1160 = vector.broadcast %239 : f32 to vector<2x128xf32>
    %1161 = arith.mulf %331, %1160 : vector<2x128xf32>
    %1162 = arith.addf %1159, %1161 : vector<2x128xf32>
    %1163 = vector.broadcast %240 : f32 to vector<2x128xf32>
    %1164 = arith.mulf %333, %1163 : vector<2x128xf32>
    %1165 = arith.addf %1162, %1164 : vector<2x128xf32>
    %1166 = vector.broadcast %241 : f32 to vector<2x128xf32>
    %1167 = arith.mulf %335, %1166 : vector<2x128xf32>
    %1168 = arith.addf %1165, %1167 : vector<2x128xf32>
    %1169 = vector.broadcast %242 : f32 to vector<2x128xf32>
    %1170 = arith.mulf %337, %1169 : vector<2x128xf32>
    %1171 = arith.addf %1168, %1170 : vector<2x128xf32>
    %c0_172 = arith.constant 0 : index
    %c26_173 = arith.constant 26 : index
    %c0_174 = arith.constant 0 : index
    %c0_175 = arith.constant 0 : index
    %1172 = vector.load %arg5[%c0_172, %c26_173, %c0_174, %c0_175] : memref<1x32x2x128xf32, #tpu.memory_space<vmem>>, vector<1x1x2x128xf32>
    %1173 = vector.shape_cast %1172 : vector<1x1x2x128xf32> to vector<2x128xf32>
    %1174 = vector.shape_cast %1171 : vector<2x128xf32> to vector<1x1x2x128xf32>
    tpu.vector_store %arg5[%c0_172, %c26_173, %c0_174, %c0_175], %1174 {strides = array<i32>} : memref<1x32x2x128xf32, #tpu.memory_space<vmem>>, vector<1x1x2x128xf32>,
    %1175 = vector.broadcast %315 : f32 to vector<2x128xf32>
    %1176 = vector.broadcast %243 : f32 to vector<2x128xf32>
    %1177 = arith.mulf %321, %1176 : vector<2x128xf32>
    %1178 = arith.addf %1175, %1177 : vector<2x128xf32>
    %1179 = vector.broadcast %244 : f32 to vector<2x128xf32>
    %1180 = arith.mulf %323, %1179 : vector<2x128xf32>
    %1181 = arith.addf %1178, %1180 : vector<2x128xf32>
    %1182 = vector.broadcast %245 : f32 to vector<2x128xf32>
    %1183 = arith.mulf %325, %1182 : vector<2x128xf32>
    %1184 = arith.addf %1181, %1183 : vector<2x128xf32>
    %1185 = vector.broadcast %246 : f32 to vector<2x128xf32>
    %1186 = arith.mulf %327, %1185 : vector<2x128xf32>
    %1187 = arith.addf %1184, %1186 : vector<2x128xf32>
    %1188 = vector.broadcast %247 : f32 to vector<2x128xf32>
    %1189 = arith.mulf %329, %1188 : vector<2x128xf32>
    %1190 = arith.addf %1187, %1189 : vector<2x128xf32>
    %1191 = vector.broadcast %248 : f32 to vector<2x128xf32>
    %1192 = arith.mulf %331, %1191 : vector<2x128xf32>
    %1193 = arith.addf %1190, %1192 : vector<2x128xf32>
    %1194 = vector.broadcast %249 : f32 to vector<2x128xf32>
    %1195 = arith.mulf %333, %1194 : vector<2x128xf32>
    %1196 = arith.addf %1193, %1195 : vector<2x128xf32>
    %1197 = vector.broadcast %250 : f32 to vector<2x128xf32>
    %1198 = arith.mulf %335, %1197 : vector<2x128xf32>
    %1199 = arith.addf %1196, %1198 : vector<2x128xf32>
    %1200 = vector.broadcast %251 : f32 to vector<2x128xf32>
    %1201 = arith.mulf %337, %1200 : vector<2x128xf32>
    %1202 = arith.addf %1199, %1201 : vector<2x128xf32>
    %c0_176 = arith.constant 0 : index
    %c27_177 = arith.constant 27 : index
    %c0_178 = arith.constant 0 : index
    %c0_179 = arith.constant 0 : index
    %1203 = vector.load %arg5[%c0_176, %c27_177, %c0_178, %c0_179] : memref<1x32x2x128xf32, #tpu.memory_space<vmem>>, vector<1x1x2x128xf32>
    %1204 = vector.shape_cast %1203 : vector<1x1x2x128xf32> to vector<2x128xf32>
    %1205 = vector.shape_cast %1202 : vector<2x128xf32> to vector<1x1x2x128xf32>
    tpu.vector_store %arg5[%c0_176, %c27_177, %c0_178, %c0_179], %1205 {strides = array<i32>} : memref<1x32x2x128xf32, #tpu.memory_space<vmem>>, vector<1x1x2x128xf32>,
    %1206 = vector.broadcast %316 : f32 to vector<2x128xf32>
    %1207 = vector.broadcast %252 : f32 to vector<2x128xf32>
    %1208 = arith.mulf %321, %1207 : vector<2x128xf32>
    %1209 = arith.addf %1206, %1208 : vector<2x128xf32>
    %1210 = vector.broadcast %253 : f32 to vector<2x128xf32>
    %1211 = arith.mulf %323, %1210 : vector<2x128xf32>
    %1212 = arith.addf %1209, %1211 : vector<2x128xf32>
    %1213 = vector.broadcast %254 : f32 to vector<2x128xf32>
    %1214 = arith.mulf %325, %1213 : vector<2x128xf32>
    %1215 = arith.addf %1212, %1214 : vector<2x128xf32>
    %1216 = vector.broadcast %255 : f32 to vector<2x128xf32>
    %1217 = arith.mulf %327, %1216 : vector<2x128xf32>
    %1218 = arith.addf %1215, %1217 : vector<2x128xf32>
    %1219 = vector.broadcast %256 : f32 to vector<2x128xf32>
    %1220 = arith.mulf %329, %1219 : vector<2x128xf32>
    %1221 = arith.addf %1218, %1220 : vector<2x128xf32>
    %1222 = vector.broadcast %257 : f32 to vector<2x128xf32>
    %1223 = arith.mulf %331, %1222 : vector<2x128xf32>
    %1224 = arith.addf %1221, %1223 : vector<2x128xf32>
    %1225 = vector.broadcast %258 : f32 to vector<2x128xf32>
    %1226 = arith.mulf %333, %1225 : vector<2x128xf32>
    %1227 = arith.addf %1224, %1226 : vector<2x128xf32>
    %1228 = vector.broadcast %259 : f32 to vector<2x128xf32>
    %1229 = arith.mulf %335, %1228 : vector<2x128xf32>
    %1230 = arith.addf %1227, %1229 : vector<2x128xf32>
    %1231 = vector.broadcast %260 : f32 to vector<2x128xf32>
    %1232 = arith.mulf %337, %1231 : vector<2x128xf32>
    %1233 = arith.addf %1230, %1232 : vector<2x128xf32>
    %c0_180 = arith.constant 0 : index
    %c28_181 = arith.constant 28 : index
    %c0_182 = arith.constant 0 : index
    %c0_183 = arith.constant 0 : index
    %1234 = vector.load %arg5[%c0_180, %c28_181, %c0_182, %c0_183] : memref<1x32x2x128xf32, #tpu.memory_space<vmem>>, vector<1x1x2x128xf32>
    %1235 = vector.shape_cast %1234 : vector<1x1x2x128xf32> to vector<2x128xf32>
    %1236 = vector.shape_cast %1233 : vector<2x128xf32> to vector<1x1x2x128xf32>
    tpu.vector_store %arg5[%c0_180, %c28_181, %c0_182, %c0_183], %1236 {strides = array<i32>} : memref<1x32x2x128xf32, #tpu.memory_space<vmem>>, vector<1x1x2x128xf32>,
    %1237 = vector.broadcast %317 : f32 to vector<2x128xf32>
    %1238 = vector.broadcast %261 : f32 to vector<2x128xf32>
    %1239 = arith.mulf %321, %1238 : vector<2x128xf32>
    %1240 = arith.addf %1237, %1239 : vector<2x128xf32>
    %1241 = vector.broadcast %262 : f32 to vector<2x128xf32>
    %1242 = arith.mulf %323, %1241 : vector<2x128xf32>
    %1243 = arith.addf %1240, %1242 : vector<2x128xf32>
    %1244 = vector.broadcast %263 : f32 to vector<2x128xf32>
    %1245 = arith.mulf %325, %1244 : vector<2x128xf32>
    %1246 = arith.addf %1243, %1245 : vector<2x128xf32>
    %1247 = vector.broadcast %264 : f32 to vector<2x128xf32>
    %1248 = arith.mulf %327, %1247 : vector<2x128xf32>
    %1249 = arith.addf %1246, %1248 : vector<2x128xf32>
    %1250 = vector.broadcast %265 : f32 to vector<2x128xf32>
    %1251 = arith.mulf %329, %1250 : vector<2x128xf32>
    %1252 = arith.addf %1249, %1251 : vector<2x128xf32>
    %1253 = vector.broadcast %266 : f32 to vector<2x128xf32>
    %1254 = arith.mulf %331, %1253 : vector<2x128xf32>
    %1255 = arith.addf %1252, %1254 : vector<2x128xf32>
    %1256 = vector.broadcast %267 : f32 to vector<2x128xf32>
    %1257 = arith.mulf %333, %1256 : vector<2x128xf32>
    %1258 = arith.addf %1255, %1257 : vector<2x128xf32>
    %1259 = vector.broadcast %268 : f32 to vector<2x128xf32>
    %1260 = arith.mulf %335, %1259 : vector<2x128xf32>
    %1261 = arith.addf %1258, %1260 : vector<2x128xf32>
    %1262 = vector.broadcast %269 : f32 to vector<2x128xf32>
    %1263 = arith.mulf %337, %1262 : vector<2x128xf32>
    %1264 = arith.addf %1261, %1263 : vector<2x128xf32>
    %c0_184 = arith.constant 0 : index
    %c29_185 = arith.constant 29 : index
    %c0_186 = arith.constant 0 : index
    %c0_187 = arith.constant 0 : index
    %1265 = vector.load %arg5[%c0_184, %c29_185, %c0_186, %c0_187] : memref<1x32x2x128xf32, #tpu.memory_space<vmem>>, vector<1x1x2x128xf32>
    %1266 = vector.shape_cast %1265 : vector<1x1x2x128xf32> to vector<2x128xf32>
    %1267 = vector.shape_cast %1264 : vector<2x128xf32> to vector<1x1x2x128xf32>
    tpu.vector_store %arg5[%c0_184, %c29_185, %c0_186, %c0_187], %1267 {strides = array<i32>} : memref<1x32x2x128xf32, #tpu.memory_space<vmem>>, vector<1x1x2x128xf32>,
    %1268 = vector.broadcast %318 : f32 to vector<2x128xf32>
    %1269 = vector.broadcast %270 : f32 to vector<2x128xf32>
    %1270 = arith.mulf %321, %1269 : vector<2x128xf32>
    %1271 = arith.addf %1268, %1270 : vector<2x128xf32>
    %1272 = vector.broadcast %271 : f32 to vector<2x128xf32>
    %1273 = arith.mulf %323, %1272 : vector<2x128xf32>
    %1274 = arith.addf %1271, %1273 : vector<2x128xf32>
    %1275 = vector.broadcast %272 : f32 to vector<2x128xf32>
    %1276 = arith.mulf %325, %1275 : vector<2x128xf32>
    %1277 = arith.addf %1274, %1276 : vector<2x128xf32>
    %1278 = vector.broadcast %273 : f32 to vector<2x128xf32>
    %1279 = arith.mulf %327, %1278 : vector<2x128xf32>
    %1280 = arith.addf %1277, %1279 : vector<2x128xf32>
    %1281 = vector.broadcast %274 : f32 to vector<2x128xf32>
    %1282 = arith.mulf %329, %1281 : vector<2x128xf32>
    %1283 = arith.addf %1280, %1282 : vector<2x128xf32>
    %1284 = vector.broadcast %275 : f32 to vector<2x128xf32>
    %1285 = arith.mulf %331, %1284 : vector<2x128xf32>
    %1286 = arith.addf %1283, %1285 : vector<2x128xf32>
    %1287 = vector.broadcast %276 : f32 to vector<2x128xf32>
    %1288 = arith.mulf %333, %1287 : vector<2x128xf32>
    %1289 = arith.addf %1286, %1288 : vector<2x128xf32>
    %1290 = vector.broadcast %277 : f32 to vector<2x128xf32>
    %1291 = arith.mulf %335, %1290 : vector<2x128xf32>
    %1292 = arith.addf %1289, %1291 : vector<2x128xf32>
    %1293 = vector.broadcast %278 : f32 to vector<2x128xf32>
    %1294 = arith.mulf %337, %1293 : vector<2x128xf32>
    %1295 = arith.addf %1292, %1294 : vector<2x128xf32>
    %c0_188 = arith.constant 0 : index
    %c30_189 = arith.constant 30 : index
    %c0_190 = arith.constant 0 : index
    %c0_191 = arith.constant 0 : index
    %1296 = vector.load %arg5[%c0_188, %c30_189, %c0_190, %c0_191] : memref<1x32x2x128xf32, #tpu.memory_space<vmem>>, vector<1x1x2x128xf32>
    %1297 = vector.shape_cast %1296 : vector<1x1x2x128xf32> to vector<2x128xf32>
    %1298 = vector.shape_cast %1295 : vector<2x128xf32> to vector<1x1x2x128xf32>
    tpu.vector_store %arg5[%c0_188, %c30_189, %c0_190, %c0_191], %1298 {strides = array<i32>} : memref<1x32x2x128xf32, #tpu.memory_space<vmem>>, vector<1x1x2x128xf32>,
    %1299 = vector.broadcast %319 : f32 to vector<2x128xf32>
    %1300 = vector.broadcast %279 : f32 to vector<2x128xf32>
    %1301 = arith.mulf %321, %1300 : vector<2x128xf32>
    %1302 = arith.addf %1299, %1301 : vector<2x128xf32>
    %1303 = vector.broadcast %280 : f32 to vector<2x128xf32>
    %1304 = arith.mulf %323, %1303 : vector<2x128xf32>
    %1305 = arith.addf %1302, %1304 : vector<2x128xf32>
    %1306 = vector.broadcast %281 : f32 to vector<2x128xf32>
    %1307 = arith.mulf %325, %1306 : vector<2x128xf32>
    %1308 = arith.addf %1305, %1307 : vector<2x128xf32>
    %1309 = vector.broadcast %282 : f32 to vector<2x128xf32>
    %1310 = arith.mulf %327, %1309 : vector<2x128xf32>
    %1311 = arith.addf %1308, %1310 : vector<2x128xf32>
    %1312 = vector.broadcast %283 : f32 to vector<2x128xf32>
    %1313 = arith.mulf %329, %1312 : vector<2x128xf32>
    %1314 = arith.addf %1311, %1313 : vector<2x128xf32>
    %1315 = vector.broadcast %284 : f32 to vector<2x128xf32>
    %1316 = arith.mulf %331, %1315 : vector<2x128xf32>
    %1317 = arith.addf %1314, %1316 : vector<2x128xf32>
    %1318 = vector.broadcast %285 : f32 to vector<2x128xf32>
    %1319 = arith.mulf %333, %1318 : vector<2x128xf32>
    %1320 = arith.addf %1317, %1319 : vector<2x128xf32>
    %1321 = vector.broadcast %286 : f32 to vector<2x128xf32>
    %1322 = arith.mulf %335, %1321 : vector<2x128xf32>
    %1323 = arith.addf %1320, %1322 : vector<2x128xf32>
    %1324 = vector.broadcast %287 : f32 to vector<2x128xf32>
    %1325 = arith.mulf %337, %1324 : vector<2x128xf32>
    %1326 = arith.addf %1323, %1325 : vector<2x128xf32>
    %c0_192 = arith.constant 0 : index
    %c31_193 = arith.constant 31 : index
    %c0_194 = arith.constant 0 : index
    %c0_195 = arith.constant 0 : index
    %1327 = vector.load %arg5[%c0_192, %c31_193, %c0_194, %c0_195] : memref<1x32x2x128xf32, #tpu.memory_space<vmem>>, vector<1x1x2x128xf32>
    %1328 = vector.shape_cast %1327 : vector<1x1x2x128xf32> to vector<2x128xf32>
    %1329 = vector.shape_cast %1326 : vector<2x128xf32> to vector<1x1x2x128xf32>
    tpu.vector_store %arg5[%c0_192, %c31_193, %c0_194, %c0_195], %1329 {strides = array<i32>} : memref<1x32x2x128xf32, #tpu.memory_space<vmem>>, vector<1x1x2x128xf32>,
    return
  }
  func.func @transform_0(%arg0: i32, %arg1: i32) -> i32 {
    %c0_i32 = arith.constant 0 : i32
    %c0_i32_0 = arith.constant 0 : i32
    return %c0_i32 : i32
  }
  func.func @transform_1(%arg0: i32, %arg1: i32) -> i32 {
    %c0_i32 = arith.constant 0 : i32
    %c0_i32_0 = arith.constant 0 : i32
    return %c0_i32 : i32
  }
  func.func @transform_2(%arg0: i32, %arg1: i32) -> (i32, i32, i32, i32) {
    %c0_i32 = arith.constant 0 : i32
    %c0_i32_0 = arith.constant 0 : i32
    %c0_i32_1 = arith.constant 0 : i32
    return %arg0, %c0_i32, %arg1, %c0_i32_0 : i32, i32, i32, i32
  }
  func.func @transform_3(%arg0: i32, %arg1: i32) -> (i32, i32, i32, i32) {
    %c0_i32 = arith.constant 0 : i32
    %c0_i32_0 = arith.constant 0 : i32
    %c0_i32_1 = arith.constant 0 : i32
    return %arg0, %c0_i32, %arg1, %c0_i32_0 : i32, i32, i32, i32
  }
}

</mosaic_0001>

<llo_original>
// kernel: tpu_custom_call.1
$region0: #{tpu_custom_call.1}
  #allocation0 [shape = 'u32[]', space=smem, size = 0x4, offset = 0x4, fixed_abs, tag = 'smem constant byte address 0x4 - core index']
  #allocation1 [shape = 'u32[144,128]{1,0:T(1,128)}', space=vmem, size = 0x12000, scoped, tag = 'internal scratch']
  %s0 = inlined_call_operand.hbm [shape: f32[288], index: 0, kind: input, shape index: {}]
  %s1 = inlined_call_operand.vmem [shape: f32[32], index: 1, kind: input, shape index: {}]
  %s2 = inlined_call_operand.hbm [shape: f32[2,9,2,128], index: 2, kind: input, shape index: {}]
  %s3 = inlined_call_operand.hbm [shape: f32[2,32,2,128], index: 3, kind: output, shape index: {}]
  %s4 = sld [smem:[#allocation0]]
  $region57: #{tpu_custom_call.1} parent=0
    _
  %s6 = ssub.s32 1, %s4
  %s7 = scalar_select 0, %s6, %s4
  $region1: #{tpu_custom_call.1} parent=0
    #allocation2 [shape = 'u8[1536]{0}', space=smem, size = 0x600, scoped, tag = 'input window, operand 0, single buffered']
    #allocation3 [shape = 's32[2]{0}', space=sflag, size = 0x8, scoped, tag = 'scoped memory for tpu_custom_call.1']
    #allocation4 [shape = 's32[2]{0}', space=sflag, size = 0x8, scoped, tag = 'scoped memory for tpu_custom_call.1']
    #allocation5 [shape = 's32[2]{0}', space=sflag, size = 0x8, scoped, tag = 'scoped memory for tpu_custom_call.1']
    #allocation6 [shape = 's32[2]{0}', space=sflag, size = 0x8, scoped, tag = 'scoped memory for tpu_custom_call.1']
    #allocation7 [shape = 'u8[512]{0}', space=smem, size = 0x200, scoped, tag = 'input window, operand 1, single buffered']
    #allocation8 [shape = 'u8[18432]{0}', space=vmem, size = 0x4800, scoped, tag = 'input window, operand 2']
    #allocation9 [shape = 'u8[65536]{0}', space=vmem, size = 0x10000, scoped, tag = 'output window, operand 0']
    %8 = vsyncpa [#allocation5], 0
    %9 = vsyncpa [#allocation6], 0
    %10 = vsyncpa [#allocation3], 0
    %s11 = scalar_lea.sflag [#allocation3], 1
    %12 = vsyncpa %s11, 0
    %13 = vsyncpa [#allocation4], 0
    %s14 = scalar_lea.sflag [#allocation4], 1
    %15 = vsyncpa %s14, 0
    loop: start=0, step=1, limit=4
    $region2: #{tpu_custom_call.1} parent=1 // loop_pre_header
      _
    $region3: #{tpu_custom_call.1} parent=1 // loop_header
      %s17 = sphi 0, %s21
      %p18 = scmp.ge.s32.totalorder %s17, 4
      %s24 = sphi 0, %s36
      %s25 = sphi 0, %s32
      %s26 = sphi 0, %s24
      %s27 = sphi 0, %s25
      %s28 = sphi 0, %s26
      %s29 = sphi 0, %s27
      %s37 = sphi 0, %s37
      %s39 = sphi 0, %s37
      %s40 = sphi 0, %s39
      %s54 = sphi 0, %s40
      %s58 = sphi 0, %s58
      %s60 = sphi 0, %s58
      %s61 = sphi 0, %s60
      %s75 = sphi 0, %s61
      %s83 = sphi 0, %s85
      %s86 = sphi 0, %s83
      %s87 = sphi 0, %s86
      %s103 = sphi 0, %s87
      %s111 = sphi 0, %s113
      %s114 = sphi 0, %s111
      %s115 = sphi 0, %s114
      %s131 = sphi 0, %s115
    $region4: #{tpu_custom_call.1} parent=1 // loop_header_branch
      %20 = sbr.rel (%p18) target = $region8
    $region5: #{tpu_custom_call.1} parent=1 // loop_body
      %s22 = ssub.s32 %s17, 1
      %s23 = ssub.s32 %s17, 2
      %s30 = sadd.s32 1, %s25
      %p31 = scmp.ge.s32.totalorder %s30, 1
      %s32 = scalar_select %p31, 0, %s30
      %s33 = sadd.s32 1, %s24
      %s34 = scalar_select %p31, %s33, %s24
      %p35 = scmp.ge.s32.totalorder %s34, 2
      %s36 = scalar_select %p35, 0, %s34
      %s38 = sadd.s32 %s37, 1
      %p41 = scmp.eq.s32.totalorder %s17, 1
      %p42 = scmp.ne.s32.totalorder %s37, %s39
      %p43 = scmp.eq.s32.totalorder %s17, 0
      %p44 = por %p42, %p43
      %p45 = scmp.ne.s32.totalorder %s37, %s39
      %p46 = scmp.eq.s32.totalorder %s22, 1
      %p47 = por %p45, %p46
      %p48 = scmp.ne.s32.totalorder %s39, %s40
      %p49 = scmp.eq.s32.totalorder %s22, 0
      %p50 = por %p48, %p49
      %p51 = scmp.ne.s32.totalorder %s39, %s40
      %p52 = scmp.eq.s32.totalorder %s23, 1
      %p53 = por %p51, %p52
      %p55 = scmp.ne.s32.totalorder %s40, %s54
      %p56 = scmp.eq.s32.totalorder %s23, 0
      %p57 = por %p55, %p56
      %s59 = sadd.s32 %s58, 1
      %p62 = scmp.eq.s32.totalorder %s17, 1
      %p63 = scmp.ne.s32.totalorder %s58, %s60
      %p64 = scmp.eq.s32.totalorder %s17, 0
      %p65 = por %p63, %p64
      %p66 = scmp.ne.s32.totalorder %s58, %s60
      %p67 = scmp.eq.s32.totalorder %s22, 1
      %p68 = por %p66, %p67
      %p69 = scmp.ne.s32.totalorder %s60, %s61
      %p70 = scmp.eq.s32.totalorder %s22, 0
      %p71 = por %p69, %p70
      %p72 = scmp.ne.s32.totalorder %s60, %s61
      %p73 = scmp.eq.s32.totalorder %s23, 1
      %p74 = por %p72, %p73
      %p76 = scmp.ne.s32.totalorder %s61, %s75
      %p77 = scmp.eq.s32.totalorder %s23, 0
      %p78 = por %p76, %p77
      %s79 = ssub.s32 %s24, %s36
      %s80 = ssub.s32 %s25, %s32
      %s81 = sor.u32 %s79, %s80
      %p82 = scmp.eq.s32.totalorder %s81, 0
      %s84 = sadd.s32 %s83, 1
      %s85 = scalar_select %p82, %s83, %s84
      %p88 = pneg %p82
      %p89 = scmp.eq.s32.totalorder %s17, 1
      %p90 = por %p88, %p89
      %p91 = scmp.ne.s32.totalorder %s83, %s86
      %p92 = scmp.eq.s32.totalorder %s17, 0
      %p93 = por %p91, %p92
      %p94 = scmp.ne.s32.totalorder %s83, %s86
      %p95 = scmp.eq.s32.totalorder %s22, 1
      %p96 = por %p94, %p95
      %p97 = scmp.ne.s32.totalorder %s86, %s87
      %p98 = scmp.eq.s32.totalorder %s22, 0
      %p99 = por %p97, %p98
      %p100 = scmp.ne.s32.totalorder %s86, %s87
      %p101 = scmp.eq.s32.totalorder %s23, 1
      %p102 = por %p100, %p101
      %p104 = scmp.ne.s32.totalorder %s87, %s103
      %p105 = scmp.eq.s32.totalorder %s23, 0
      %p106 = por %p104, %p105
      %s107 = ssub.s32 %s24, %s36
      %s108 = ssub.s32 %s25, %s32
      %s109 = sor.u32 %s107, %s108
      %p110 = scmp.eq.s32.totalorder %s109, 0
      %s112 = sadd.s32 %s111, 1
      %s113 = scalar_select %p110, %s111, %s112
      %p116 = pneg %p110
      %p117 = scmp.eq.s32.totalorder %s17, 1
      %p118 = por %p116, %p117
      %p119 = scmp.ne.s32.totalorder %s111, %s114
      %p120 = scmp.eq.s32.totalorder %s17, 0
      %p121 = por %p119, %p120
      %p122 = scmp.ne.s32.totalorder %s111, %s114
      %p123 = scmp.eq.s32.totalorder %s22, 1
      %p124 = por %p122, %p123
      %p125 = scmp.ne.s32.totalorder %s114, %s115
      %p126 = scmp.eq.s32.totalorder %s22, 0
      %p127 = por %p125, %p126
      %p128 = scmp.ne.s32.totalorder %s114, %s115
      %p129 = scmp.eq.s32.totalorder %s23, 1
      %p130 = por %p128, %p129
      %p132 = scmp.ne.s32.totalorder %s115, %s131
      %p133 = scmp.eq.s32.totalorder %s23, 0
      %p134 = por %p132, %p133
      %p135 = scmp.le.s32.totalorder 1, %s17
      %p136 = scmp.lt.s32.totalorder %s17, 3
      %p137 = pnand %p135, %p136
      %p138 = pneg %p137
      // Predicated region
      $region9: #{tpu_custom_call.1} parent=5 // pred_check
        _
      $region10: #{tpu_custom_call.1} parent=5 // pred_check_branch
        %140 = sbr.rel (%p137) target = $region12
      $region11: #{tpu_custom_call.1} parent=5 // pred_region
        %s141 = ssub.s32 %s17, 1
        // Predicated region
        $region13: #{tpu_custom_call.1} parent=11 // pred_check
          %p142 = pneg %p50
        $region14: #{tpu_custom_call.1} parent=11 // pred_check_branch
          %144 = sbr.rel (%p142) target = $region16
        $region15: #{tpu_custom_call.1} parent=11 // pred_region
          %s146 = ssub.s32 48, 48
          %147 = vsyncadd [#allocation5], %s146
          %150 = dma.hbm_to_smem %s0, 48, [#allocation2], [#allocation5]
        $region16: #{tpu_custom_call.1} parent=11 // pred_fallthru
          _
        // Predicated region
        $region17: #{tpu_custom_call.1} parent=11 // pred_check
          %p151 = pneg %p71
        $region18: #{tpu_custom_call.1} parent=11 // pred_check_branch
          %153 = sbr.rel (%p151) target = $region20
        $region19: #{tpu_custom_call.1} parent=11 // pred_region
          %s155 = ssub.s32 16, 16
          %156 = vsyncadd [#allocation6], %s155
          %s158 = sshll.u32 %s1, 4
          %s159 = int_to_ptr.vmem [resolvable:$true] %s158
          %161 = dma.vmem_to_smem %s159, 16, [#allocation7], [#allocation6]
        $region20: #{tpu_custom_call.1} parent=11 // pred_fallthru
          _
      $region12: #{tpu_custom_call.1} parent=5 // pred_fallthru
        _
      %p162 = scmp.lt.s32.totalorder %s17, 2
      // Predicated region
      $region21: #{tpu_custom_call.1} parent=5 // pred_check
        %p163 = pneg %p162
      $region22: #{tpu_custom_call.1} parent=5 // pred_check_branch
        %165 = sbr.rel (%p163) target = $region24
      $region23: #{tpu_custom_call.1} parent=5 // pred_region
        // Predicated region
        $region25: #{tpu_custom_call.1} parent=23 // pred_check
          %p166 = pneg %p93
        $region26: #{tpu_custom_call.1} parent=23 // pred_check_branch
          %168 = sbr.rel (%p166) target = $region28
        $region27: #{tpu_custom_call.1} parent=23 // pred_region
          %s169 = sand.u32 %s83, 1
          %s170 = scalar_lea.sflag [#allocation3], %s169
          %s171 = sand.u32 %s83, 1
          %s172 = smul.addr %s171, 18
          %s173 = scalar_lea.vmem [#allocation8], %s172
          %s175 = ssub.s32 288, 288
          %176 = vsyncadd %s170, %s175
          %s177 = smul.addr %s24, 9
          %s178 = sadd.s32 %s25, %s177
          %s179 = smul.addr %s178, 32
          %s180 = scalar_lea.hbm %s2, %s179
          %s181 = sshll.u32 %s173, 4
          %s182 = int_to_ptr.vmem [resolvable:$true] %s181
          %187 = dma.hbm_to_vmem [thread:$0]  %s180, 288, %s182, %s170, 32, 32, 2
        $region28: #{tpu_custom_call.1} parent=23 // pred_fallthru
          _
      $region24: #{tpu_custom_call.1} parent=5 // pred_fallthru
        _
      %p188 = scmp.le.s32.totalorder 1, %s17
      %p189 = scmp.lt.s32.totalorder %s17, 3
      %p190 = pnand %p188, %p189
      %p191 = pneg %p190
      // Predicated region
      $region29: #{tpu_custom_call.1} parent=5 // pred_check
        _
      $region30: #{tpu_custom_call.1} parent=5 // pred_check_branch
        %193 = sbr.rel (%p190) target = $region32
      $region31: #{tpu_custom_call.1} parent=5 // pred_region
        %s194 = ssub.s32 %s17, 1
        // Predicated region
        $region33: #{tpu_custom_call.1} parent=31 // pred_check
          %p195 = pneg %p50
        $region34: #{tpu_custom_call.1} parent=31 // pred_check_branch
          %197 = sbr.rel (%p195) target = $region36
        $region35: #{tpu_custom_call.1} parent=31 // pred_region
          %198 = dma.done [#allocation5], 48
        $region36: #{tpu_custom_call.1} parent=31 // pred_fallthru
          _
        // Predicated region
        $region37: #{tpu_custom_call.1} parent=31 // pred_check
          %p199 = pneg %p71
        $region38: #{tpu_custom_call.1} parent=31 // pred_check_branch
          %201 = sbr.rel (%p199) target = $region40
        $region39: #{tpu_custom_call.1} parent=31 // pred_region
          %202 = dma.done [#allocation6], 16
        $region40: #{tpu_custom_call.1} parent=31 // pred_fallthru
          _
        %s203 = sand.u32 %s86, 1
        %s204 = scalar_lea.sflag [#allocation3], %s203
        %s205 = sand.u32 %s86, 1
        %s206 = smul.addr %s205, 18
        %s207 = scalar_lea.vmem [#allocation8], %s206
        // Predicated region
        $region41: #{tpu_custom_call.1} parent=31 // pred_check
          %p208 = pneg %p99
        $region42: #{tpu_custom_call.1} parent=31 // pred_check_branch
          %210 = sbr.rel (%p208) target = $region44
        $region43: #{tpu_custom_call.1} parent=31 // pred_region
          %211 = dma.done %s204, 288
        $region44: #{tpu_custom_call.1} parent=31 // pred_fallthru
          _
        %212 = sfence
        %p213 = pneg %p50
        %p214 = pneg %p47
        %p215 = pneg %p71
        %p216 = pneg %p68
        %s217 = sand.u32 %s86, 1
        %s218 = scalar_lea.sflag [#allocation3], %s217
        %s219 = sand.u32 %s86, 1
        %s220 = smul.addr %s219, 18
        %s221 = scalar_lea.vmem [#allocation8], %s220
        %p222 = pneg %p99
        %p223 = pneg %p96
        %p224 = pneg %p127
        %p225 = pneg %p124
        %s226 = sand.u32 %s114, 1
        %s227 = scalar_lea.sflag [#allocation4], %s226
        %s228 = sand.u32 %s114, 1
        %s229 = smul.addr %s228, 64
        %s230 = scalar_lea.vmem [#allocation9], %s229
        %s231 = sld [smem:[#allocation2]]
        %s232 = sld [smem:[#allocation2 + $0x1]]
        %s233 = sld [smem:[#allocation2 + $0x2]]
        %s234 = sld [smem:[#allocation2 + $0x3]]
        %s235 = sld [smem:[#allocation2 + $0x4]]
        %s236 = sld [smem:[#allocation2 + $0x5]]
        %s237 = sld [smem:[#allocation2 + $0x6]]
        %s238 = sld [smem:[#allocation2 + $0x7]]
        %s239 = sld [smem:[#allocation2 + $0x8]]
        %s240 = sld [smem:[#allocation2 + $0x9]]
        %s241 = sld [smem:[#allocation2 + $0xa]]
        %s242 = sld [smem:[#allocation2 + $0xb]]
        %s243 = sld [smem:[#allocation2 + $0xc]]
        %s244 = sld [smem:[#allocation2 + $0xd]]
        %s245 = sld [smem:[#allocation2 + $0xe]]
        %s246 = sld [smem:[#allocation2 + $0xf]]
        %s247 = sld [smem:[#allocation2 + $0x10]]
        %s248 = sld [smem:[#allocation2 + $0x11]]
        %s249 = sld [smem:[#allocation2 + $0x12]]
        %s250 = sld [smem:[#allocation2 + $0x13]]
        %s251 = sld [smem:[#allocation2 + $0x14]]
        %s252 = sld [smem:[#allocation2 + $0x15]]
        %s253 = sld [smem:[#allocation2 + $0x16]]
        %s254 = sld [smem:[#allocation2 + $0x17]]
        %s255 = sld [smem:[#allocation2 + $0x18]]
        %s256 = sld [smem:[#allocation2 + $0x19]]
        %s257 = sld [smem:[#allocation2 + $0x1a]]
        %s258 = sld [smem:[#allocation2 + $0x1b]]
        %s259 = sld [smem:[#allocation2 + $0x1c]]
        %s260 = sld [smem:[#allocation2 + $0x1d]]
        %s261 = sld [smem:[#allocation2 + $0x1e]]
        %s262 = sld [smem:[#allocation2 + $0x1f]]
        %s263 = sld [smem:[#allocation2 + $0x20]]
        %s264 = sld [smem:[#allocation2 + $0x21]]
        %s265 = sld [smem:[#allocation2 + $0x22]]
        %s266 = sld [smem:[#allocation2 + $0x23]]
        %s267 = sld [smem:[#allocation2 + $0x24]]
        %s268 = sld [smem:[#allocation2 + $0x25]]
        %s269 = sld [smem:[#allocation2 + $0x26]]
        %s270 = sld [smem:[#allocation2 + $0x27]]
        %s271 = sld [smem:[#allocation2 + $0x28]]
        %s272 = sld [smem:[#allocation2 + $0x29]]
        %s273 = sld [smem:[#allocation2 + $0x2a]]
        %s274 = sld [smem:[#allocation2 + $0x2b]]
        %s275 = sld [smem:[#allocation2 + $0x2c]]
        %s276 = sld [smem:[#allocation2 + $0x2d]]
        %s277 = sld [smem:[#allocation2 + $0x2e]]
        %s278 = sld [smem:[#allocation2 + $0x2f]]
        %s279 = sld [smem:[#allocation2 + $0x30]]
        %s280 = sld [smem:[#allocation2 + $0x31]]
        %s281 = sld [smem:[#allocation2 + $0x32]]
        %s282 = sld [smem:[#allocation2 + $0x33]]
        %s283 = sld [smem:[#allocation2 + $0x34]]
        %s284 = sld [smem:[#allocation2 + $0x35]]
        %s285 = sld [smem:[#allocation2 + $0x36]]
        %s286 = sld [smem:[#allocation2 + $0x37]]
        %s287 = sld [smem:[#allocation2 + $0x38]]
        %s288 = sld [smem:[#allocation2 + $0x39]]
        %s289 = sld [smem:[#allocation2 + $0x3a]]
        %s290 = sld [smem:[#allocation2 + $0x3b]]
        %s291 = sld [smem:[#allocation2 + $0x3c]]
        %s292 = sld [smem:[#allocation2 + $0x3d]]
        %s293 = sld [smem:[#allocation2 + $0x3e]]
        %s294 = sld [smem:[#allocation2 + $0x3f]]
        %s295 = sld [smem:[#allocation2 + $0x40]]
        %s296 = sld [smem:[#allocation2 + $0x41]]
        %s297 = sld [smem:[#allocation2 + $0x42]]
        %s298 = sld [smem:[#allocation2 + $0x43]]
        %s299 = sld [smem:[#allocation2 + $0x44]]
        %s300 = sld [smem:[#allocation2 + $0x45]]
        %s301 = sld [smem:[#allocation2 + $0x46]]
        %s302 = sld [smem:[#allocation2 + $0x47]]
        %s303 = sld [smem:[#allocation2 + $0x48]]
        %s304 = sld [smem:[#allocation2 + $0x49]]
        %s305 = sld [smem:[#allocation2 + $0x4a]]
        %s306 = sld [smem:[#allocation2 + $0x4b]]
        %s307 = sld [smem:[#allocation2 + $0x4c]]
        %s308 = sld [smem:[#allocation2 + $0x4d]]
        %s309 = sld [smem:[#allocation2 + $0x4e]]
        %s310 = sld [smem:[#allocation2 + $0x4f]]
        %s311 = sld [smem:[#allocation2 + $0x50]]
        %s312 = sld [smem:[#allocation2 + $0x51]]
        %s313 = sld [smem:[#allocation2 + $0x52]]
        %s314 = sld [smem:[#allocation2 + $0x53]]
        %s315 = sld [smem:[#allocation2 + $0x54]]
        %s316 = sld [smem:[#allocation2 + $0x55]]
        %s317 = sld [smem:[#allocation2 + $0x56]]
        %s318 = sld [smem:[#allocation2 + $0x57]]
        %s319 = sld [smem:[#allocation2 + $0x58]]
        %s320 = sld [smem:[#allocation2 + $0x59]]
        %s321 = sld [smem:[#allocation2 + $0x5a]]
        %s322 = sld [smem:[#allocation2 + $0x5b]]
        %s323 = sld [smem:[#allocation2 + $0x5c]]
        %s324 = sld [smem:[#allocation2 + $0x5d]]
        %s325 = sld [smem:[#allocation2 + $0x5e]]
        %s326 = sld [smem:[#allocation2 + $0x5f]]
        %s327 = sld [smem:[#allocation2 + $0x60]]
        %s328 = sld [smem:[#allocation2 + $0x61]]
        %s329 = sld [smem:[#allocation2 + $0x62]]
        %s330 = sld [smem:[#allocation2 + $0x63]]
        %s331 = sld [smem:[#allocation2 + $0x64]]
        %s332 = sld [smem:[#allocation2 + $0x65]]
        %s333 = sld [smem:[#allocation2 + $0x66]]
        %s334 = sld [smem:[#allocation2 + $0x67]]
        %s335 = sld [smem:[#allocation2 + $0x68]]
        %s336 = sld [smem:[#allocation2 + $0x69]]
        %s337 = sld [smem:[#allocation2 + $0x6a]]
        %s338 = sld [smem:[#allocation2 + $0x6b]]
        %s339 = sld [smem:[#allocation2 + $0x6c]]
        %s340 = sld [smem:[#allocation2 + $0x6d]]
        %s341 = sld [smem:[#allocation2 + $0x6e]]
        %s342 = sld [smem:[#allocation2 + $0x6f]]
        %s343 = sld [smem:[#allocation2 + $0x70]]
        %s344 = sld [smem:[#allocation2 + $0x71]]
        %s345 = sld [smem:[#allocation2 + $0x72]]
        %s346 = sld [smem:[#allocation2 + $0x73]]
        %s347 = sld [smem:[#allocation2 + $0x74]]
        %s348 = sld [smem:[#allocation2 + $0x75]]
        %s349 = sld [smem:[#allocation2 + $0x76]]
        %s350 = sld [smem:[#allocation2 + $0x77]]
        %s351 = sld [smem:[#allocation2 + $0x78]]
        %s352 = sld [smem:[#allocation2 + $0x79]]
        %s353 = sld [smem:[#allocation2 + $0x7a]]
        %s354 = sld [smem:[#allocation2 + $0x7b]]
        %s355 = sld [smem:[#allocation2 + $0x7c]]
        %s356 = sld [smem:[#allocation2 + $0x7d]]
        %s357 = sld [smem:[#allocation2 + $0x7e]]
        %s358 = sld [smem:[#allocation2 + $0x7f]]
        %s359 = sld [smem:[#allocation2 + $0x80]]
        %s360 = sld [smem:[#allocation2 + $0x81]]
        %s361 = sld [smem:[#allocation2 + $0x82]]
        %s362 = sld [smem:[#allocation2 + $0x83]]
        %s363 = sld [smem:[#allocation2 + $0x84]]
        %s364 = sld [smem:[#allocation2 + $0x85]]
        %s365 = sld [smem:[#allocation2 + $0x86]]
        %s366 = sld [smem:[#allocation2 + $0x87]]
        %s367 = sld [smem:[#allocation2 + $0x88]]
        %s368 = sld [smem:[#allocation2 + $0x89]]
        %s369 = sld [smem:[#allocation2 + $0x8a]]
        %s370 = sld [smem:[#allocation2 + $0x8b]]
        %s371 = sld [smem:[#allocation2 + $0x8c]]
        %s372 = sld [smem:[#allocation2 + $0x8d]]
        %s373 = sld [smem:[#allocation2 + $0x8e]]
        %s374 = sld [smem:[#allocation2 + $0x8f]]
        %s375 = sld [smem:[#allocation2 + $0x90]]
        %s376 = sld [smem:[#allocation2 + $0x91]]
        %s377 = sld [smem:[#allocation2 + $0x92]]
        %s378 = sld [smem:[#allocation2 + $0x93]]
        %s379 = sld [smem:[#allocation2 + $0x94]]
        %s380 = sld [smem:[#allocation2 + $0x95]]
        %s381 = sld [smem:[#allocation2 + $0x96]]
        %s382 = sld [smem:[#allocation2 + $0x97]]
        %s383 = sld [smem:[#allocation2 + $0x98]]
        %s384 = sld [smem:[#allocation2 + $0x99]]
        %s385 = sld [smem:[#allocation2 + $0x9a]]
        %s386 = sld [smem:[#allocation2 + $0x9b]]
        %s387 = sld [smem:[#allocation2 + $0x9c]]
        %s388 = sld [smem:[#allocation2 + $0x9d]]
        %s389 = sld [smem:[#allocation2 + $0x9e]]
        %s390 = sld [smem:[#allocation2 + $0x9f]]
        %s391 = sld [smem:[#allocation2 + $0xa0]]
        %s392 = sld [smem:[#allocation2 + $0xa1]]
        %s393 = sld [smem:[#allocation2 + $0xa2]]
        %s394 = sld [smem:[#allocation2 + $0xa3]]
        %s395 = sld [smem:[#allocation2 + $0xa4]]
        %s396 = sld [smem:[#allocation2 + $0xa5]]
        %s397 = sld [smem:[#allocation2 + $0xa6]]
        %s398 = sld [smem:[#allocation2 + $0xa7]]
        %s399 = sld [smem:[#allocation2 + $0xa8]]
        %s400 = sld [smem:[#allocation2 + $0xa9]]
        %s401 = sld [smem:[#allocation2 + $0xaa]]
        %s402 = sld [smem:[#allocation2 + $0xab]]
        %s403 = sld [smem:[#allocation2 + $0xac]]
        %s404 = sld [smem:[#allocation2 + $0xad]]
        %s405 = sld [smem:[#allocation2 + $0xae]]
        %s406 = sld [smem:[#allocation2 + $0xaf]]
        %s407 = sld [smem:[#allocation2 + $0xb0]]
        %s408 = sld [smem:[#allocation2 + $0xb1]]
        %s409 = sld [smem:[#allocation2 + $0xb2]]
        %s410 = sld [smem:[#allocation2 + $0xb3]]
        %s411 = sld [smem:[#allocation2 + $0xb4]]
        %s412 = sld [smem:[#allocation2 + $0xb5]]
        %s413 = sld [smem:[#allocation2 + $0xb6]]
        %s414 = sld [smem:[#allocation2 + $0xb7]]
        %s415 = sld [smem:[#allocation2 + $0xb8]]
        %s416 = sld [smem:[#allocation2 + $0xb9]]
        %s417 = sld [smem:[#allocation2 + $0xba]]
        %s418 = sld [smem:[#allocation2 + $0xbb]]
        %s419 = sld [smem:[#allocation2 + $0xbc]]
        %s420 = sld [smem:[#allocation2 + $0xbd]]
        %s421 = sld [smem:[#allocation2 + $0xbe]]
        %s422 = sld [smem:[#allocation2 + $0xbf]]
        %s423 = sld [smem:[#allocation2 + $0xc0]]
        %s424 = sld [smem:[#allocation2 + $0xc1]]
        %s425 = sld [smem:[#allocation2 + $0xc2]]
        %s426 = sld [smem:[#allocation2 + $0xc3]]
        %s427 = sld [smem:[#allocation2 + $0xc4]]
        %s428 = sld [smem:[#allocation2 + $0xc5]]
        %s429 = sld [smem:[#allocation2 + $0xc6]]
        %s430 = sld [smem:[#allocation2 + $0xc7]]
        %s431 = sld [smem:[#allocation2 + $0xc8]]
        %s432 = sld [smem:[#allocation2 + $0xc9]]
        %s433 = sld [smem:[#allocation2 + $0xca]]
        %s434 = sld [smem:[#allocation2 + $0xcb]]
        %s435 = sld [smem:[#allocation2 + $0xcc]]
        %s436 = sld [smem:[#allocation2 + $0xcd]]
        %s437 = sld [smem:[#allocation2 + $0xce]]
        %s438 = sld [smem:[#allocation2 + $0xcf]]
        %s439 = sld [smem:[#allocation2 + $0xd0]]
        %s440 = sld [smem:[#allocation2 + $0xd1]]
        %s441 = sld [smem:[#allocation2 + $0xd2]]
        %s442 = sld [smem:[#allocation2 + $0xd3]]
        %s443 = sld [smem:[#allocation2 + $0xd4]]
        %s444 = sld [smem:[#allocation2 + $0xd5]]
        %s445 = sld [smem:[#allocation2 + $0xd6]]
        %s446 = sld [smem:[#allocation2 + $0xd7]]
        %s447 = sld [smem:[#allocation2 + $0xd8]]
        %s448 = sld [smem:[#allocation2 + $0xd9]]
        %s449 = sld [smem:[#allocation2 + $0xda]]
        %s450 = sld [smem:[#allocation2 + $0xdb]]
        %s451 = sld [smem:[#allocation2 + $0xdc]]
        %s452 = sld [smem:[#allocation2 + $0xdd]]
        %s453 = sld [smem:[#allocation2 + $0xde]]
        %s454 = sld [smem:[#allocation2 + $0xdf]]
        %s455 = sld [smem:[#allocation2 + $0xe0]]
        %s456 = sld [smem:[#allocation2 + $0xe1]]
        %s457 = sld [smem:[#allocation2 + $0xe2]]
        %s458 = sld [smem:[#allocation2 + $0xe3]]
        %s459 = sld [smem:[#allocation2 + $0xe4]]
        %s460 = sld [smem:[#allocation2 + $0xe5]]
        %s461 = sld [smem:[#allocation2 + $0xe6]]
        %s462 = sld [smem:[#allocation2 + $0xe7]]
        %s463 = sld [smem:[#allocation2 + $0xe8]]
        %s464 = sld [smem:[#allocation2 + $0xe9]]
        %s465 = sld [smem:[#allocation2 + $0xea]]
        %s466 = sld [smem:[#allocation2 + $0xeb]]
        %s467 = sld [smem:[#allocation2 + $0xec]]
        %s468 = sld [smem:[#allocation2 + $0xed]]
        %s469 = sld [smem:[#allocation2 + $0xee]]
        %s470 = sld [smem:[#allocation2 + $0xef]]
        %s471 = sld [smem:[#allocation2 + $0xf0]]
        %s472 = sld [smem:[#allocation2 + $0xf1]]
        %s473 = sld [smem:[#allocation2 + $0xf2]]
        %s474 = sld [smem:[#allocation2 + $0xf3]]
        %s475 = sld [smem:[#allocation2 + $0xf4]]
        %s476 = sld [smem:[#allocation2 + $0xf5]]
        %s477 = sld [smem:[#allocation2 + $0xf6]]
        %s478 = sld [smem:[#allocation2 + $0xf7]]
        %s479 = sld [smem:[#allocation2 + $0xf8]]
        %s480 = sld [smem:[#allocation2 + $0xf9]]
        %s481 = sld [smem:[#allocation2 + $0xfa]]
        %s482 = sld [smem:[#allocation2 + $0xfb]]
        %s483 = sld [smem:[#allocation2 + $0xfc]]
        %s484 = sld [smem:[#allocation2 + $0xfd]]
        %s485 = sld [smem:[#allocation2 + $0xfe]]
        %s486 = sld [smem:[#allocation2 + $0xff]]
        %s487 = sld [smem:[#allocation2 + $0x100]]
        %s488 = sld [smem:[#allocation2 + $0x101]]
        %s489 = sld [smem:[#allocation2 + $0x102]]
        %s490 = sld [smem:[#allocation2 + $0x103]]
        %s491 = sld [smem:[#allocation2 + $0x104]]
        %s492 = sld [smem:[#allocation2 + $0x105]]
        %s493 = sld [smem:[#allocation2 + $0x106]]
        %s494 = sld [smem:[#allocation2 + $0x107]]
        %s495 = sld [smem:[#allocation2 + $0x108]]
        %s496 = sld [smem:[#allocation2 + $0x109]]
        %s497 = sld [smem:[#allocation2 + $0x10a]]
        %s498 = sld [smem:[#allocation2 + $0x10b]]
        %s499 = sld [smem:[#allocation2 + $0x10c]]
        %s500 = sld [smem:[#allocation2 + $0x10d]]
        %s501 = sld [smem:[#allocation2 + $0x10e]]
        %s502 = sld [smem:[#allocation2 + $0x10f]]
        %s503 = sld [smem:[#allocation2 + $0x110]]
        %s504 = sld [smem:[#allocation2 + $0x111]]
        %s505 = sld [smem:[#allocation2 + $0x112]]
        %s506 = sld [smem:[#allocation2 + $0x113]]
        %s507 = sld [smem:[#allocation2 + $0x114]]
        %s508 = sld [smem:[#allocation2 + $0x115]]
        %s509 = sld [smem:[#allocation2 + $0x116]]
        %s510 = sld [smem:[#allocation2 + $0x117]]
        %s511 = sld [smem:[#allocation2 + $0x118]]
        %s512 = sld [smem:[#allocation2 + $0x119]]
        %s513 = sld [smem:[#allocation2 + $0x11a]]
        %s514 = sld [smem:[#allocation2 + $0x11b]]
        %s515 = sld [smem:[#allocation2 + $0x11c]]
        %s516 = sld [smem:[#allocation2 + $0x11d]]
        %s517 = sld [smem:[#allocation2 + $0x11e]]
        %s518 = sld [smem:[#allocation2 + $0x11f]]
        %s519 = sld [smem:[#allocation7]]
        %s520 = sld [smem:[#allocation7 + $0x1]]
        %s521 = sld [smem:[#allocation7 + $0x2]]
        %s522 = sld [smem:[#allocation7 + $0x3]]
        %s523 = sld [smem:[#allocation7 + $0x4]]
        %s524 = sld [smem:[#allocation7 + $0x5]]
        %s525 = sld [smem:[#allocation7 + $0x6]]
        %s526 = sld [smem:[#allocation7 + $0x7]]
        %s527 = sld [smem:[#allocation7 + $0x8]]
        %s528 = sld [smem:[#allocation7 + $0x9]]
        %s529 = sld [smem:[#allocation7 + $0xa]]
        %s530 = sld [smem:[#allocation7 + $0xb]]
        %s531 = sld [smem:[#allocation7 + $0xc]]
        %s532 = sld [smem:[#allocation7 + $0xd]]
        %s533 = sld [smem:[#allocation7 + $0xe]]
        %s534 = sld [smem:[#allocation7 + $0xf]]
        %s535 = sld [smem:[#allocation7 + $0x10]]
        %s536 = sld [smem:[#allocation7 + $0x11]]
        %s537 = sld [smem:[#allocation7 + $0x12]]
        %s538 = sld [smem:[#allocation7 + $0x13]]
        %s539 = sld [smem:[#allocation7 + $0x14]]
        %s540 = sld [smem:[#allocation7 + $0x15]]
        %s541 = sld [smem:[#allocation7 + $0x16]]
        %s542 = sld [smem:[#allocation7 + $0x17]]
        %s543 = sld [smem:[#allocation7 + $0x18]]
        %s544 = sld [smem:[#allocation7 + $0x19]]
        %s545 = sld [smem:[#allocation7 + $0x1a]]
        %s546 = sld [smem:[#allocation7 + $0x1b]]
        %s547 = sld [smem:[#allocation7 + $0x1c]]
        %s548 = sld [smem:[#allocation7 + $0x1d]]
        %s549 = sld [smem:[#allocation7 + $0x1e]]
        %s550 = sld [smem:[#allocation7 + $0x1f]]
        %v551 = vld [vmem:[%s207] sm:$0x3]
        %s552 = scalar_lea.vmem %s207, 2 [#allocation8]
        %v553 = vld [vmem:[%s552] sm:$0x3]
        %s554 = scalar_lea.vmem %s207, 4 [#allocation8]
        %v555 = vld [vmem:[%s554] sm:$0x3]
        %s556 = scalar_lea.vmem %s207, 6 [#allocation8]
        %v557 = vld [vmem:[%s556] sm:$0x3]
        %s558 = scalar_lea.vmem %s207, 8 [#allocation8]
        %v559 = vld [vmem:[%s558] sm:$0x3]
        %s560 = scalar_lea.vmem %s207, 10 [#allocation8]
        %v561 = vld [vmem:[%s560] sm:$0x3]
        %s562 = scalar_lea.vmem %s207, 12 [#allocation8]
        %v563 = vld [vmem:[%s562] sm:$0x3]
        %s564 = scalar_lea.vmem %s207, 14 [#allocation8]
        %v565 = vld [vmem:[%s564] sm:$0x3]
        %s566 = scalar_lea.vmem %s207, 16 [#allocation8]
        %v567 = vld [vmem:[%s566] sm:$0x3]
        %v568 = vstv %s519
        %v569 = vstv %s231
        %v570 = vmul.f32 %v551, %v569
        %v571 = vadd.f32 %v568, %v570
        %v572 = vstv %s232
        %v573 = vmul.f32 %v553, %v572
        %v574 = vadd.f32 %v571, %v573
        %v575 = vstv %s233
        %v576 = vmul.f32 %v555, %v575
        %v577 = vadd.f32 %v574, %v576
        %v578 = vstv %s234
        %v579 = vmul.f32 %v557, %v578
        %v580 = vadd.f32 %v577, %v579
        %v581 = vstv %s235
        %v582 = vmul.f32 %v559, %v581
        %v583 = vadd.f32 %v580, %v582
        %v584 = vstv %s236
        %v585 = vmul.f32 %v561, %v584
        %v586 = vadd.f32 %v583, %v585
        %v587 = vstv %s237
        %v588 = vmul.f32 %v563, %v587
        %v589 = vadd.f32 %v586, %v588
        %v590 = vstv %s238
        %v591 = vmul.f32 %v565, %v590
        %v592 = vadd.f32 %v589, %v591
        %v593 = vstv %s239
        %v594 = vmul.f32 %v567, %v593
        %v595 = vadd.f32 %v592, %v594
        %596 = vst [vmem:[%s230] sm:$0x3] %v595
        %v597 = vstv %s520
        %v598 = vstv %s240
        %v599 = vmul.f32 %v551, %v598
        %v600 = vadd.f32 %v597, %v599
        %v601 = vstv %s241
        %v602 = vmul.f32 %v553, %v601
        %v603 = vadd.f32 %v600, %v602
        %v604 = vstv %s242
        %v605 = vmul.f32 %v555, %v604
        %v606 = vadd.f32 %v603, %v605
        %v607 = vstv %s243
        %v608 = vmul.f32 %v557, %v607
        %v609 = vadd.f32 %v606, %v608
        %v610 = vstv %s244
        %v611 = vmul.f32 %v559, %v610
        %v612 = vadd.f32 %v609, %v611
        %v613 = vstv %s245
        %v614 = vmul.f32 %v561, %v613
        %v615 = vadd.f32 %v612, %v614
        %v616 = vstv %s246
        %v617 = vmul.f32 %v563, %v616
        %v618 = vadd.f32 %v615, %v617
        %v619 = vstv %s247
        %v620 = vmul.f32 %v565, %v619
        %v621 = vadd.f32 %v618, %v620
        %v622 = vstv %s248
        %v623 = vmul.f32 %v567, %v622
        %v624 = vadd.f32 %v621, %v623
        %s625 = scalar_lea.vmem %s230, 2 [#allocation9]
        %626 = vst [vmem:[%s625] sm:$0x3] %v624
        %v627 = vstv %s521
        %v628 = vstv %s249
        %v629 = vmul.f32 %v551, %v628
        %v630 = vadd.f32 %v627, %v629
        %v631 = vstv %s250
        %v632 = vmul.f32 %v553, %v631
        %v633 = vadd.f32 %v630, %v632
        %v634 = vstv %s251
        %v635 = vmul.f32 %v555, %v634
        %v636 = vadd.f32 %v633, %v635
        %v637 = vstv %s252
        %v638 = vmul.f32 %v557, %v637
        %v639 = vadd.f32 %v636, %v638
        %v640 = vstv %s253
        %v641 = vmul.f32 %v559, %v640
        %v642 = vadd.f32 %v639, %v641
        %v643 = vstv %s254
        %v644 = vmul.f32 %v561, %v643
        %v645 = vadd.f32 %v642, %v644
        %v646 = vstv %s255
        %v647 = vmul.f32 %v563, %v646
        %v648 = vadd.f32 %v645, %v647
        %v649 = vstv %s256
        %v650 = vmul.f32 %v565, %v649
        %v651 = vadd.f32 %v648, %v650
        %v652 = vstv %s257
        %v653 = vmul.f32 %v567, %v652
        %v654 = vadd.f32 %v651, %v653
        %s655 = scalar_lea.vmem %s230, 4 [#allocation9]
        %656 = vst [vmem:[%s655] sm:$0x3] %v654
        %v657 = vstv %s522
        %v658 = vstv %s258
        %v659 = vmul.f32 %v551, %v658
        %v660 = vadd.f32 %v657, %v659
        %v661 = vstv %s259
        %v662 = vmul.f32 %v553, %v661
        %v663 = vadd.f32 %v660, %v662
        %v664 = vstv %s260
        %v665 = vmul.f32 %v555, %v664
        %v666 = vadd.f32 %v663, %v665
        %v667 = vstv %s261
        %v668 = vmul.f32 %v557, %v667
        %v669 = vadd.f32 %v666, %v668
        %v670 = vstv %s262
        %v671 = vmul.f32 %v559, %v670
        %v672 = vadd.f32 %v669, %v671
        %v673 = vstv %s263
        %v674 = vmul.f32 %v561, %v673
        %v675 = vadd.f32 %v672, %v674
        %v676 = vstv %s264
        %v677 = vmul.f32 %v563, %v676
        %v678 = vadd.f32 %v675, %v677
        %v679 = vstv %s265
        %v680 = vmul.f32 %v565, %v679
        %v681 = vadd.f32 %v678, %v680
        %v682 = vstv %s266
        %v683 = vmul.f32 %v567, %v682
        %v684 = vadd.f32 %v681, %v683
        %s685 = scalar_lea.vmem %s230, 6 [#allocation9]
        %686 = vst [vmem:[%s685] sm:$0x3] %v684
        %v687 = vstv %s523
        %v688 = vstv %s267
        %v689 = vmul.f32 %v551, %v688
        %v690 = vadd.f32 %v687, %v689
        %v691 = vstv %s268
        %v692 = vmul.f32 %v553, %v691
        %v693 = vadd.f32 %v690, %v692
        %v694 = vstv %s269
        %v695 = vmul.f32 %v555, %v694
        %v696 = vadd.f32 %v693, %v695
        %v697 = vstv %s270
        %v698 = vmul.f32 %v557, %v697
        %v699 = vadd.f32 %v696, %v698
        %v700 = vstv %s271
        %v701 = vmul.f32 %v559, %v700
        %v702 = vadd.f32 %v699, %v701
        %v703 = vstv %s272
        %v704 = vmul.f32 %v561, %v703
        %v705 = vadd.f32 %v702, %v704
        %v706 = vstv %s273
        %v707 = vmul.f32 %v563, %v706
        %v708 = vadd.f32 %v705, %v707
        %v709 = vstv %s274
        %v710 = vmul.f32 %v565, %v709
        %v711 = vadd.f32 %v708, %v710
        %v712 = vstv %s275
        %v713 = vmul.f32 %v567, %v712
        %v714 = vadd.f32 %v711, %v713
        %s715 = scalar_lea.vmem %s230, 8 [#allocation9]
        %716 = vst [vmem:[%s715] sm:$0x3] %v714
        %v717 = vstv %s524
        %v718 = vstv %s276
        %v719 = vmul.f32 %v551, %v718
        %v720 = vadd.f32 %v717, %v719
        %v721 = vstv %s277
        %v722 = vmul.f32 %v553, %v721
        %v723 = vadd.f32 %v720, %v722
        %v724 = vstv %s278
        %v725 = vmul.f32 %v555, %v724
        %v726 = vadd.f32 %v723, %v725
        %v727 = vstv %s279
        %v728 = vmul.f32 %v557, %v727
        %v729 = vadd.f32 %v726, %v728
        %v730 = vstv %s280
        %v731 = vmul.f32 %v559, %v730
        %v732 = vadd.f32 %v729, %v731
        %v733 = vstv %s281
        %v734 = vmul.f32 %v561, %v733
        %v735 = vadd.f32 %v732, %v734
        %v736 = vstv %s282
        %v737 = vmul.f32 %v563, %v736
        %v738 = vadd.f32 %v735, %v737
        %v739 = vstv %s283
        %v740 = vmul.f32 %v565, %v739
        %v741 = vadd.f32 %v738, %v740
        %v742 = vstv %s284
        %v743 = vmul.f32 %v567, %v742
        %v744 = vadd.f32 %v741, %v743
        %s745 = scalar_lea.vmem %s230, 10 [#allocation9]
        %746 = vst [vmem:[%s745] sm:$0x3] %v744
        %v747 = vstv %s525
        %v748 = vstv %s285
        %v749 = vmul.f32 %v551, %v748
        %v750 = vadd.f32 %v747, %v749
        %v751 = vstv %s286
        %v752 = vmul.f32 %v553, %v751
        %v753 = vadd.f32 %v750, %v752
        %v754 = vstv %s287
        %v755 = vmul.f32 %v555, %v754
        %v756 = vadd.f32 %v753, %v755
        %v757 = vstv %s288
        %v758 = vmul.f32 %v557, %v757
        %v759 = vadd.f32 %v756, %v758
        %v760 = vstv %s289
        %v761 = vmul.f32 %v559, %v760
        %v762 = vadd.f32 %v759, %v761
        %v763 = vstv %s290
        %v764 = vmul.f32 %v561, %v763
        %v765 = vadd.f32 %v762, %v764
        %v766 = vstv %s291
        %v767 = vmul.f32 %v563, %v766
        %v768 = vadd.f32 %v765, %v767
        %v769 = vstv %s292
        %v770 = vmul.f32 %v565, %v769
        %v771 = vadd.f32 %v768, %v770
        %v772 = vstv %s293
        %v773 = vmul.f32 %v567, %v772
        %v774 = vadd.f32 %v771, %v773
        %s775 = scalar_lea.vmem %s230, 12 [#allocation9]
        %776 = vst [vmem:[%s775] sm:$0x3] %v774
        %v777 = vstv %s526
        %v778 = vstv %s294
        %v779 = vmul.f32 %v551, %v778
        %v780 = vadd.f32 %v777, %v779
        %v781 = vstv %s295
        %v782 = vmul.f32 %v553, %v781
        %v783 = vadd.f32 %v780, %v782
        %v784 = vstv %s296
        %v785 = vmul.f32 %v555, %v784
        %v786 = vadd.f32 %v783, %v785
        %v787 = vstv %s297
        %v788 = vmul.f32 %v557, %v787
        %v789 = vadd.f32 %v786, %v788
        %v790 = vstv %s298
        %v791 = vmul.f32 %v559, %v790
        %v792 = vadd.f32 %v789, %v791
        %v793 = vstv %s299
        %v794 = vmul.f32 %v561, %v793
        %v795 = vadd.f32 %v792, %v794
        %v796 = vstv %s300
        %v797 = vmul.f32 %v563, %v796
        %v798 = vadd.f32 %v795, %v797
        %v799 = vstv %s301
        %v800 = vmul.f32 %v565, %v799
        %v801 = vadd.f32 %v798, %v800
        %v802 = vstv %s302
        %v803 = vmul.f32 %v567, %v802
        %v804 = vadd.f32 %v801, %v803
        %s805 = scalar_lea.vmem %s230, 14 [#allocation9]
        %806 = vst [vmem:[%s805] sm:$0x3] %v804
        %v807 = vstv %s527
        %v808 = vstv %s303
        %v809 = vmul.f32 %v551, %v808
        %v810 = vadd.f32 %v807, %v809
        %v811 = vstv %s304
        %v812 = vmul.f32 %v553, %v811
        %v813 = vadd.f32 %v810, %v812
        %v814 = vstv %s305
        %v815 = vmul.f32 %v555, %v814
        %v816 = vadd.f32 %v813, %v815
        %v817 = vstv %s306
        %v818 = vmul.f32 %v557, %v817
        %v819 = vadd.f32 %v816, %v818
        %v820 = vstv %s307
        %v821 = vmul.f32 %v559, %v820
        %v822 = vadd.f32 %v819, %v821
        %v823 = vstv %s308
        %v824 = vmul.f32 %v561, %v823
        %v825 = vadd.f32 %v822, %v824
        %v826 = vstv %s309
        %v827 = vmul.f32 %v563, %v826
        %v828 = vadd.f32 %v825, %v827
        %v829 = vstv %s310
        %v830 = vmul.f32 %v565, %v829
        %v831 = vadd.f32 %v828, %v830
        %v832 = vstv %s311
        %v833 = vmul.f32 %v567, %v832
        %v834 = vadd.f32 %v831, %v833
        %s835 = scalar_lea.vmem %s230, 16 [#allocation9]
        %836 = vst [vmem:[%s835] sm:$0x3] %v834
        %v837 = vstv %s528
        %v838 = vstv %s312
        %v839 = vmul.f32 %v551, %v838
        %v840 = vadd.f32 %v837, %v839
        %v841 = vstv %s313
        %v842 = vmul.f32 %v553, %v841
        %v843 = vadd.f32 %v840, %v842
        %v844 = vstv %s314
        %v845 = vmul.f32 %v555, %v844
        %v846 = vadd.f32 %v843, %v845
        %v847 = vstv %s315
        %v848 = vmul.f32 %v557, %v847
        %v849 = vadd.f32 %v846, %v848
        %v850 = vstv %s316
        %v851 = vmul.f32 %v559, %v850
        %v852 = vadd.f32 %v849, %v851
        %v853 = vstv %s317
        %v854 = vmul.f32 %v561, %v853
        %v855 = vadd.f32 %v852, %v854
        %v856 = vstv %s318
        %v857 = vmul.f32 %v563, %v856
        %v858 = vadd.f32 %v855, %v857
        %v859 = vstv %s319
        %v860 = vmul.f32 %v565, %v859
        %v861 = vadd.f32 %v858, %v860
        %v862 = vstv %s320
        %v863 = vmul.f32 %v567, %v862
        %v864 = vadd.f32 %v861, %v863
        %s865 = scalar_lea.vmem %s230, 18 [#allocation9]
        %866 = vst [vmem:[%s865] sm:$0x3] %v864
        %v867 = vstv %s529
        %v868 = vstv %s321
        %v869 = vmul.f32 %v551, %v868
        %v870 = vadd.f32 %v867, %v869
        %v871 = vstv %s322
        %v872 = vmul.f32 %v553, %v871
        %v873 = vadd.f32 %v870, %v872
        %v874 = vstv %s323
        %v875 = vmul.f32 %v555, %v874
        %v876 = vadd.f32 %v873, %v875
        %v877 = vstv %s324
        %v878 = vmul.f32 %v557, %v877
        %v879 = vadd.f32 %v876, %v878
        %v880 = vstv %s325
        %v881 = vmul.f32 %v559, %v880
        %v882 = vadd.f32 %v879, %v881
        %v883 = vstv %s326
        %v884 = vmul.f32 %v561, %v883
        %v885 = vadd.f32 %v882, %v884
        %v886 = vstv %s327
        %v887 = vmul.f32 %v563, %v886
        %v888 = vadd.f32 %v885, %v887
        %v889 = vstv %s328
        %v890 = vmul.f32 %v565, %v889
        %v891 = vadd.f32 %v888, %v890
        %v892 = vstv %s329
        %v893 = vmul.f32 %v567, %v892
        %v894 = vadd.f32 %v891, %v893
        %s895 = scalar_lea.vmem %s230, 20 [#allocation9]
        %896 = vst [vmem:[%s895] sm:$0x3] %v894
        %v897 = vstv %s530
        %v898 = vstv %s330
        %v899 = vmul.f32 %v551, %v898
        %v900 = vadd.f32 %v897, %v899
        %v901 = vstv %s331
        %v902 = vmul.f32 %v553, %v901
        %v903 = vadd.f32 %v900, %v902
        %v904 = vstv %s332
        %v905 = vmul.f32 %v555, %v904
        %v906 = vadd.f32 %v903, %v905
        %v907 = vstv %s333
        %v908 = vmul.f32 %v557, %v907
        %v909 = vadd.f32 %v906, %v908
        %v910 = vstv %s334
        %v911 = vmul.f32 %v559, %v910
        %v912 = vadd.f32 %v909, %v911
        %v913 = vstv %s335
        %v914 = vmul.f32 %v561, %v913
        %v915 = vadd.f32 %v912, %v914
        %v916 = vstv %s336
        %v917 = vmul.f32 %v563, %v916
        %v918 = vadd.f32 %v915, %v917
        %v919 = vstv %s337
        %v920 = vmul.f32 %v565, %v919
        %v921 = vadd.f32 %v918, %v920
        %v922 = vstv %s338
        %v923 = vmul.f32 %v567, %v922
        %v924 = vadd.f32 %v921, %v923
        %s925 = scalar_lea.vmem %s230, 22 [#allocation9]
        %926 = vst [vmem:[%s925] sm:$0x3] %v924
        %v927 = vstv %s531
        %v928 = vstv %s339
        %v929 = vmul.f32 %v551, %v928
        %v930 = vadd.f32 %v927, %v929
        %v931 = vstv %s340
        %v932 = vmul.f32 %v553, %v931
        %v933 = vadd.f32 %v930, %v932
        %v934 = vstv %s341
        %v935 = vmul.f32 %v555, %v934
        %v936 = vadd.f32 %v933, %v935
        %v937 = vstv %s342
        %v938 = vmul.f32 %v557, %v937
        %v939 = vadd.f32 %v936, %v938
        %v940 = vstv %s343
        %v941 = vmul.f32 %v559, %v940
        %v942 = vadd.f32 %v939, %v941
        %v943 = vstv %s344
        %v944 = vmul.f32 %v561, %v943
        %v945 = vadd.f32 %v942, %v944
        %v946 = vstv %s345
        %v947 = vmul.f32 %v563, %v946
        %v948 = vadd.f32 %v945, %v947
        %v949 = vstv %s346
        %v950 = vmul.f32 %v565, %v949
        %v951 = vadd.f32 %v948, %v950
        %v952 = vstv %s347
        %v953 = vmul.f32 %v567, %v952
        %v954 = vadd.f32 %v951, %v953
        %s955 = scalar_lea.vmem %s230, 24 [#allocation9]
        %956 = vst [vmem:[%s955] sm:$0x3] %v954
        %v957 = vstv %s532
        %v958 = vstv %s348
        %v959 = vmul.f32 %v551, %v958
        %v960 = vadd.f32 %v957, %v959
        %v961 = vstv %s349
        %v962 = vmul.f32 %v553, %v961
        %v963 = vadd.f32 %v960, %v962
        %v964 = vstv %s350
        %v965 = vmul.f32 %v555, %v964
        %v966 = vadd.f32 %v963, %v965
        %v967 = vstv %s351
        %v968 = vmul.f32 %v557, %v967
        %v969 = vadd.f32 %v966, %v968
        %v970 = vstv %s352
        %v971 = vmul.f32 %v559, %v970
        %v972 = vadd.f32 %v969, %v971
        %v973 = vstv %s353
        %v974 = vmul.f32 %v561, %v973
        %v975 = vadd.f32 %v972, %v974
        %v976 = vstv %s354
        %v977 = vmul.f32 %v563, %v976
        %v978 = vadd.f32 %v975, %v977
        %v979 = vstv %s355
        %v980 = vmul.f32 %v565, %v979
        %v981 = vadd.f32 %v978, %v980
        %v982 = vstv %s356
        %v983 = vmul.f32 %v567, %v982
        %v984 = vadd.f32 %v981, %v983
        %s985 = scalar_lea.vmem %s230, 26 [#allocation9]
        %986 = vst [vmem:[%s985] sm:$0x3] %v984
        %v987 = vstv %s533
        %v988 = vstv %s357
        %v989 = vmul.f32 %v551, %v988
        %v990 = vadd.f32 %v987, %v989
        %v991 = vstv %s358
        %v992 = vmul.f32 %v553, %v991
        %v993 = vadd.f32 %v990, %v992
        %v994 = vstv %s359
        %v995 = vmul.f32 %v555, %v994
        %v996 = vadd.f32 %v993, %v995
        %v997 = vstv %s360
        %v998 = vmul.f32 %v557, %v997
        %v999 = vadd.f32 %v996, %v998
        %v1000 = vstv %s361
        %v1001 = vmul.f32 %v559, %v1000
        %v1002 = vadd.f32 %v999, %v1001
        %v1003 = vstv %s362
        %v1004 = vmul.f32 %v561, %v1003
        %v1005 = vadd.f32 %v1002, %v1004
        %v1006 = vstv %s363
        %v1007 = vmul.f32 %v563, %v1006
        %v1008 = vadd.f32 %v1005, %v1007
        %v1009 = vstv %s364
        %v1010 = vmul.f32 %v565, %v1009
        %v1011 = vadd.f32 %v1008, %v1010
        %v1012 = vstv %s365
        %v1013 = vmul.f32 %v567, %v1012
        %v1014 = vadd.f32 %v1011, %v1013
        %s1015 = scalar_lea.vmem %s230, 28 [#allocation9]
        %1016 = vst [vmem:[%s1015] sm:$0x3] %v1014
        %v1017 = vstv %s534
        %v1018 = vstv %s366
        %v1019 = vmul.f32 %v551, %v1018
        %v1020 = vadd.f32 %v1017, %v1019
        %v1021 = vstv %s367
        %v1022 = vmul.f32 %v553, %v1021
        %v1023 = vadd.f32 %v1020, %v1022
        %v1024 = vstv %s368
        %v1025 = vmul.f32 %v555, %v1024
        %v1026 = vadd.f32 %v1023, %v1025
        %v1027 = vstv %s369
        %v1028 = vmul.f32 %v557, %v1027
        %v1029 = vadd.f32 %v1026, %v1028
        %v1030 = vstv %s370
        %v1031 = vmul.f32 %v559, %v1030
        %v1032 = vadd.f32 %v1029, %v1031
        %v1033 = vstv %s371
        %v1034 = vmul.f32 %v561, %v1033
        %v1035 = vadd.f32 %v1032, %v1034
        %v1036 = vstv %s372
        %v1037 = vmul.f32 %v563, %v1036
        %v1038 = vadd.f32 %v1035, %v1037
        %v1039 = vstv %s373
        %v1040 = vmul.f32 %v565, %v1039
        %v1041 = vadd.f32 %v1038, %v1040
        %v1042 = vstv %s374
        %v1043 = vmul.f32 %v567, %v1042
        %v1044 = vadd.f32 %v1041, %v1043
        %s1045 = scalar_lea.vmem %s230, 30 [#allocation9]
        %1046 = vst [vmem:[%s1045] sm:$0x3] %v1044
        %v1047 = vstv %s535
        %v1048 = vstv %s375
        %v1049 = vmul.f32 %v551, %v1048
        %v1050 = vadd.f32 %v1047, %v1049
        %v1051 = vstv %s376
        %v1052 = vmul.f32 %v553, %v1051
        %v1053 = vadd.f32 %v1050, %v1052
        %v1054 = vstv %s377
        %v1055 = vmul.f32 %v555, %v1054
        %v1056 = vadd.f32 %v1053, %v1055
        %v1057 = vstv %s378
        %v1058 = vmul.f32 %v557, %v1057
        %v1059 = vadd.f32 %v1056, %v1058
        %v1060 = vstv %s379
        %v1061 = vmul.f32 %v559, %v1060
        %v1062 = vadd.f32 %v1059, %v1061
        %v1063 = vstv %s380
        %v1064 = vmul.f32 %v561, %v1063
        %v1065 = vadd.f32 %v1062, %v1064
        %v1066 = vstv %s381
        %v1067 = vmul.f32 %v563, %v1066
        %v1068 = vadd.f32 %v1065, %v1067
        %v1069 = vstv %s382
        %v1070 = vmul.f32 %v565, %v1069
        %v1071 = vadd.f32 %v1068, %v1070
        %v1072 = vstv %s383
        %v1073 = vmul.f32 %v567, %v1072
        %v1074 = vadd.f32 %v1071, %v1073
        %s1075 = scalar_lea.vmem %s230, 32 [#allocation9]
        %1076 = vst [vmem:[%s1075] sm:$0x3] %v1074
        %v1077 = vstv %s536
        %v1078 = vstv %s384
        %v1079 = vmul.f32 %v551, %v1078
        %v1080 = vadd.f32 %v1077, %v1079
        %v1081 = vstv %s385
        %v1082 = vmul.f32 %v553, %v1081
        %v1083 = vadd.f32 %v1080, %v1082
        %v1084 = vstv %s386
        %v1085 = vmul.f32 %v555, %v1084
        %v1086 = vadd.f32 %v1083, %v1085
        %v1087 = vstv %s387
        %v1088 = vmul.f32 %v557, %v1087
        %v1089 = vadd.f32 %v1086, %v1088
        %v1090 = vstv %s388
        %v1091 = vmul.f32 %v559, %v1090
        %v1092 = vadd.f32 %v1089, %v1091
        %v1093 = vstv %s389
        %v1094 = vmul.f32 %v561, %v1093
        %v1095 = vadd.f32 %v1092, %v1094
        %v1096 = vstv %s390
        %v1097 = vmul.f32 %v563, %v1096
        %v1098 = vadd.f32 %v1095, %v1097
        %v1099 = vstv %s391
        %v1100 = vmul.f32 %v565, %v1099
        %v1101 = vadd.f32 %v1098, %v1100
        %v1102 = vstv %s392
        %v1103 = vmul.f32 %v567, %v1102
        %v1104 = vadd.f32 %v1101, %v1103
        %s1105 = scalar_lea.vmem %s230, 34 [#allocation9]
        %1106 = vst [vmem:[%s1105] sm:$0x3] %v1104
        %v1107 = vstv %s537
        %v1108 = vstv %s393
        %v1109 = vmul.f32 %v551, %v1108
        %v1110 = vadd.f32 %v1107, %v1109
        %v1111 = vstv %s394
        %v1112 = vmul.f32 %v553, %v1111
        %v1113 = vadd.f32 %v1110, %v1112
        %v1114 = vstv %s395
        %v1115 = vmul.f32 %v555, %v1114
        %v1116 = vadd.f32 %v1113, %v1115
        %v1117 = vstv %s396
        %v1118 = vmul.f32 %v557, %v1117
        %v1119 = vadd.f32 %v1116, %v1118
        %v1120 = vstv %s397
        %v1121 = vmul.f32 %v559, %v1120
        %v1122 = vadd.f32 %v1119, %v1121
        %v1123 = vstv %s398
        %v1124 = vmul.f32 %v561, %v1123
        %v1125 = vadd.f32 %v1122, %v1124
        %v1126 = vstv %s399
        %v1127 = vmul.f32 %v563, %v1126
        %v1128 = vadd.f32 %v1125, %v1127
        %v1129 = vstv %s400
        %v1130 = vmul.f32 %v565, %v1129
        %v1131 = vadd.f32 %v1128, %v1130
        %v1132 = vstv %s401
        %v1133 = vmul.f32 %v567, %v1132
        %v1134 = vadd.f32 %v1131, %v1133
        %s1135 = scalar_lea.vmem %s230, 36 [#allocation9]
        %1136 = vst [vmem:[%s1135] sm:$0x3] %v1134
        %v1137 = vstv %s538
        %v1138 = vstv %s402
        %v1139 = vmul.f32 %v551, %v1138
        %v1140 = vadd.f32 %v1137, %v1139
        %v1141 = vstv %s403
        %v1142 = vmul.f32 %v553, %v1141
        %v1143 = vadd.f32 %v1140, %v1142
        %v1144 = vstv %s404
        %v1145 = vmul.f32 %v555, %v1144
        %v1146 = vadd.f32 %v1143, %v1145
        %v1147 = vstv %s405
        %v1148 = vmul.f32 %v557, %v1147
        %v1149 = vadd.f32 %v1146, %v1148
        %v1150 = vstv %s406
        %v1151 = vmul.f32 %v559, %v1150
        %v1152 = vadd.f32 %v1149, %v1151
        %v1153 = vstv %s407
        %v1154 = vmul.f32 %v561, %v1153
        %v1155 = vadd.f32 %v1152, %v1154
        %v1156 = vstv %s408
        %v1157 = vmul.f32 %v563, %v1156
        %v1158 = vadd.f32 %v1155, %v1157
        %v1159 = vstv %s409
        %v1160 = vmul.f32 %v565, %v1159
        %v1161 = vadd.f32 %v1158, %v1160
        %v1162 = vstv %s410
        %v1163 = vmul.f32 %v567, %v1162
        %v1164 = vadd.f32 %v1161, %v1163
        %s1165 = scalar_lea.vmem %s230, 38 [#allocation9]
        %1166 = vst [vmem:[%s1165] sm:$0x3] %v1164
        %v1167 = vstv %s539
        %v1168 = vstv %s411
        %v1169 = vmul.f32 %v551, %v1168
        %v1170 = vadd.f32 %v1167, %v1169
        %v1171 = vstv %s412
        %v1172 = vmul.f32 %v553, %v1171
        %v1173 = vadd.f32 %v1170, %v1172
        %v1174 = vstv %s413
        %v1175 = vmul.f32 %v555, %v1174
        %v1176 = vadd.f32 %v1173, %v1175
        %v1177 = vstv %s414
        %v1178 = vmul.f32 %v557, %v1177
        %v1179 = vadd.f32 %v1176, %v1178
        %v1180 = vstv %s415
        %v1181 = vmul.f32 %v559, %v1180
        %v1182 = vadd.f32 %v1179, %v1181
        %v1183 = vstv %s416
        %v1184 = vmul.f32 %v561, %v1183
        %v1185 = vadd.f32 %v1182, %v1184
        %v1186 = vstv %s417
        %v1187 = vmul.f32 %v563, %v1186
        %v1188 = vadd.f32 %v1185, %v1187
        %v1189 = vstv %s418
        %v1190 = vmul.f32 %v565, %v1189
        %v1191 = vadd.f32 %v1188, %v1190
        %v1192 = vstv %s419
        %v1193 = vmul.f32 %v567, %v1192
        %v1194 = vadd.f32 %v1191, %v1193
        %s1195 = scalar_lea.vmem %s230, 40 [#allocation9]
        %1196 = vst [vmem:[%s1195] sm:$0x3] %v1194
        %v1197 = vstv %s540
        %v1198 = vstv %s420
        %v1199 = vmul.f32 %v551, %v1198
        %v1200 = vadd.f32 %v1197, %v1199
        %v1201 = vstv %s421
        %v1202 = vmul.f32 %v553, %v1201
        %v1203 = vadd.f32 %v1200, %v1202
        %v1204 = vstv %s422
        %v1205 = vmul.f32 %v555, %v1204
        %v1206 = vadd.f32 %v1203, %v1205
        %v1207 = vstv %s423
        %v1208 = vmul.f32 %v557, %v1207
        %v1209 = vadd.f32 %v1206, %v1208
        %v1210 = vstv %s424
        %v1211 = vmul.f32 %v559, %v1210
        %v1212 = vadd.f32 %v1209, %v1211
        %v1213 = vstv %s425
        %v1214 = vmul.f32 %v561, %v1213
        %v1215 = vadd.f32 %v1212, %v1214
        %v1216 = vstv %s426
        %v1217 = vmul.f32 %v563, %v1216
        %v1218 = vadd.f32 %v1215, %v1217
        %v1219 = vstv %s427
        %v1220 = vmul.f32 %v565, %v1219
        %v1221 = vadd.f32 %v1218, %v1220
        %v1222 = vstv %s428
        %v1223 = vmul.f32 %v567, %v1222
        %v1224 = vadd.f32 %v1221, %v1223
        %s1225 = scalar_lea.vmem %s230, 42 [#allocation9]
        %1226 = vst [vmem:[%s1225] sm:$0x3] %v1224
        %v1227 = vstv %s541
        %v1228 = vstv %s429
        %v1229 = vmul.f32 %v551, %v1228
        %v1230 = vadd.f32 %v1227, %v1229
        %v1231 = vstv %s430
        %v1232 = vmul.f32 %v553, %v1231
        %v1233 = vadd.f32 %v1230, %v1232
        %v1234 = vstv %s431
        %v1235 = vmul.f32 %v555, %v1234
        %v1236 = vadd.f32 %v1233, %v1235
        %v1237 = vstv %s432
        %v1238 = vmul.f32 %v557, %v1237
        %v1239 = vadd.f32 %v1236, %v1238
        %v1240 = vstv %s433
        %v1241 = vmul.f32 %v559, %v1240
        %v1242 = vadd.f32 %v1239, %v1241
        %v1243 = vstv %s434
        %v1244 = vmul.f32 %v561, %v1243
        %v1245 = vadd.f32 %v1242, %v1244
        %v1246 = vstv %s435
        %v1247 = vmul.f32 %v563, %v1246
        %v1248 = vadd.f32 %v1245, %v1247
        %v1249 = vstv %s436
        %v1250 = vmul.f32 %v565, %v1249
        %v1251 = vadd.f32 %v1248, %v1250
        %v1252 = vstv %s437
        %v1253 = vmul.f32 %v567, %v1252
        %v1254 = vadd.f32 %v1251, %v1253
        %s1255 = scalar_lea.vmem %s230, 44 [#allocation9]
        %1256 = vst [vmem:[%s1255] sm:$0x3] %v1254
        %v1257 = vstv %s542
        %v1258 = vstv %s438
        %v1259 = vmul.f32 %v551, %v1258
        %v1260 = vadd.f32 %v1257, %v1259
        %v1261 = vstv %s439
        %v1262 = vmul.f32 %v553, %v1261
        %v1263 = vadd.f32 %v1260, %v1262
        %v1264 = vstv %s440
        %v1265 = vmul.f32 %v555, %v1264
        %v1266 = vadd.f32 %v1263, %v1265
        %v1267 = vstv %s441
        %v1268 = vmul.f32 %v557, %v1267
        %v1269 = vadd.f32 %v1266, %v1268
        %v1270 = vstv %s442
        %v1271 = vmul.f32 %v559, %v1270
        %v1272 = vadd.f32 %v1269, %v1271
        %v1273 = vstv %s443
        %v1274 = vmul.f32 %v561, %v1273
        %v1275 = vadd.f32 %v1272, %v1274
        %v1276 = vstv %s444
        %v1277 = vmul.f32 %v563, %v1276
        %v1278 = vadd.f32 %v1275, %v1277
        %v1279 = vstv %s445
        %v1280 = vmul.f32 %v565, %v1279
        %v1281 = vadd.f32 %v1278, %v1280
        %v1282 = vstv %s446
        %v1283 = vmul.f32 %v567, %v1282
        %v1284 = vadd.f32 %v1281, %v1283
        %s1285 = scalar_lea.vmem %s230, 46 [#allocation9]
        %1286 = vst [vmem:[%s1285] sm:$0x3] %v1284
        %v1287 = vstv %s543
        %v1288 = vstv %s447
        %v1289 = vmul.f32 %v551, %v1288
        %v1290 = vadd.f32 %v1287, %v1289
        %v1291 = vstv %s448
        %v1292 = vmul.f32 %v553, %v1291
        %v1293 = vadd.f32 %v1290, %v1292
        %v1294 = vstv %s449
        %v1295 = vmul.f32 %v555, %v1294
        %v1296 = vadd.f32 %v1293, %v1295
        %v1297 = vstv %s450
        %v1298 = vmul.f32 %v557, %v1297
        %v1299 = vadd.f32 %v1296, %v1298
        %v1300 = vstv %s451
        %v1301 = vmul.f32 %v559, %v1300
        %v1302 = vadd.f32 %v1299, %v1301
        %v1303 = vstv %s452
        %v1304 = vmul.f32 %v561, %v1303
        %v1305 = vadd.f32 %v1302, %v1304
        %v1306 = vstv %s453
        %v1307 = vmul.f32 %v563, %v1306
        %v1308 = vadd.f32 %v1305, %v1307
        %v1309 = vstv %s454
        %v1310 = vmul.f32 %v565, %v1309
        %v1311 = vadd.f32 %v1308, %v1310
        %v1312 = vstv %s455
        %v1313 = vmul.f32 %v567, %v1312
        %v1314 = vadd.f32 %v1311, %v1313
        %s1315 = scalar_lea.vmem %s230, 48 [#allocation9]
        %1316 = vst [vmem:[%s1315] sm:$0x3] %v1314
        %v1317 = vstv %s544
        %v1318 = vstv %s456
        %v1319 = vmul.f32 %v551, %v1318
        %v1320 = vadd.f32 %v1317, %v1319
        %v1321 = vstv %s457
        %v1322 = vmul.f32 %v553, %v1321
        %v1323 = vadd.f32 %v1320, %v1322
        %v1324 = vstv %s458
        %v1325 = vmul.f32 %v555, %v1324
        %v1326 = vadd.f32 %v1323, %v1325
        %v1327 = vstv %s459
        %v1328 = vmul.f32 %v557, %v1327
        %v1329 = vadd.f32 %v1326, %v1328
        %v1330 = vstv %s460
        %v1331 = vmul.f32 %v559, %v1330
        %v1332 = vadd.f32 %v1329, %v1331
        %v1333 = vstv %s461
        %v1334 = vmul.f32 %v561, %v1333
        %v1335 = vadd.f32 %v1332, %v1334
        %v1336 = vstv %s462
        %v1337 = vmul.f32 %v563, %v1336
        %v1338 = vadd.f32 %v1335, %v1337
        %v1339 = vstv %s463
        %v1340 = vmul.f32 %v565, %v1339
        %v1341 = vadd.f32 %v1338, %v1340
        %v1342 = vstv %s464
        %v1343 = vmul.f32 %v567, %v1342
        %v1344 = vadd.f32 %v1341, %v1343
        %s1345 = scalar_lea.vmem %s230, 50 [#allocation9]
        %1346 = vst [vmem:[%s1345] sm:$0x3] %v1344
        %v1347 = vstv %s545
        %v1348 = vstv %s465
        %v1349 = vmul.f32 %v551, %v1348
        %v1350 = vadd.f32 %v1347, %v1349
        %v1351 = vstv %s466
        %v1352 = vmul.f32 %v553, %v1351
        %v1353 = vadd.f32 %v1350, %v1352
        %v1354 = vstv %s467
        %v1355 = vmul.f32 %v555, %v1354
        %v1356 = vadd.f32 %v1353, %v1355
        %v1357 = vstv %s468
        %v1358 = vmul.f32 %v557, %v1357
        %v1359 = vadd.f32 %v1356, %v1358
        %v1360 = vstv %s469
        %v1361 = vmul.f32 %v559, %v1360
        %v1362 = vadd.f32 %v1359, %v1361
        %v1363 = vstv %s470
        %v1364 = vmul.f32 %v561, %v1363
        %v1365 = vadd.f32 %v1362, %v1364
        %v1366 = vstv %s471
        %v1367 = vmul.f32 %v563, %v1366
        %v1368 = vadd.f32 %v1365, %v1367
        %v1369 = vstv %s472
        %v1370 = vmul.f32 %v565, %v1369
        %v1371 = vadd.f32 %v1368, %v1370
        %v1372 = vstv %s473
        %v1373 = vmul.f32 %v567, %v1372
        %v1374 = vadd.f32 %v1371, %v1373
        %s1375 = scalar_lea.vmem %s230, 52 [#allocation9]
        %1376 = vst [vmem:[%s1375] sm:$0x3] %v1374
        %v1377 = vstv %s546
        %v1378 = vstv %s474
        %v1379 = vmul.f32 %v551, %v1378
        %v1380 = vadd.f32 %v1377, %v1379
        %v1381 = vstv %s475
        %v1382 = vmul.f32 %v553, %v1381
        %v1383 = vadd.f32 %v1380, %v1382
        %v1384 = vstv %s476
        %v1385 = vmul.f32 %v555, %v1384
        %v1386 = vadd.f32 %v1383, %v1385
        %v1387 = vstv %s477
        %v1388 = vmul.f32 %v557, %v1387
        %v1389 = vadd.f32 %v1386, %v1388
        %v1390 = vstv %s478
        %v1391 = vmul.f32 %v559, %v1390
        %v1392 = vadd.f32 %v1389, %v1391
        %v1393 = vstv %s479
        %v1394 = vmul.f32 %v561, %v1393
        %v1395 = vadd.f32 %v1392, %v1394
        %v1396 = vstv %s480
        %v1397 = vmul.f32 %v563, %v1396
        %v1398 = vadd.f32 %v1395, %v1397
        %v1399 = vstv %s481
        %v1400 = vmul.f32 %v565, %v1399
        %v1401 = vadd.f32 %v1398, %v1400
        %v1402 = vstv %s482
        %v1403 = vmul.f32 %v567, %v1402
        %v1404 = vadd.f32 %v1401, %v1403
        %s1405 = scalar_lea.vmem %s230, 54 [#allocation9]
        %1406 = vst [vmem:[%s1405] sm:$0x3] %v1404
        %v1407 = vstv %s547
        %v1408 = vstv %s483
        %v1409 = vmul.f32 %v551, %v1408
        %v1410 = vadd.f32 %v1407, %v1409
        %v1411 = vstv %s484
        %v1412 = vmul.f32 %v553, %v1411
        %v1413 = vadd.f32 %v1410, %v1412
        %v1414 = vstv %s485
        %v1415 = vmul.f32 %v555, %v1414
        %v1416 = vadd.f32 %v1413, %v1415
        %v1417 = vstv %s486
        %v1418 = vmul.f32 %v557, %v1417
        %v1419 = vadd.f32 %v1416, %v1418
        %v1420 = vstv %s487
        %v1421 = vmul.f32 %v559, %v1420
        %v1422 = vadd.f32 %v1419, %v1421
        %v1423 = vstv %s488
        %v1424 = vmul.f32 %v561, %v1423
        %v1425 = vadd.f32 %v1422, %v1424
        %v1426 = vstv %s489
        %v1427 = vmul.f32 %v563, %v1426
        %v1428 = vadd.f32 %v1425, %v1427
        %v1429 = vstv %s490
        %v1430 = vmul.f32 %v565, %v1429
        %v1431 = vadd.f32 %v1428, %v1430
        %v1432 = vstv %s491
        %v1433 = vmul.f32 %v567, %v1432
        %v1434 = vadd.f32 %v1431, %v1433
        %s1435 = scalar_lea.vmem %s230, 56 [#allocation9]
        %1436 = vst [vmem:[%s1435] sm:$0x3] %v1434
        %v1437 = vstv %s548
        %v1438 = vstv %s492
        %v1439 = vmul.f32 %v551, %v1438
        %v1440 = vadd.f32 %v1437, %v1439
        %v1441 = vstv %s493
        %v1442 = vmul.f32 %v553, %v1441
        %v1443 = vadd.f32 %v1440, %v1442
        %v1444 = vstv %s494
        %v1445 = vmul.f32 %v555, %v1444
        %v1446 = vadd.f32 %v1443, %v1445
        %v1447 = vstv %s495
        %v1448 = vmul.f32 %v557, %v1447
        %v1449 = vadd.f32 %v1446, %v1448
        %v1450 = vstv %s496
        %v1451 = vmul.f32 %v559, %v1450
        %v1452 = vadd.f32 %v1449, %v1451
        %v1453 = vstv %s497
        %v1454 = vmul.f32 %v561, %v1453
        %v1455 = vadd.f32 %v1452, %v1454
        %v1456 = vstv %s498
        %v1457 = vmul.f32 %v563, %v1456
        %v1458 = vadd.f32 %v1455, %v1457
        %v1459 = vstv %s499
        %v1460 = vmul.f32 %v565, %v1459
        %v1461 = vadd.f32 %v1458, %v1460
        %v1462 = vstv %s500
        %v1463 = vmul.f32 %v567, %v1462
        %v1464 = vadd.f32 %v1461, %v1463
        %s1465 = scalar_lea.vmem %s230, 58 [#allocation9]
        %1466 = vst [vmem:[%s1465] sm:$0x3] %v1464
        %v1467 = vstv %s549
        %v1468 = vstv %s501
        %v1469 = vmul.f32 %v551, %v1468
        %v1470 = vadd.f32 %v1467, %v1469
        %v1471 = vstv %s502
        %v1472 = vmul.f32 %v553, %v1471
        %v1473 = vadd.f32 %v1470, %v1472
        %v1474 = vstv %s503
        %v1475 = vmul.f32 %v555, %v1474
        %v1476 = vadd.f32 %v1473, %v1475
        %v1477 = vstv %s504
        %v1478 = vmul.f32 %v557, %v1477
        %v1479 = vadd.f32 %v1476, %v1478
        %v1480 = vstv %s505
        %v1481 = vmul.f32 %v559, %v1480
        %v1482 = vadd.f32 %v1479, %v1481
        %v1483 = vstv %s506
        %v1484 = vmul.f32 %v561, %v1483
        %v1485 = vadd.f32 %v1482, %v1484
        %v1486 = vstv %s507
        %v1487 = vmul.f32 %v563, %v1486
        %v1488 = vadd.f32 %v1485, %v1487
        %v1489 = vstv %s508
        %v1490 = vmul.f32 %v565, %v1489
        %v1491 = vadd.f32 %v1488, %v1490
        %v1492 = vstv %s509
        %v1493 = vmul.f32 %v567, %v1492
        %v1494 = vadd.f32 %v1491, %v1493
        %s1495 = scalar_lea.vmem %s230, 60 [#allocation9]
        %1496 = vst [vmem:[%s1495] sm:$0x3] %v1494
        %v1497 = vstv %s550
        %v1498 = vstv %s510
        %v1499 = vmul.f32 %v551, %v1498
        %v1500 = vadd.f32 %v1497, %v1499
        %v1501 = vstv %s511
        %v1502 = vmul.f32 %v553, %v1501
        %v1503 = vadd.f32 %v1500, %v1502
        %v1504 = vstv %s512
        %v1505 = vmul.f32 %v555, %v1504
        %v1506 = vadd.f32 %v1503, %v1505
        %v1507 = vstv %s513
        %v1508 = vmul.f32 %v557, %v1507
        %v1509 = vadd.f32 %v1506, %v1508
        %v1510 = vstv %s514
        %v1511 = vmul.f32 %v559, %v1510
        %v1512 = vadd.f32 %v1509, %v1511
        %v1513 = vstv %s515
        %v1514 = vmul.f32 %v561, %v1513
        %v1515 = vadd.f32 %v1512, %v1514
        %v1516 = vstv %s516
        %v1517 = vmul.f32 %v563, %v1516
        %v1518 = vadd.f32 %v1515, %v1517
        %v1519 = vstv %s517
        %v1520 = vmul.f32 %v565, %v1519
        %v1521 = vadd.f32 %v1518, %v1520
        %v1522 = vstv %s518
        %v1523 = vmul.f32 %v567, %v1522
        %v1524 = vadd.f32 %v1521, %v1523
        %s1525 = scalar_lea.vmem %s230, 62 [#allocation9]
        %1526 = vst [vmem:[%s1525] sm:$0x3] %v1524
        %s1527 = sand.u32 %s114, 1
        %s1528 = scalar_lea.sflag [#allocation4], %s1527
        %s1529 = sand.u32 %s114, 1
        %s1530 = smul.addr %s1529, 64
        %s1531 = scalar_lea.vmem [#allocation9], %s1530
        // Predicated region
        $region45: #{tpu_custom_call.1} parent=31 // pred_check
          %p1532 = pneg %p124
        $region46: #{tpu_custom_call.1} parent=31 // pred_check_branch
          %1534 = sbr.rel (%p1532) target = $region48
        $region47: #{tpu_custom_call.1} parent=31 // pred_region
          %s1536 = ssub.s32 1024, 1024
          %1537 = vsyncadd %s1528, %s1536
          %s1538 = smul.addr %s26, 32
          %s1539 = sadd.s32 %s27, %s1538
          %s1540 = smul.addr %s1539, 32
          %s1541 = scalar_lea.hbm %s3, %s1540
          %s1542 = sshll.u32 %s1531, 4
          %s1543 = int_to_ptr.vmem [resolvable:$true] %s1542
          %1548 = dma.vmem_to_hbm [thread:$0]  %s1543, 1024, %s1541, %s1528, 32, 32, 2
        $region48: #{tpu_custom_call.1} parent=31 // pred_fallthru
          _
      $region32: #{tpu_custom_call.1} parent=5 // pred_fallthru
        _
      %p1549 = scmp.le.s32.totalorder 2, %s17
      // Predicated region
      $region49: #{tpu_custom_call.1} parent=5 // pred_check
        %p1550 = pneg %p1549
      $region50: #{tpu_custom_call.1} parent=5 // pred_check_branch
        %1552 = sbr.rel (%p1550) target = $region52
      $region51: #{tpu_custom_call.1} parent=5 // pred_region
        %s1553 = ssub.s32 %s17, 2
        // Predicated region
        $region53: #{tpu_custom_call.1} parent=51 // pred_check
          %p1554 = pneg %p130
        $region54: #{tpu_custom_call.1} parent=51 // pred_check_branch
          %1556 = sbr.rel (%p1554) target = $region56
        $region55: #{tpu_custom_call.1} parent=51 // pred_region
          %s1557 = sand.u32 %s115, 1
          %s1558 = scalar_lea.sflag [#allocation4], %s1557
          %s1559 = sand.u32 %s115, 1
          %s1560 = smul.addr %s1559, 64
          %s1561 = scalar_lea.vmem [#allocation9], %s1560
          %1562 = dma.done %s1558, 1024
        $region56: #{tpu_custom_call.1} parent=51 // pred_fallthru
          _
      $region52: #{tpu_custom_call.1} parent=5 // pred_fallthru
        _
    $region6: #{tpu_custom_call.1} parent=1 // loop_footer
      %s21 = sadd.s32 1, %s17
    $region7: #{tpu_custom_call.1} parent=1 // loop_footer_branch
      %16 = sbr.rel target = $region3
    $region8: #{tpu_custom_call.1} parent=1 // loop_exit
      _
    %1563 = vsyncpa [#allocation3], 1
    %s1564 = scalar_lea.sflag [#allocation3], 1
    %1565 = vsyncpa %s1564, 1
    %1566 = vsyncpa [#allocation4], 1
    %s1567 = scalar_lea.sflag [#allocation4], 1
    %1568 = vsyncpa %s1567, 1
    %1569 = vsyncpa [#allocation5], 1
    %s1570 = scalar_lea.sflag [#allocation5], 1
    %1571 = vsyncpa %s1570, 1
    %1572 = vsyncpa [#allocation6], 1
    %s1573 = scalar_lea.sflag [#allocation6], 1
    %1574 = vsyncpa %s1573, 1

</llo_original>
